<compile_context>
chip_gen: v5e
topology: v5e:2x2
jax: 0.10.0
libtpu: 0.0.40
codegen_flags: <defaults>
</compile_context>

<pallas_src>
import jax
import jax.numpy as jnp
from jax import lax
from jax.experimental import pallas as pl
from jax.experimental.pallas import tpu as pltpu
from jax.scipy.linalg import block_diag

# Keep host-side weight composition and the pure-JAX reference at full f32 precision.
jax.config.update("jax_default_matmul_precision", "highest")

BATCH = 8
IN_EMBED_DIM = 32            # model_cfg['in_embed_dim']
EMBED_DIM = 32               # model_cfg['embed_dim']
NUM_CLASSES = 8              # model_cfg['num_classes']
NUM_GROUPS = 6               # li, gi, lt, gt, cat_i, cat_t
FEAT_WIDTH = NUM_GROUPS * EMBED_DIM        # 192  (normalized feature columns)
LOGITS_WIDTH = NUM_GROUPS * NUM_CLASSES    # 48   (logit columns)
OUT_WIDTH = 384                            # 3*128 -> fully lane-dense output slab


def _siamese_kernel(li_ref, gi_ref, lt_ref, gt_ref, mats_ref, bias_ref, floor_ref,
                    out_ref):
    """One fused affine stage + per-group L2 normalization, single lane-dense store.

    mats_ref packs two constants (both 8-sublane aligned row groups):
      rows   0:128 -> W_all  : pre-composed [x -> (feats | logits | pad)] weight
      rows 128:512 -> M_ones : block-ones group-sum matrix (zero on logit/pad cols)
    """
    prec = lax.Precision.HIGHEST
    E = IN_EMBED_DIM

    def dot(a, b):
        return jnp.dot(a, b, preferred_element_type=jnp.float32, precision=prec)

    # --- single pre-composed affine map -------------------------------------------
    # The 4 embeddings hit disjoint row-groups of W_all, so no lane concat is needed:
    # 4 independent MXU pushes summed on the VPU (no serial MXU dependency chain).
    y = (dot(li_ref[...], mats_ref[0 * E:1 * E, :])
         + dot(gi_ref[...], mats_ref[1 * E:2 * E, :])
         + dot(lt_ref[...], mats_ref[2 * E:3 * E, :])
         + dot(gt_ref[...], mats_ref[3 * E:4 * E, :])
         + bias_ref[...])                                        # [B, 384]

    # --- per-group L2 normalization -------------------------------------------------
    # One MXU dot against the precomputed block-ones matrix replaces 6 XLU lane
    # reductions; its rows for logit/pad columns are zero, so sumsq is 0 there.
    sumsq = dot(y * y, mats_ref[4 * E:, :])                      # [B, 384]

    # floor = 1e-24 on feature columns (matches F.normalize eps=1e-12 on the norm),
    # 1.0 on logit/pad columns, so one EUP rsqrt + one VPU mul normalizes the feature
    # columns and leaves the logits untouched -> single unmasked lane-dense store.
    out_ref[...] = y * lax.rsqrt(jnp.maximum(sumsq, floor_ref[...]))


def init_params(key):
    """Deterministic synthetic parameters (shapes from the module's __init__)."""
    names_shapes = [
        ("local_visual_projector", (IN_EMBED_DIM, EMBED_DIM)),
        ("global_visual_projector", (IN_EMBED_DIM, EMBED_DIM)),
        ("local_text_projector", (IN_EMBED_DIM, EMBED_DIM)),
        ("global_text_projector", (IN_EMBED_DIM, EMBED_DIM)),
        ("cat_visual_projector", (EMBED_DIM * 2, EMBED_DIM)),
        ("cat_text_projector", (EMBED_DIM * 2, EMBED_DIM)),
        ("local_image_instance_head", (EMBED_DIM, NUM_CLASSES)),
        ("local_text_instance_head", (EMBED_DIM, NUM_CLASSES)),
        ("global_image_instance_head", (EMBED_DIM, NUM_CLASSES)),
        ("global_text_instance_head", (EMBED_DIM, NUM_CLASSES)),
        ("cat_image_instance_head", (EMBED_DIM, NUM_CLASSES)),
        ("cat_text_instance_head", (EMBED_DIM, NUM_CLASSES)),
    ]
    params = {}
    for name, (din, dout) in names_shapes:
        key, kw, kb = jax.random.split(key, 3)
        params[name] = {
            "w": jax.random.normal(kw, (din, dout), jnp.float32) * 0.05,  # [in, out]
            "b": jax.random.normal(kb, (1, dout), jnp.float32) * 0.05,    # [1, out]
        }
    return params


def pack_params(p):
    """One-time host-side pre-composition of the whole affine chain into 3 constants."""
    E = EMBED_DIM

    # Stage 1: 4 modality projectors, block-diagonal, input/output order [li|gi|lt|gt].
    w1 = block_diag(p["local_visual_projector"]["w"], p["global_visual_projector"]["w"],
                    p["local_text_projector"]["w"], p["global_text_projector"]["w"])
    b1 = jnp.concatenate(
        [p["local_visual_projector"]["b"], p["global_visual_projector"]["b"],
         p["local_text_projector"]["b"], p["global_text_projector"]["b"]], axis=-1)

    # Stage 2: 2 concat projectors; rows [li_p|gi_p] -> cat_i, rows [lt_p|gt_p] -> cat_t.
    w2 = block_diag(p["cat_visual_projector"]["w"], p["cat_text_projector"]["w"])
    b2 = jnp.concatenate(
        [p["cat_visual_projector"]["b"], p["cat_text_projector"]["b"]], axis=-1)

    # z = [proj | cat] is affine in x:  z = x @ Wz + bz
    wz = jnp.concatenate([w1, w1 @ w2], axis=1)            # [128, 192]
    bz = jnp.concatenate([b1, b1 @ w2 + b2], axis=1)       # [1, 192]

    # Stage 3: 6 instance heads, row-group order matches z = [li, gi, lt, gt, ci, ct].
    wh = block_diag(p["local_image_instance_head"]["w"],
                    p["global_image_instance_head"]["w"],
                    p["local_text_instance_head"]["w"],
                    p["global_text_instance_head"]["w"],
                    p["cat_image_instance_head"]["w"],
                    p["cat_text_instance_head"]["w"])       # [192, 48]
    bh = jnp.concatenate(
        [p["local_image_instance_head"]["b"], p["global_image_instance_head"]["b"],
         p["local_text_instance_head"]["b"], p["global_text_instance_head"]["b"],
         p["cat_image_instance_head"]["b"], p["cat_text_instance_head"]["b"]], axis=-1)

    # logits are also affine in x:  logits = x @ Wl + bl
    wl = wz @ wh                                            # [128, 48]
    bl = bz @ wh + bh                                       # [1, 48]

    # Single composed map  x -> [feat(192) | logits(48) | zero pad(144)]  (384 lanes).
    w_all = jnp.concatenate([wz, wl], axis=1)               # [128, 240]
    b_all = jnp.concatenate([bz, bl], axis=1)               # [1, 240]
    pad = OUT_WIDTH - w_all.shape[1]
    w_all = jnp.pad(w_all, ((0, 0), (0, pad)))
    b_all = jnp.pad(b_all, ((0, 0), (0, pad)))

    # Block-ones group-sum matrix [384, 384]: block-diag ones over the 6 feature
    # groups (32 cols each); zero on logit/pad rows and columns.
    col = jnp.arange(OUT_WIDTH)
    row = col[:, None]
    in_feat_r = row < FEAT_WIDTH
    in_feat_c = col[None, :] < FEAT_WIDTH
    same_group = (row // E) == (col[None, :] // E)
    ones_full = (in_feat_r & in_feat_c & same_group).astype(jnp.float32)   # [384, 384]

    # Per-column norm floor: 1e-24 (= eps^2 of F.normalize) on feature columns,
    # 1.0 on logit/pad columns so their rsqrt scale is exactly 1.
    floor = jnp.where(col < FEAT_WIDTH, 1e-24, 1.0)[None, :].astype(jnp.float32)

    # Stack W_all (rows 0:128) and ones_full (rows 128:512) into one constant input.
    mats = jnp.concatenate([jnp.asarray(w_all, jnp.float32), ones_full], axis=0)

    return {"mats": mats,                                   # [512, 384]
            "bias": jnp.asarray(b_all, jnp.float32),        # [1, 384]
            "floor": floor}                                  # [1, 384]


@jax.jit
def siamese_forward(local_image_features, global_image_features,
                    local_text_features, global_text_features, packed):
    B = local_image_features.shape[0]
    vmem = pl.BlockSpec(memory_space=pltpu.MemorySpace.VMEM)

    slab = pl.pallas_call(
        _siamese_kernel,
        out_shape=jax.ShapeDtypeStruct((B, OUT_WIDTH), jnp.float32),
        in_specs=[vmem] * 7,
        out_specs=vmem,
    )(local_image_features, global_image_features,
      local_text_features, global_text_features,
      packed["mats"], packed["bias"], packed["floor"])

    E, NC = EMBED_DIM, NUM_CLASSES
    # Split the single lane-dense slab back into the module's tensors (layout only).
    li_n, gi_n, lt_n, gt_n, ci_n, ct_n = (
        slab[:, k * E:(k + 1) * E] for k in range(NUM_GROUPS))
    log_li, log_gi, log_lt, log_gt, log_ci, log_ct = (
        slab[:, FEAT_WIDTH + k * NC: FEAT_WIDTH + (k + 1) * NC]
        for k in range(NUM_GROUPS))

    return {
        "pairs": [(ci_n, ct_n), (li_n, lt_n), (gi_n, gt_n)],
        "instance_logits": [log_ci, log_ct, log_li, log_lt, log_gi, log_gt],
    }


def _reference_forward(li, gi, lt, gt, params):
    """Pure-JAX reference for correctness checking (mirrors the PyTorch forward)."""
    def lin(x, name):
        return x @ params[name]["w"] + params[name]["b"]

    def l2n(x):
        return x / jnp.maximum(jnp.linalg.norm(x, axis=-1, keepdims=True), 1e-12)

    lif = lin(li, "local_visual_projector")
    gif = lin(gi, "global_visual_projector")
    ltf = lin(lt, "local_text_projector")
    gtf = lin(gt, "global_text_projector")
    cif = lin(jnp.concatenate([lif, gif], -1), "cat_visual_projector")
    ctf = lin(jnp.concatenate([ltf, gtf], -1), "cat_text_projector")
    logits = [
        lin(cif, "cat_image_instance_head"), lin(ctf, "cat_text_instance_head"),
        lin(lif, "local_image_instance_head"), lin(ltf, "local_text_instance_head"),
        lin(gif, "global_image_instance_head"), lin(gtf, "global_text_instance_head"),
    ]
    return {
        "pairs": [(l2n(cif), l2n(ctf)), (l2n(lif), l2n(ltf)), (l2n(gif), l2n(gtf))],
        "instance_logits": logits,
    }


if __name__ == "__main__":
    key = jax.random.PRNGKey(0)
    k_params, k_li, k_gi, k_lt, k_gt = jax.random.split(key, 5)
    params = init_params(k_params)
    packed = pack_params(params)   # one-time composition, outside the per-call path

    # Stand-ins for CLIP extractor embeddings: [batch, in_embed_dim]
    local_image_features = jax.random.normal(k_li, (BATCH, IN_EMBED_DIM), jnp.float32)
    global_image_features = jax.random.normal(k_gi, (BATCH, IN_EMBED_DIM), jnp.float32)
    local_text_features = jax.random.normal(k_lt, (BATCH, IN_EMBED_DIM), jnp.float32)
    global_text_features = jax.random.normal(k_gt, (BATCH, IN_EMBED_DIM), jnp.float32)

    out = siamese_forward(local_image_features, global_image_features,
                          local_text_features, global_text_features, packed)
    jax.block_until_ready(out)

    ref = _reference_forward(local_image_features, global_image_features,
                             local_text_features, global_text_features, params)
    for (a, b), (ra, rb) in zip(out["pairs"], ref["pairs"]):
        assert jnp.allclose(a, ra, atol=1e-5, rtol=1e-5), "pair mismatch"
        assert jnp.allclose(b, rb, atol=1e-5, rtol=1e-5), "pair mismatch"
    for lg, rlg in zip(out["instance_logits"], ref["instance_logits"]):
        assert jnp.allclose(lg, rlg, atol=1e-5, rtol=1e-5), "logit mismatch"

    print("KERNEL_OK")
</pallas_src>

<mosaic_0001>
module attributes {stable_mosaic.version = 11 : i64} {
  func.func @_siamese_kernel(%arg0: memref<8x32xf32, #tpu.memory_space<vmem>>, %arg1: memref<8x32xf32, #tpu.memory_space<vmem>>, %arg2: memref<8x32xf32, #tpu.memory_space<vmem>>, %arg3: memref<8x32xf32, #tpu.memory_space<vmem>>, %arg4: memref<512x384xf32, #tpu.memory_space<vmem>>, %arg5: memref<1x384xf32, #tpu.memory_space<vmem>>, %arg6: memref<1x384xf32, #tpu.memory_space<vmem>>, %arg7: memref<8x384xf32, #tpu.memory_space<vmem>>) attributes {dimension_semantics = [], scalar_prefetch = 0 : i64, scratch_operands = 0 : i64, tpu.core_type = #tpu.core_type<tc>} {
    %c0 = arith.constant 0 : index
    %c0_0 = arith.constant 0 : index
    %0 = vector.load %arg0[%c0, %c0_0] : memref<8x32xf32, #tpu.memory_space<vmem>>, vector<8x32xf32>
    %c0_1 = arith.constant 0 : index
    %c0_2 = arith.constant 0 : index
    %1 = vector.load %arg4[%c0_1, %c0_2] : memref<512x384xf32, #tpu.memory_space<vmem>>, vector<32x384xf32>
    %cst = arith.constant dense<0.000000e+00> : vector<8x384xf32>
    %2 = tpu.matmul %0, %1, %cst {dimension_numbers = #tpu.dot_dimension_numbers<[1], [0], [0], [1], [0, 0, 1, 1], [], []>, precision = #tpu.contract_precision<fp32>} : vector<8x32xf32>, vector<32x384xf32>, vector<8x384xf32> -> vector<8x384xf32>
    %c0_3 = arith.constant 0 : index
    %c0_4 = arith.constant 0 : index
    %3 = vector.load %arg1[%c0_3, %c0_4] : memref<8x32xf32, #tpu.memory_space<vmem>>, vector<8x32xf32>
    %c32 = arith.constant 32 : index
    %c0_5 = arith.constant 0 : index
    %4 = vector.load %arg4[%c32, %c0_5] : memref<512x384xf32, #tpu.memory_space<vmem>>, vector<32x384xf32>
    %cst_6 = arith.constant dense<0.000000e+00> : vector<8x384xf32>
    %5 = tpu.matmul %3, %4, %cst_6 {dimension_numbers = #tpu.dot_dimension_numbers<[1], [0], [0], [1], [0, 0, 1, 1], [], []>, precision = #tpu.contract_precision<fp32>} : vector<8x32xf32>, vector<32x384xf32>, vector<8x384xf32> -> vector<8x384xf32>
    %6 = arith.addf %2, %5 : vector<8x384xf32>
    %c0_7 = arith.constant 0 : index
    %c0_8 = arith.constant 0 : index
    %7 = vector.load %arg2[%c0_7, %c0_8] : memref<8x32xf32, #tpu.memory_space<vmem>>, vector<8x32xf32>
    %c64 = arith.constant 64 : index
    %c0_9 = arith.constant 0 : index
    %8 = vector.load %arg4[%c64, %c0_9] : memref<512x384xf32, #tpu.memory_space<vmem>>, vector<32x384xf32>
    %cst_10 = arith.constant dense<0.000000e+00> : vector<8x384xf32>
    %9 = tpu.matmul %7, %8, %cst_10 {dimension_numbers = #tpu.dot_dimension_numbers<[1], [0], [0], [1], [0, 0, 1, 1], [], []>, precision = #tpu.contract_precision<fp32>} : vector<8x32xf32>, vector<32x384xf32>, vector<8x384xf32> -> vector<8x384xf32>
    %10 = arith.addf %6, %9 : vector<8x384xf32>
    %c0_11 = arith.constant 0 : index
    %c0_12 = arith.constant 0 : index
    %11 = vector.load %arg3[%c0_11, %c0_12] : memref<8x32xf32, #tpu.memory_space<vmem>>, vector<8x32xf32>
    %c96 = arith.constant 96 : index
    %c0_13 = arith.constant 0 : index
    %12 = vector.load %arg4[%c96, %c0_13] : memref<512x384xf32, #tpu.memory_space<vmem>>, vector<32x384xf32>
    %cst_14 = arith.constant dense<0.000000e+00> : vector<8x384xf32>
    %13 = tpu.matmul %11, %12, %cst_14 {dimension_numbers = #tpu.dot_dimension_numbers<[1], [0], [0], [1], [0, 0, 1, 1], [], []>, precision = #tpu.contract_precision<fp32>} : vector<8x32xf32>, vector<32x384xf32>, vector<8x384xf32> -> vector<8x384xf32>
    %14 = arith.addf %10, %13 : vector<8x384xf32>
    %c0_15 = arith.constant 0 : index
    %c0_16 = arith.constant 0 : index
    %15 = vector.load %arg5[%c0_15, %c0_16] : memref<1x384xf32, #tpu.memory_space<vmem>>, vector<1x384xf32>
    %16 = vector.broadcast %15 : vector<1x384xf32> to vector<8x384xf32>
    %17 = arith.addf %14, %16 : vector<8x384xf32>
    %18 = arith.mulf %17, %17 : vector<8x384xf32>
    %c128 = arith.constant 128 : index
    %c0_17 = arith.constant 0 : index
    %19 = vector.load %arg4[%c128, %c0_17] : memref<512x384xf32, #tpu.memory_space<vmem>>, vector<384x384xf32>
    %cst_18 = arith.constant dense<0.000000e+00> : vector<8x384xf32>
    %20 = tpu.matmul %18, %19, %cst_18 {dimension_numbers = #tpu.dot_dimension_numbers<[1], [0], [0], [1], [0, 0, 1, 1], [], []>, precision = #tpu.contract_precision<fp32>} : vector<8x384xf32>, vector<384x384xf32>, vector<8x384xf32> -> vector<8x384xf32>
    %c0_19 = arith.constant 0 : index
    %c0_20 = arith.constant 0 : index
    %21 = vector.load %arg6[%c0_19, %c0_20] : memref<1x384xf32, #tpu.memory_space<vmem>>, vector<1x384xf32>
    %22 = vector.broadcast %21 : vector<1x384xf32> to vector<8x384xf32>
    %23 = arith.maximumf %20, %22 : vector<8x384xf32>
    %24 = math.rsqrt %23 : vector<8x384xf32>
    %25 = arith.mulf %17, %24 : vector<8x384xf32>
    %c0_21 = arith.constant 0 : index
    %c0_22 = arith.constant 0 : index
    %26 = vector.load %arg7[%c0_21, %c0_22] : memref<8x384xf32, #tpu.memory_space<vmem>>, vector<8x384xf32>
    tpu.vector_store %arg7[%c0_21, %c0_22], %25 {strides = array<i32>} : memref<8x384xf32, #tpu.memory_space<vmem>>, vector<8x384xf32>,
    return
  }
}

</mosaic_0001>

<llo_original>
// kernel: siamese_forward.1
$region0: #{siamese_forward.1}
  #allocation0 [shape = 'u32[]', space=smem, size = 0x4, offset = 0x4, fixed_abs, tag = 'smem constant byte address 0x4 - core index']
  #allocation1 [shape = 'u32[72,128]{1,0:T(1,128)}', space=vmem, size = 0x9000, scoped, tag = 'internal scratch']
  %s0 = inlined_call_operand.hbm [shape: f32[8,32], index: 0, kind: input, shape index: {}]
  %s1 = inlined_call_operand.hbm [shape: f32[8,32], index: 1, kind: input, shape index: {}]
  %s2 = inlined_call_operand.hbm [shape: f32[8,32], index: 2, kind: input, shape index: {}]
  %s3 = inlined_call_operand.hbm [shape: f32[8,32], index: 3, kind: input, shape index: {}]
  %s4 = inlined_call_operand.hbm [shape: f32[512,384], index: 4, kind: input, shape index: {}]
  %s5 = inlined_call_operand.vmem [shape: f32[1,384], index: 5, kind: input, shape index: {}]
  %s6 = inlined_call_operand.hbm [shape: f32[1,384], index: 6, kind: input, shape index: {}]
  %s7 = inlined_call_operand.vmem [shape: f32[8,384], index: 7, kind: output, shape index: {}]
  %s8 = sld [smem:[#allocation0]]
  $region62: #{siamese_forward.1} parent=0
    _
  %s10 = ssub.s32 1, %s8
  %s11 = scalar_select 0, %s10, %s8
  $region1: #{siamese_forward.1} parent=0
    #allocation2 [shape = 'u8[4096]{0}', space=vmem, size = 0x1000, scoped, tag = 'input window, operand 0, single buffered']
    #allocation3 [shape = 's32[1]{0}', space=sflag, size = 0x4, scoped, tag = 'scoped memory for siamese_forward.1']
    #allocation4 [shape = 'u8[4096]{0}', space=vmem, size = 0x1000, scoped, tag = 'input window, operand 1, single buffered']
    #allocation5 [shape = 's32[1]{0}', space=sflag, size = 0x4, scoped, tag = 'scoped memory for siamese_forward.1']
    #allocation6 [shape = 'u8[4096]{0}', space=vmem, size = 0x1000, scoped, tag = 'input window, operand 2, single buffered']
    #allocation7 [shape = 'u8[4096]{0}', space=vmem, size = 0x1000, scoped, tag = 'input window, operand 3, single buffered']
    #allocation8 [shape = 's32[1]{0}', space=sflag, size = 0x4, scoped, tag = 'scoped memory for siamese_forward.1']
    #allocation9 [shape = 'u8[786432]{0}', space=vmem, size = 0xc0000, scoped, tag = 'input window, operand 4, single buffered']
    #allocation10 [shape = 'u8[1536]{0}', space=vmem, size = 0x800, scoped, tag = 'input window, operand 6, single buffered']
    #allocation11 [shape = 's32[1]{0}', space=sflag, size = 0x4, scoped, tag = 'scoped memory for siamese_forward.1']
    %12 = vsyncpa [#allocation3], 0
    %13 = vsyncpa [#allocation5], 0
    %14 = vsyncpa [#allocation8], 0
    %15 = vsyncpa [#allocation11], 0
    // Predicated region
    $region2: #{siamese_forward.1} parent=1 // pred_check
      _
    $region3: #{siamese_forward.1} parent=1 // pred_check_branch
      %17 = sbr.rel (0) target = $region5
    $region4: #{siamese_forward.1} parent=1 // pred_region
      %19 = vsyncadd [#allocation3], 0
      %s21 = sshll.u32 %s0, 4
      %s22 = int_to_ptr.hbm [resolvable:$true] %s21
      %s23 = sshll.u32 [#allocation2], 4
      %s24 = int_to_ptr.vmem [resolvable:$true] %s23
      %26 = dma.hbm_to_vmem [thread:$0]  %s22, 128, %s24, [#allocation3]
    $region5: #{siamese_forward.1} parent=1 // pred_fallthru
      _
    // Predicated region
    $region6: #{siamese_forward.1} parent=1 // pred_check
      _
    $region7: #{siamese_forward.1} parent=1 // pred_check_branch
      %28 = sbr.rel (0) target = $region9
    $region8: #{siamese_forward.1} parent=1 // pred_region
      %30 = vsyncadd [#allocation5], 0
      %s32 = sshll.u32 %s1, 4
      %s33 = int_to_ptr.hbm [resolvable:$true] %s32
      %s34 = sshll.u32 [#allocation4], 4
      %s35 = int_to_ptr.vmem [resolvable:$true] %s34
      %37 = dma.hbm_to_vmem [thread:$0]  %s33, 128, %s35, [#allocation5]
    $region9: #{siamese_forward.1} parent=1 // pred_fallthru
      _
    // Predicated region
    $region10: #{siamese_forward.1} parent=1 // pred_check
      _
    $region11: #{siamese_forward.1} parent=1 // pred_check_branch
      %39 = sbr.rel (0) target = $region13
    $region12: #{siamese_forward.1} parent=1 // pred_region
      %41 = vsyncadd [#allocation5], 0
      %s43 = sshll.u32 %s2, 4
      %s44 = int_to_ptr.hbm [resolvable:$true] %s43
      %s45 = sshll.u32 [#allocation6], 4
      %s46 = int_to_ptr.vmem [resolvable:$true] %s45
      %48 = dma.hbm_to_vmem [thread:$0]  %s44, 128, %s46, [#allocation5]
    $region13: #{siamese_forward.1} parent=1 // pred_fallthru
      _
    // Predicated region
    $region14: #{siamese_forward.1} parent=1 // pred_check
      _
    $region15: #{siamese_forward.1} parent=1 // pred_check_branch
      %50 = sbr.rel (0) target = $region17
    $region16: #{siamese_forward.1} parent=1 // pred_region
      %52 = vsyncadd [#allocation8], 0
      %s54 = sshll.u32 %s3, 4
      %s55 = int_to_ptr.hbm [resolvable:$true] %s54
      %s56 = sshll.u32 [#allocation7], 4
      %s57 = int_to_ptr.vmem [resolvable:$true] %s56
      %59 = dma.hbm_to_vmem [thread:$0]  %s55, 128, %s57, [#allocation8]
    $region17: #{siamese_forward.1} parent=1 // pred_fallthru
      _
    // Predicated region
    $region18: #{siamese_forward.1} parent=1 // pred_check
      _
    $region19: #{siamese_forward.1} parent=1 // pred_check_branch
      %61 = sbr.rel (0) target = $region21
    $region20: #{siamese_forward.1} parent=1 // pred_region
      %63 = vsyncadd [#allocation8], 0
      %s64 = sshll.u32 %s4, 4
      %s65 = int_to_ptr.hbm [resolvable:$true] %s64
      %s66 = sshll.u32 [#allocation9], 4
      %s67 = int_to_ptr.vmem [resolvable:$true] %s66
      %72 = dma.hbm_to_vmem [thread:$0]  %s65, 24576, %s67, [#allocation8], 384, 384, 24
    $region21: #{siamese_forward.1} parent=1 // pred_fallthru
      _
    // Predicated region
    $region22: #{siamese_forward.1} parent=1 // pred_check
      _
    $region23: #{siamese_forward.1} parent=1 // pred_check_branch
      %74 = sbr.rel (0) target = $region25
    $region24: #{siamese_forward.1} parent=1 // pred_region
      _
    $region25: #{siamese_forward.1} parent=1 // pred_fallthru
      _
    // Predicated region
    $region26: #{siamese_forward.1} parent=1 // pred_check
      _
    $region27: #{siamese_forward.1} parent=1 // pred_check_branch
      %76 = sbr.rel (0) target = $region29
    $region28: #{siamese_forward.1} parent=1 // pred_region
      %78 = vsyncadd [#allocation11], 0
      %s80 = sshll.u32 %s6, 4
      %s81 = int_to_ptr.hbm [resolvable:$true] %s80
      %s82 = sshll.u32 [#allocation10], 4
      %s83 = int_to_ptr.vmem [resolvable:$true] %s82
      %85 = dma.hbm_to_vmem [thread:$0]  %s81, 48, %s83, [#allocation11]
    $region29: #{siamese_forward.1} parent=1 // pred_fallthru
      _
    // Predicated region
    $region30: #{siamese_forward.1} parent=1 // pred_check
      _
    $region31: #{siamese_forward.1} parent=1 // pred_check_branch
      %87 = sbr.rel (0) target = $region33
    $region32: #{siamese_forward.1} parent=1 // pred_region
      %89 = dma.done [#allocation3], 128
    $region33: #{siamese_forward.1} parent=1 // pred_fallthru
      _
    // Predicated region
    $region34: #{siamese_forward.1} parent=1 // pred_check
      _
    $region35: #{siamese_forward.1} parent=1 // pred_check_branch
      %91 = sbr.rel (0) target = $region37
    $region36: #{siamese_forward.1} parent=1 // pred_region
      %93 = dma.done [#allocation5], 128
    $region37: #{siamese_forward.1} parent=1 // pred_fallthru
      _
    // Predicated region
    $region38: #{siamese_forward.1} parent=1 // pred_check
      _
    $region39: #{siamese_forward.1} parent=1 // pred_check_branch
      %95 = sbr.rel (0) target = $region41
    $region40: #{siamese_forward.1} parent=1 // pred_region
      %97 = dma.done [#allocation5], 128
    $region41: #{siamese_forward.1} parent=1 // pred_fallthru
      _
    // Predicated region
    $region42: #{siamese_forward.1} parent=1 // pred_check
      _
    $region43: #{siamese_forward.1} parent=1 // pred_check_branch
      %99 = sbr.rel (0) target = $region45
    $region44: #{siamese_forward.1} parent=1 // pred_region
      %101 = dma.done [#allocation8], 128
    $region45: #{siamese_forward.1} parent=1 // pred_fallthru
      _
    // Predicated region
    $region46: #{siamese_forward.1} parent=1 // pred_check
      _
    $region47: #{siamese_forward.1} parent=1 // pred_check_branch
      %103 = sbr.rel (0) target = $region49
    $region48: #{siamese_forward.1} parent=1 // pred_region
      %105 = dma.done [#allocation8], 24576
    $region49: #{siamese_forward.1} parent=1 // pred_fallthru
      _
    // Predicated region
    $region50: #{siamese_forward.1} parent=1 // pred_check
      _
    $region51: #{siamese_forward.1} parent=1 // pred_check_branch
      %107 = sbr.rel (0) target = $region53
    $region52: #{siamese_forward.1} parent=1 // pred_region
      %109 = dma.done [#allocation11], 48
    $region53: #{siamese_forward.1} parent=1 // pred_fallthru
      _
    %v110 = vld [vmem:[#allocation2] sm:$0xff]
    %v111 = vld [vmem:[#allocation9] sm:$0xff]
    %v112 = vld [vmem:[#allocation9 + $0x8] sm:$0xff]
    %v113 = vld [vmem:[#allocation9 + $0x10] sm:$0xff]
    %v114 = vld [vmem:[#allocation9 + $0x18] sm:$0xff]
    %v115 = vld [vmem:[#allocation9 + $0x20] sm:$0xff]
    %v116 = vld [vmem:[#allocation9 + $0x28] sm:$0xff]
    %v117 = vld [vmem:[#allocation9 + $0x30] sm:$0xff]
    %v118 = vld [vmem:[#allocation9 + $0x38] sm:$0xff]
    %v119 = vld [vmem:[#allocation9 + $0x40] sm:$0xff]
    %v120 = vld [vmem:[#allocation9 + $0x48] sm:$0xff]
    %v121 = vld [vmem:[#allocation9 + $0x50] sm:$0xff]
    %v122 = vld [vmem:[#allocation9 + $0x58] sm:$0xff]
    %v123 = vld [vmem:[#allocation4] sm:$0xff]
    %v124 = vld [vmem:[#allocation9 + $0x60] sm:$0xff]
    %v125 = vld [vmem:[#allocation9 + $0x68] sm:$0xff]
    %v126 = vld [vmem:[#allocation9 + $0x70] sm:$0xff]
    %v127 = vld [vmem:[#allocation9 + $0x78] sm:$0xff]
    %v128 = vld [vmem:[#allocation9 + $0x80] sm:$0xff]
    %v129 = vld [vmem:[#allocation9 + $0x88] sm:$0xff]
    %v130 = vld [vmem:[#allocation9 + $0x90] sm:$0xff]
    %v131 = vld [vmem:[#allocation9 + $0x98] sm:$0xff]
    %v132 = vld [vmem:[#allocation9 + $0xa0] sm:$0xff]
    %v133 = vld [vmem:[#allocation9 + $0xa8] sm:$0xff]
    %v134 = vld [vmem:[#allocation9 + $0xb0] sm:$0xff]
    %v135 = vld [vmem:[#allocation9 + $0xb8] sm:$0xff]
    %vm136 = vcmask 261120
    %v138 = vsel %vm136, %v123, 0
    %140 = vmatpush.msra.mxu0 0.0
    %141 = vmatpush.msra.mxu0 0.0
    %142 = vmatpush.msra.mxu0 0.0
    %143 = vmatpush.msra.mxu0 0.0
    %144 = vmatpush.msra.mxu0 0.0
    %145 = vmatpush.msra.mxu0 0.0
    %146 = vmatpush.msra.mxu0 0.0
    %147 = vmatpush.msra.mxu0 0.0
    %148 = vmatpush.msra.mxu0 0.0
    %149 = vmatpush.msra.mxu0 0.0
    %150 = vmatpush.msra.mxu0 0.0
    %151 = vmatpush.msra.mxu0 0.0
    %v152 = vand.u32 %v133, 4294901760
    %153 = vmatpush.msra.mxu0 %v152
    %v154 = vand.u32 %v130, 4294901760
    %155 = vmatpush.msra.mxu0 %v154
    %v156 = vand.u32 %v127, 4294901760
    %157 = vmatpush.msra.mxu0 %v156
    %v158 = vand.u32 %v124, 4294901760
    %159 = vmatpush.msra.mxu0 %v158
    %v160 = vand.u32 %v138, 4294901760
    %v161 = vsub.f32 %v138, %v160
    %v162 = vand.u32 %v161, 4294901760
    %v163 = vsub.f32 %v161, %v162
    %v164 = vand.u32 %v163, 4294901760
    %165 = vmatmul.f32.gmra.mxu0 %v164
    %v166 = vpop.f32.mrf.mxu0
    %v167 = vadd.f32 0.0, %v166
    %168 = vdwg.mxu0
    %169 = vmatpush.msra.mxu0 0.0
    %170 = vmatpush.msra.mxu0 0.0
    %171 = vmatpush.msra.mxu0 0.0
    %172 = vmatpush.msra.mxu0 0.0
    %173 = vmatpush.msra.mxu0 0.0
    %174 = vmatpush.msra.mxu0 0.0
    %175 = vmatpush.msra.mxu0 0.0
    %176 = vmatpush.msra.mxu0 0.0
    %177 = vmatpush.msra.mxu0 0.0
    %178 = vmatpush.msra.mxu0 0.0
    %179 = vmatpush.msra.mxu0 0.0
    %180 = vmatpush.msra.mxu0 0.0
    %v181 = vand.u32 %v133, 4294901760
    %v182 = vsub.f32 %v133, %v181
    %v183 = vand.u32 %v182, 4294901760
    %v184 = vsub.f32 %v182, %v183
    %v185 = vand.u32 %v184, 4294901760
    %186 = vmatpush.msra.mxu0 %v185
    %v187 = vand.u32 %v130, 4294901760
    %v188 = vsub.f32 %v130, %v187
    %v189 = vand.u32 %v188, 4294901760
    %v190 = vsub.f32 %v188, %v189
    %v191 = vand.u32 %v190, 4294901760
    %192 = vmatpush.msra.mxu0 %v191
    %v193 = vand.u32 %v127, 4294901760
    %v194 = vsub.f32 %v127, %v193
    %v195 = vand.u32 %v194, 4294901760
    %v196 = vsub.f32 %v194, %v195
    %v197 = vand.u32 %v196, 4294901760
    %198 = vmatpush.msra.mxu0 %v197
    %v199 = vand.u32 %v124, 4294901760
    %v200 = vsub.f32 %v124, %v199
    %v201 = vand.u32 %v200, 4294901760
    %v202 = vsub.f32 %v200, %v201
    %v203 = vand.u32 %v202, 4294901760
    %204 = vmatpush.msra.mxu0 %v203
    %v205 = vand.u32 %v138, 4294901760
    %206 = vmatmul.f32.gmra.mxu0 %v205
    %v207 = vpop.f32.mrf.mxu0
    %v208 = vadd.f32 %v167, %v207
    %209 = vdwg.mxu0
    %210 = vmatpush.msra.mxu0 0.0
    %211 = vmatpush.msra.mxu0 0.0
    %212 = vmatpush.msra.mxu0 0.0
    %213 = vmatpush.msra.mxu0 0.0
    %214 = vmatpush.msra.mxu0 0.0
    %215 = vmatpush.msra.mxu0 0.0
    %216 = vmatpush.msra.mxu0 0.0
    %217 = vmatpush.msra.mxu0 0.0
    %218 = vmatpush.msra.mxu0 0.0
    %219 = vmatpush.msra.mxu0 0.0
    %220 = vmatpush.msra.mxu0 0.0
    %221 = vmatpush.msra.mxu0 0.0
    %v222 = vand.u32 %v133, 4294901760
    %v223 = vsub.f32 %v133, %v222
    %224 = vmatpush.msra.mxu0 %v223
    %v225 = vand.u32 %v130, 4294901760
    %v226 = vsub.f32 %v130, %v225
    %227 = vmatpush.msra.mxu0 %v226
    %v228 = vand.u32 %v127, 4294901760
    %v229 = vsub.f32 %v127, %v228
    %230 = vmatpush.msra.mxu0 %v229
    %v231 = vand.u32 %v124, 4294901760
    %v232 = vsub.f32 %v124, %v231
    %233 = vmatpush.msra.mxu0 %v232
    %v234 = vand.u32 %v138, 4294901760
    %v235 = vsub.f32 %v138, %v234
    %236 = vmatmul.f32.gmra.mxu0 %v235
    %v237 = vpop.f32.mrf.mxu0
    %v238 = vadd.f32 %v208, %v237
    %239 = vdwg.mxu0
    %240 = vmatpush.msra.mxu0 0.0
    %241 = vmatpush.msra.mxu0 0.0
    %242 = vmatpush.msra.mxu0 0.0
    %243 = vmatpush.msra.mxu0 0.0
    %244 = vmatpush.msra.mxu0 0.0
    %245 = vmatpush.msra.mxu0 0.0
    %246 = vmatpush.msra.mxu0 0.0
    %247 = vmatpush.msra.mxu0 0.0
    %248 = vmatpush.msra.mxu0 0.0
    %249 = vmatpush.msra.mxu0 0.0
    %250 = vmatpush.msra.mxu0 0.0
    %251 = vmatpush.msra.mxu0 0.0
    %v252 = vand.u32 %v133, 4294901760
    %253 = vmatpush.msra.mxu0 %v252
    %v254 = vand.u32 %v130, 4294901760
    %255 = vmatpush.msra.mxu0 %v254
    %v256 = vand.u32 %v127, 4294901760
    %257 = vmatpush.msra.mxu0 %v256
    %v258 = vand.u32 %v124, 4294901760
    %259 = vmatpush.msra.mxu0 %v258
    %v260 = vand.u32 %v138, 4294901760
    %v261 = vsub.f32 %v138, %v260
    %v262 = vand.u32 %v261, 4294901760
    %263 = vmatmul.f32.gmra.mxu0 %v262
    %v264 = vpop.f32.mrf.mxu0
    %v265 = vadd.f32 %v238, %v264
    %266 = vdwg.mxu0
    %267 = vmatpush.msra.mxu0 0.0
    %268 = vmatpush.msra.mxu0 0.0
    %269 = vmatpush.msra.mxu0 0.0
    %270 = vmatpush.msra.mxu0 0.0
    %271 = vmatpush.msra.mxu0 0.0
    %272 = vmatpush.msra.mxu0 0.0
    %273 = vmatpush.msra.mxu0 0.0
    %274 = vmatpush.msra.mxu0 0.0
    %275 = vmatpush.msra.mxu0 0.0
    %276 = vmatpush.msra.mxu0 0.0
    %277 = vmatpush.msra.mxu0 0.0
    %278 = vmatpush.msra.mxu0 0.0
    %v279 = vand.u32 %v133, 4294901760
    %v280 = vsub.f32 %v133, %v279
    %v281 = vand.u32 %v280, 4294901760
    %282 = vmatpush.msra.mxu0 %v281
    %v283 = vand.u32 %v130, 4294901760
    %v284 = vsub.f32 %v130, %v283
    %v285 = vand.u32 %v284, 4294901760
    %286 = vmatpush.msra.mxu0 %v285
    %v287 = vand.u32 %v127, 4294901760
    %v288 = vsub.f32 %v127, %v287
    %v289 = vand.u32 %v288, 4294901760
    %290 = vmatpush.msra.mxu0 %v289
    %v291 = vand.u32 %v124, 4294901760
    %v292 = vsub.f32 %v124, %v291
    %v293 = vand.u32 %v292, 4294901760
    %294 = vmatpush.msra.mxu0 %v293
    %v295 = vand.u32 %v138, 4294901760
    %296 = vmatmul.f32.gmra.mxu0 %v295
    %v297 = vpop.f32.mrf.mxu0
    %v298 = vadd.f32 %v265, %v297
    %299 = vdwg.mxu0
    %300 = vmatpush.msra.mxu0 0.0
    %301 = vmatpush.msra.mxu0 0.0
    %302 = vmatpush.msra.mxu0 0.0
    %303 = vmatpush.msra.mxu0 0.0
    %304 = vmatpush.msra.mxu0 0.0
    %305 = vmatpush.msra.mxu0 0.0
    %306 = vmatpush.msra.mxu0 0.0
    %307 = vmatpush.msra.mxu0 0.0
    %308 = vmatpush.msra.mxu0 0.0
    %309 = vmatpush.msra.mxu0 0.0
    %310 = vmatpush.msra.mxu0 0.0
    %311 = vmatpush.msra.mxu0 0.0
    %v312 = vand.u32 %v133, 4294901760
    %313 = vmatpush.msra.mxu0 %v312
    %v314 = vand.u32 %v130, 4294901760
    %315 = vmatpush.msra.mxu0 %v314
    %v316 = vand.u32 %v127, 4294901760
    %317 = vmatpush.msra.mxu0 %v316
    %v318 = vand.u32 %v124, 4294901760
    %319 = vmatpush.msra.mxu0 %v318
    %v320 = vand.u32 %v138, 4294901760
    %321 = vmatmul.f32.gmra.mxu0 %v320
    %v322 = vpop.f32.mrf.mxu0
    %v323 = vadd.f32 %v298, %v322
    %324 = vdwg.mxu0
    %325 = vmatpush.msra.mxu0 0.0
    %326 = vmatpush.msra.mxu0 0.0
    %327 = vmatpush.msra.mxu0 0.0
    %328 = vmatpush.msra.mxu0 0.0
    %329 = vmatpush.msra.mxu0 0.0
    %330 = vmatpush.msra.mxu0 0.0
    %331 = vmatpush.msra.mxu0 0.0
    %332 = vmatpush.msra.mxu0 0.0
    %333 = vmatpush.msra.mxu0 0.0
    %334 = vmatpush.msra.mxu0 0.0
    %335 = vmatpush.msra.mxu0 0.0
    %336 = vmatpush.msra.mxu0 0.0
    %v337 = vand.u32 %v134, 4294901760
    %338 = vmatpush.msra.mxu0 %v337
    %v339 = vand.u32 %v131, 4294901760
    %340 = vmatpush.msra.mxu0 %v339
    %v341 = vand.u32 %v128, 4294901760
    %342 = vmatpush.msra.mxu0 %v341
    %v343 = vand.u32 %v125, 4294901760
    %344 = vmatpush.msra.mxu0 %v343
    %v345 = vand.u32 %v138, 4294901760
    %v346 = vsub.f32 %v138, %v345
    %v347 = vand.u32 %v346, 4294901760
    %v348 = vsub.f32 %v346, %v347
    %v349 = vand.u32 %v348, 4294901760
    %350 = vmatmul.f32.gmra.mxu0 %v349
    %v351 = vpop.f32.mrf.mxu0
    %v352 = vadd.f32 0.0, %v351
    %353 = vdwg.mxu0
    %354 = vmatpush.msra.mxu0 0.0
    %355 = vmatpush.msra.mxu0 0.0
    %356 = vmatpush.msra.mxu0 0.0
    %357 = vmatpush.msra.mxu0 0.0
    %358 = vmatpush.msra.mxu0 0.0
    %359 = vmatpush.msra.mxu0 0.0
    %360 = vmatpush.msra.mxu0 0.0
    %361 = vmatpush.msra.mxu0 0.0
    %362 = vmatpush.msra.mxu0 0.0
    %363 = vmatpush.msra.mxu0 0.0
    %364 = vmatpush.msra.mxu0 0.0
    %365 = vmatpush.msra.mxu0 0.0
    %v366 = vand.u32 %v134, 4294901760
    %v367 = vsub.f32 %v134, %v366
    %v368 = vand.u32 %v367, 4294901760
    %v369 = vsub.f32 %v367, %v368
    %v370 = vand.u32 %v369, 4294901760
    %371 = vmatpush.msra.mxu0 %v370
    %v372 = vand.u32 %v131, 4294901760
    %v373 = vsub.f32 %v131, %v372
    %v374 = vand.u32 %v373, 4294901760
    %v375 = vsub.f32 %v373, %v374
    %v376 = vand.u32 %v375, 4294901760
    %377 = vmatpush.msra.mxu0 %v376
    %v378 = vand.u32 %v128, 4294901760
    %v379 = vsub.f32 %v128, %v378
    %v380 = vand.u32 %v379, 4294901760
    %v381 = vsub.f32 %v379, %v380
    %v382 = vand.u32 %v381, 4294901760
    %383 = vmatpush.msra.mxu0 %v382
    %v384 = vand.u32 %v125, 4294901760
    %v385 = vsub.f32 %v125, %v384
    %v386 = vand.u32 %v385, 4294901760
    %v387 = vsub.f32 %v385, %v386
    %v388 = vand.u32 %v387, 4294901760
    %389 = vmatpush.msra.mxu0 %v388
    %v390 = vand.u32 %v138, 4294901760
    %391 = vmatmul.f32.gmra.mxu0 %v390
    %v392 = vpop.f32.mrf.mxu0
    %v393 = vadd.f32 %v352, %v392
    %394 = vdwg.mxu0
    %395 = vmatpush.msra.mxu0 0.0
    %396 = vmatpush.msra.mxu0 0.0
    %397 = vmatpush.msra.mxu0 0.0
    %398 = vmatpush.msra.mxu0 0.0
    %399 = vmatpush.msra.mxu0 0.0
    %400 = vmatpush.msra.mxu0 0.0
    %401 = vmatpush.msra.mxu0 0.0
    %402 = vmatpush.msra.mxu0 0.0
    %403 = vmatpush.msra.mxu0 0.0
    %404 = vmatpush.msra.mxu0 0.0
    %405 = vmatpush.msra.mxu0 0.0
    %406 = vmatpush.msra.mxu0 0.0
    %v407 = vand.u32 %v134, 4294901760
    %v408 = vsub.f32 %v134, %v407
    %409 = vmatpush.msra.mxu0 %v408
    %v410 = vand.u32 %v131, 4294901760
    %v411 = vsub.f32 %v131, %v410
    %412 = vmatpush.msra.mxu0 %v411
    %v413 = vand.u32 %v128, 4294901760
    %v414 = vsub.f32 %v128, %v413
    %415 = vmatpush.msra.mxu0 %v414
    %v416 = vand.u32 %v125, 4294901760
    %v417 = vsub.f32 %v125, %v416
    %418 = vmatpush.msra.mxu0 %v417
    %v419 = vand.u32 %v138, 4294901760
    %v420 = vsub.f32 %v138, %v419
    %421 = vmatmul.f32.gmra.mxu0 %v420
    %v422 = vpop.f32.mrf.mxu0
    %v423 = vadd.f32 %v393, %v422
    %424 = vdwg.mxu0
    %425 = vmatpush.msra.mxu0 0.0
    %426 = vmatpush.msra.mxu0 0.0
    %427 = vmatpush.msra.mxu0 0.0
    %428 = vmatpush.msra.mxu0 0.0
    %429 = vmatpush.msra.mxu0 0.0
    %430 = vmatpush.msra.mxu0 0.0
    %431 = vmatpush.msra.mxu0 0.0
    %432 = vmatpush.msra.mxu0 0.0
    %433 = vmatpush.msra.mxu0 0.0
    %434 = vmatpush.msra.mxu0 0.0
    %435 = vmatpush.msra.mxu0 0.0
    %436 = vmatpush.msra.mxu0 0.0
    %v437 = vand.u32 %v134, 4294901760
    %438 = vmatpush.msra.mxu0 %v437
    %v439 = vand.u32 %v131, 4294901760
    %440 = vmatpush.msra.mxu0 %v439
    %v441 = vand.u32 %v128, 4294901760
    %442 = vmatpush.msra.mxu0 %v441
    %v443 = vand.u32 %v125, 4294901760
    %444 = vmatpush.msra.mxu0 %v443
    %v445 = vand.u32 %v138, 4294901760
    %v446 = vsub.f32 %v138, %v445
    %v447 = vand.u32 %v446, 4294901760
    %448 = vmatmul.f32.gmra.mxu0 %v447
    %v449 = vpop.f32.mrf.mxu0
    %v450 = vadd.f32 %v423, %v449
    %451 = vdwg.mxu0
    %452 = vmatpush.msra.mxu0 0.0
    %453 = vmatpush.msra.mxu0 0.0
    %454 = vmatpush.msra.mxu0 0.0
    %455 = vmatpush.msra.mxu0 0.0
    %456 = vmatpush.msra.mxu0 0.0
    %457 = vmatpush.msra.mxu0 0.0
    %458 = vmatpush.msra.mxu0 0.0
    %459 = vmatpush.msra.mxu0 0.0
    %460 = vmatpush.msra.mxu0 0.0
    %461 = vmatpush.msra.mxu0 0.0
    %462 = vmatpush.msra.mxu0 0.0
    %463 = vmatpush.msra.mxu0 0.0
    %v464 = vand.u32 %v134, 4294901760
    %v465 = vsub.f32 %v134, %v464
    %v466 = vand.u32 %v465, 4294901760
    %467 = vmatpush.msra.mxu0 %v466
    %v468 = vand.u32 %v131, 4294901760
    %v469 = vsub.f32 %v131, %v468
    %v470 = vand.u32 %v469, 4294901760
    %471 = vmatpush.msra.mxu0 %v470
    %v472 = vand.u32 %v128, 4294901760
    %v473 = vsub.f32 %v128, %v472
    %v474 = vand.u32 %v473, 4294901760
    %475 = vmatpush.msra.mxu0 %v474
    %v476 = vand.u32 %v125, 4294901760
    %v477 = vsub.f32 %v125, %v476
    %v478 = vand.u32 %v477, 4294901760
    %479 = vmatpush.msra.mxu0 %v478
    %v480 = vand.u32 %v138, 4294901760
    %481 = vmatmul.f32.gmra.mxu0 %v480
    %v482 = vpop.f32.mrf.mxu0
    %v483 = vadd.f32 %v450, %v482
    %484 = vdwg.mxu0
    %485 = vmatpush.msra.mxu0 0.0
    %486 = vmatpush.msra.mxu0 0.0
    %487 = vmatpush.msra.mxu0 0.0
    %488 = vmatpush.msra.mxu0 0.0
    %489 = vmatpush.msra.mxu0 0.0
    %490 = vmatpush.msra.mxu0 0.0
    %491 = vmatpush.msra.mxu0 0.0
    %492 = vmatpush.msra.mxu0 0.0
    %493 = vmatpush.msra.mxu0 0.0
    %494 = vmatpush.msra.mxu0 0.0
    %495 = vmatpush.msra.mxu0 0.0
    %496 = vmatpush.msra.mxu0 0.0
    %v497 = vand.u32 %v134, 4294901760
    %498 = vmatpush.msra.mxu0 %v497
    %v499 = vand.u32 %v131, 4294901760
    %500 = vmatpush.msra.mxu0 %v499
    %v501 = vand.u32 %v128, 4294901760
    %502 = vmatpush.msra.mxu0 %v501
    %v503 = vand.u32 %v125, 4294901760
    %504 = vmatpush.msra.mxu0 %v503
    %v505 = vand.u32 %v138, 4294901760
    %506 = vmatmul.f32.gmra.mxu0 %v505
    %v507 = vpop.f32.mrf.mxu0
    %v508 = vadd.f32 %v483, %v507
    %509 = vdwg.mxu0
    %510 = vmatpush.msra.mxu0 0.0
    %511 = vmatpush.msra.mxu0 0.0
    %512 = vmatpush.msra.mxu0 0.0
    %513 = vmatpush.msra.mxu0 0.0
    %514 = vmatpush.msra.mxu0 0.0
    %515 = vmatpush.msra.mxu0 0.0
    %516 = vmatpush.msra.mxu0 0.0
    %517 = vmatpush.msra.mxu0 0.0
    %518 = vmatpush.msra.mxu0 0.0
    %519 = vmatpush.msra.mxu0 0.0
    %520 = vmatpush.msra.mxu0 0.0
    %521 = vmatpush.msra.mxu0 0.0
    %v522 = vand.u32 %v135, 4294901760
    %523 = vmatpush.msra.mxu0 %v522
    %v524 = vand.u32 %v132, 4294901760
    %525 = vmatpush.msra.mxu0 %v524
    %v526 = vand.u32 %v129, 4294901760
    %527 = vmatpush.msra.mxu0 %v526
    %v528 = vand.u32 %v126, 4294901760
    %529 = vmatpush.msra.mxu0 %v528
    %v530 = vand.u32 %v138, 4294901760
    %v531 = vsub.f32 %v138, %v530
    %v532 = vand.u32 %v531, 4294901760
    %v533 = vsub.f32 %v531, %v532
    %v534 = vand.u32 %v533, 4294901760
    %535 = vmatmul.f32.gmra.mxu0 %v534
    %v536 = vpop.f32.mrf.mxu0
    %v537 = vadd.f32 0.0, %v536
    %538 = vdwg.mxu0
    %539 = vmatpush.msra.mxu0 0.0
    %540 = vmatpush.msra.mxu0 0.0
    %541 = vmatpush.msra.mxu0 0.0
    %542 = vmatpush.msra.mxu0 0.0
    %543 = vmatpush.msra.mxu0 0.0
    %544 = vmatpush.msra.mxu0 0.0
    %545 = vmatpush.msra.mxu0 0.0
    %546 = vmatpush.msra.mxu0 0.0
    %547 = vmatpush.msra.mxu0 0.0
    %548 = vmatpush.msra.mxu0 0.0
    %549 = vmatpush.msra.mxu0 0.0
    %550 = vmatpush.msra.mxu0 0.0
    %v551 = vand.u32 %v135, 4294901760
    %v552 = vsub.f32 %v135, %v551
    %v553 = vand.u32 %v552, 4294901760
    %v554 = vsub.f32 %v552, %v553
    %v555 = vand.u32 %v554, 4294901760
    %556 = vmatpush.msra.mxu0 %v555
    %v557 = vand.u32 %v132, 4294901760
    %v558 = vsub.f32 %v132, %v557
    %v559 = vand.u32 %v558, 4294901760
    %v560 = vsub.f32 %v558, %v559
    %v561 = vand.u32 %v560, 4294901760
    %562 = vmatpush.msra.mxu0 %v561
    %v563 = vand.u32 %v129, 4294901760
    %v564 = vsub.f32 %v129, %v563
    %v565 = vand.u32 %v564, 4294901760
    %v566 = vsub.f32 %v564, %v565
    %v567 = vand.u32 %v566, 4294901760
    %568 = vmatpush.msra.mxu0 %v567
    %v569 = vand.u32 %v126, 4294901760
    %v570 = vsub.f32 %v126, %v569
    %v571 = vand.u32 %v570, 4294901760
    %v572 = vsub.f32 %v570, %v571
    %v573 = vand.u32 %v572, 4294901760
    %574 = vmatpush.msra.mxu0 %v573
    %v575 = vand.u32 %v138, 4294901760
    %576 = vmatmul.f32.gmra.mxu0 %v575
    %v577 = vpop.f32.mrf.mxu0
    %v578 = vadd.f32 %v537, %v577
    %579 = vdwg.mxu0
    %580 = vmatpush.msra.mxu0 0.0
    %581 = vmatpush.msra.mxu0 0.0
    %582 = vmatpush.msra.mxu0 0.0
    %583 = vmatpush.msra.mxu0 0.0
    %584 = vmatpush.msra.mxu0 0.0
    %585 = vmatpush.msra.mxu0 0.0
    %586 = vmatpush.msra.mxu0 0.0
    %587 = vmatpush.msra.mxu0 0.0
    %588 = vmatpush.msra.mxu0 0.0
    %589 = vmatpush.msra.mxu0 0.0
    %590 = vmatpush.msra.mxu0 0.0
    %591 = vmatpush.msra.mxu0 0.0
    %v592 = vand.u32 %v135, 4294901760
    %v593 = vsub.f32 %v135, %v592
    %594 = vmatpush.msra.mxu0 %v593
    %v595 = vand.u32 %v132, 4294901760
    %v596 = vsub.f32 %v132, %v595
    %597 = vmatpush.msra.mxu0 %v596
    %v598 = vand.u32 %v129, 4294901760
    %v599 = vsub.f32 %v129, %v598
    %600 = vmatpush.msra.mxu0 %v599
    %v601 = vand.u32 %v126, 4294901760
    %v602 = vsub.f32 %v126, %v601
    %603 = vmatpush.msra.mxu0 %v602
    %v604 = vand.u32 %v138, 4294901760
    %v605 = vsub.f32 %v138, %v604
    %606 = vmatmul.f32.gmra.mxu0 %v605
    %v607 = vpop.f32.mrf.mxu0
    %v608 = vadd.f32 %v578, %v607
    %609 = vdwg.mxu0
    %610 = vmatpush.msra.mxu0 0.0
    %611 = vmatpush.msra.mxu0 0.0
    %612 = vmatpush.msra.mxu0 0.0
    %613 = vmatpush.msra.mxu0 0.0
    %614 = vmatpush.msra.mxu0 0.0
    %615 = vmatpush.msra.mxu0 0.0
    %616 = vmatpush.msra.mxu0 0.0
    %617 = vmatpush.msra.mxu0 0.0
    %618 = vmatpush.msra.mxu0 0.0
    %619 = vmatpush.msra.mxu0 0.0
    %620 = vmatpush.msra.mxu0 0.0
    %621 = vmatpush.msra.mxu0 0.0
    %v622 = vand.u32 %v135, 4294901760
    %623 = vmatpush.msra.mxu0 %v622
    %v624 = vand.u32 %v132, 4294901760
    %625 = vmatpush.msra.mxu0 %v624
    %v626 = vand.u32 %v129, 4294901760
    %627 = vmatpush.msra.mxu0 %v626
    %v628 = vand.u32 %v126, 4294901760
    %629 = vmatpush.msra.mxu0 %v628
    %v630 = vand.u32 %v138, 4294901760
    %v631 = vsub.f32 %v138, %v630
    %v632 = vand.u32 %v631, 4294901760
    %633 = vmatmul.f32.gmra.mxu0 %v632
    %v634 = vpop.f32.mrf.mxu0
    %v635 = vadd.f32 %v608, %v634
    %636 = vdwg.mxu0
    %637 = vmatpush.msra.mxu0 0.0
    %638 = vmatpush.msra.mxu0 0.0
    %639 = vmatpush.msra.mxu0 0.0
    %640 = vmatpush.msra.mxu0 0.0
    %641 = vmatpush.msra.mxu0 0.0
    %642 = vmatpush.msra.mxu0 0.0
    %643 = vmatpush.msra.mxu0 0.0
    %644 = vmatpush.msra.mxu0 0.0
    %645 = vmatpush.msra.mxu0 0.0
    %646 = vmatpush.msra.mxu0 0.0
    %647 = vmatpush.msra.mxu0 0.0
    %648 = vmatpush.msra.mxu0 0.0
    %v649 = vand.u32 %v135, 4294901760
    %v650 = vsub.f32 %v135, %v649
    %v651 = vand.u32 %v650, 4294901760
    %652 = vmatpush.msra.mxu0 %v651
    %v653 = vand.u32 %v132, 4294901760
    %v654 = vsub.f32 %v132, %v653
    %v655 = vand.u32 %v654, 4294901760
    %656 = vmatpush.msra.mxu0 %v655
    %v657 = vand.u32 %v129, 4294901760
    %v658 = vsub.f32 %v129, %v657
    %v659 = vand.u32 %v658, 4294901760
    %660 = vmatpush.msra.mxu0 %v659
    %v661 = vand.u32 %v126, 4294901760
    %v662 = vsub.f32 %v126, %v661
    %v663 = vand.u32 %v662, 4294901760
    %664 = vmatpush.msra.mxu0 %v663
    %v665 = vand.u32 %v138, 4294901760
    %666 = vmatmul.f32.gmra.mxu0 %v665
    %v667 = vpop.f32.mrf.mxu0
    %v668 = vadd.f32 %v635, %v667
    %669 = vdwg.mxu0
    %670 = vmatpush.msra.mxu0 0.0
    %671 = vmatpush.msra.mxu0 0.0
    %672 = vmatpush.msra.mxu0 0.0
    %673 = vmatpush.msra.mxu0 0.0
    %674 = vmatpush.msra.mxu0 0.0
    %675 = vmatpush.msra.mxu0 0.0
    %676 = vmatpush.msra.mxu0 0.0
    %677 = vmatpush.msra.mxu0 0.0
    %678 = vmatpush.msra.mxu0 0.0
    %679 = vmatpush.msra.mxu0 0.0
    %680 = vmatpush.msra.mxu0 0.0
    %681 = vmatpush.msra.mxu0 0.0
    %v682 = vand.u32 %v135, 4294901760
    %683 = vmatpush.msra.mxu0 %v682
    %v684 = vand.u32 %v132, 4294901760
    %685 = vmatpush.msra.mxu0 %v684
    %v686 = vand.u32 %v129, 4294901760
    %687 = vmatpush.msra.mxu0 %v686
    %v688 = vand.u32 %v126, 4294901760
    %689 = vmatpush.msra.mxu0 %v688
    %v690 = vand.u32 %v138, 4294901760
    %691 = vmatmul.f32.gmra.mxu0 %v690
    %v692 = vpop.f32.mrf.mxu0
    %v693 = vadd.f32 %v668, %v692
    %694 = vdwg.mxu0
    %v696 = vsel %vm136, %v110, 0
    %698 = vmatpush.msra.mxu0 0.0
    %699 = vmatpush.msra.mxu0 0.0
    %700 = vmatpush.msra.mxu0 0.0
    %701 = vmatpush.msra.mxu0 0.0
    %702 = vmatpush.msra.mxu0 0.0
    %703 = vmatpush.msra.mxu0 0.0
    %704 = vmatpush.msra.mxu0 0.0
    %705 = vmatpush.msra.mxu0 0.0
    %706 = vmatpush.msra.mxu0 0.0
    %707 = vmatpush.msra.mxu0 0.0
    %708 = vmatpush.msra.mxu0 0.0
    %709 = vmatpush.msra.mxu0 0.0
    %v710 = vand.u32 %v120, 4294901760
    %711 = vmatpush.msra.mxu0 %v710
    %v712 = vand.u32 %v117, 4294901760
    %713 = vmatpush.msra.mxu0 %v712
    %v714 = vand.u32 %v114, 4294901760
    %715 = vmatpush.msra.mxu0 %v714
    %v716 = vand.u32 %v111, 4294901760
    %717 = vmatpush.msra.mxu0 %v716
    %v718 = vand.u32 %v696, 4294901760
    %v719 = vsub.f32 %v696, %v718
    %v720 = vand.u32 %v719, 4294901760
    %v721 = vsub.f32 %v719, %v720
    %v722 = vand.u32 %v721, 4294901760
    %723 = vmatmul.f32.gmra.mxu0 %v722
    %v724 = vpop.f32.mrf.mxu0
    %v725 = vadd.f32 %v323, %v724
    %726 = vdwg.mxu0
    %727 = vmatpush.msra.mxu0 0.0
    %728 = vmatpush.msra.mxu0 0.0
    %729 = vmatpush.msra.mxu0 0.0
    %730 = vmatpush.msra.mxu0 0.0
    %731 = vmatpush.msra.mxu0 0.0
    %732 = vmatpush.msra.mxu0 0.0
    %733 = vmatpush.msra.mxu0 0.0
    %734 = vmatpush.msra.mxu0 0.0
    %735 = vmatpush.msra.mxu0 0.0
    %736 = vmatpush.msra.mxu0 0.0
    %737 = vmatpush.msra.mxu0 0.0
    %738 = vmatpush.msra.mxu0 0.0
    %v739 = vand.u32 %v120, 4294901760
    %v740 = vsub.f32 %v120, %v739
    %v741 = vand.u32 %v740, 4294901760
    %v742 = vsub.f32 %v740, %v741
    %v743 = vand.u32 %v742, 4294901760
    %744 = vmatpush.msra.mxu0 %v743
    %v745 = vand.u32 %v117, 4294901760
    %v746 = vsub.f32 %v117, %v745
    %v747 = vand.u32 %v746, 4294901760
    %v748 = vsub.f32 %v746, %v747
    %v749 = vand.u32 %v748, 4294901760
    %750 = vmatpush.msra.mxu0 %v749
    %v751 = vand.u32 %v114, 4294901760
    %v752 = vsub.f32 %v114, %v751
    %v753 = vand.u32 %v752, 4294901760
    %v754 = vsub.f32 %v752, %v753
    %v755 = vand.u32 %v754, 4294901760
    %756 = vmatpush.msra.mxu0 %v755
    %v757 = vand.u32 %v111, 4294901760
    %v758 = vsub.f32 %v111, %v757
    %v759 = vand.u32 %v758, 4294901760
    %v760 = vsub.f32 %v758, %v759
    %v761 = vand.u32 %v760, 4294901760
    %762 = vmatpush.msra.mxu0 %v761
    %v763 = vand.u32 %v696, 4294901760
    %764 = vmatmul.f32.gmra.mxu0 %v763
    %v765 = vpop.f32.mrf.mxu0
    %v766 = vadd.f32 %v725, %v765
    %767 = vdwg.mxu0
    %768 = vmatpush.msra.mxu0 0.0
    %769 = vmatpush.msra.mxu0 0.0
    %770 = vmatpush.msra.mxu0 0.0
    %771 = vmatpush.msra.mxu0 0.0
    %772 = vmatpush.msra.mxu0 0.0
    %773 = vmatpush.msra.mxu0 0.0
    %774 = vmatpush.msra.mxu0 0.0
    %775 = vmatpush.msra.mxu0 0.0
    %776 = vmatpush.msra.mxu0 0.0
    %777 = vmatpush.msra.mxu0 0.0
    %778 = vmatpush.msra.mxu0 0.0
    %779 = vmatpush.msra.mxu0 0.0
    %v780 = vand.u32 %v120, 4294901760
    %v781 = vsub.f32 %v120, %v780
    %782 = vmatpush.msra.mxu0 %v781
    %v783 = vand.u32 %v117, 4294901760
    %v784 = vsub.f32 %v117, %v783
    %785 = vmatpush.msra.mxu0 %v784
    %v786 = vand.u32 %v114, 4294901760
    %v787 = vsub.f32 %v114, %v786
    %788 = vmatpush.msra.mxu0 %v787
    %v789 = vand.u32 %v111, 4294901760
    %v790 = vsub.f32 %v111, %v789
    %791 = vmatpush.msra.mxu0 %v790
    %v792 = vand.u32 %v696, 4294901760
    %v793 = vsub.f32 %v696, %v792
    %794 = vmatmul.f32.gmra.mxu0 %v793
    %v795 = vpop.f32.mrf.mxu0
    %v796 = vadd.f32 %v766, %v795
    %797 = vdwg.mxu0
    %798 = vmatpush.msra.mxu0 0.0
    %799 = vmatpush.msra.mxu0 0.0
    %800 = vmatpush.msra.mxu0 0.0
    %801 = vmatpush.msra.mxu0 0.0
    %802 = vmatpush.msra.mxu0 0.0
    %803 = vmatpush.msra.mxu0 0.0
    %804 = vmatpush.msra.mxu0 0.0
    %805 = vmatpush.msra.mxu0 0.0
    %806 = vmatpush.msra.mxu0 0.0
    %807 = vmatpush.msra.mxu0 0.0
    %808 = vmatpush.msra.mxu0 0.0
    %809 = vmatpush.msra.mxu0 0.0
    %v810 = vand.u32 %v120, 4294901760
    %811 = vmatpush.msra.mxu0 %v810
    %v812 = vand.u32 %v117, 4294901760
    %813 = vmatpush.msra.mxu0 %v812
    %v814 = vand.u32 %v114, 4294901760
    %815 = vmatpush.msra.mxu0 %v814
    %v816 = vand.u32 %v111, 4294901760
    %817 = vmatpush.msra.mxu0 %v816
    %v818 = vand.u32 %v696, 4294901760
    %v819 = vsub.f32 %v696, %v818
    %v820 = vand.u32 %v819, 4294901760
    %821 = vmatmul.f32.gmra.mxu0 %v820
    %v822 = vpop.f32.mrf.mxu0
    %v823 = vadd.f32 %v796, %v822
    %824 = vdwg.mxu0
    %825 = vmatpush.msra.mxu0 0.0
    %826 = vmatpush.msra.mxu0 0.0
    %827 = vmatpush.msra.mxu0 0.0
    %828 = vmatpush.msra.mxu0 0.0
    %829 = vmatpush.msra.mxu0 0.0
    %830 = vmatpush.msra.mxu0 0.0
    %831 = vmatpush.msra.mxu0 0.0
    %832 = vmatpush.msra.mxu0 0.0
    %833 = vmatpush.msra.mxu0 0.0
    %834 = vmatpush.msra.mxu0 0.0
    %835 = vmatpush.msra.mxu0 0.0
    %836 = vmatpush.msra.mxu0 0.0
    %v837 = vand.u32 %v120, 4294901760
    %v838 = vsub.f32 %v120, %v837
    %v839 = vand.u32 %v838, 4294901760
    %840 = vmatpush.msra.mxu0 %v839
    %v841 = vand.u32 %v117, 4294901760
    %v842 = vsub.f32 %v117, %v841
    %v843 = vand.u32 %v842, 4294901760
    %844 = vmatpush.msra.mxu0 %v843
    %v845 = vand.u32 %v114, 4294901760
    %v846 = vsub.f32 %v114, %v845
    %v847 = vand.u32 %v846, 4294901760
    %848 = vmatpush.msra.mxu0 %v847
    %v849 = vand.u32 %v111, 4294901760
    %v850 = vsub.f32 %v111, %v849
    %v851 = vand.u32 %v850, 4294901760
    %852 = vmatpush.msra.mxu0 %v851
    %v853 = vand.u32 %v696, 4294901760
    %854 = vmatmul.f32.gmra.mxu0 %v853
    %v855 = vpop.f32.mrf.mxu0
    %v856 = vadd.f32 %v823, %v855
    %857 = vdwg.mxu0
    %858 = vmatpush.msra.mxu0 0.0
    %859 = vmatpush.msra.mxu0 0.0
    %860 = vmatpush.msra.mxu0 0.0
    %861 = vmatpush.msra.mxu0 0.0
    %862 = vmatpush.msra.mxu0 0.0
    %863 = vmatpush.msra.mxu0 0.0
    %864 = vmatpush.msra.mxu0 0.0
    %865 = vmatpush.msra.mxu0 0.0
    %866 = vmatpush.msra.mxu0 0.0
    %867 = vmatpush.msra.mxu0 0.0
    %868 = vmatpush.msra.mxu0 0.0
    %869 = vmatpush.msra.mxu0 0.0
    %v870 = vand.u32 %v120, 4294901760
    %871 = vmatpush.msra.mxu0 %v870
    %v872 = vand.u32 %v117, 4294901760
    %873 = vmatpush.msra.mxu0 %v872
    %v874 = vand.u32 %v114, 4294901760
    %875 = vmatpush.msra.mxu0 %v874
    %v876 = vand.u32 %v111, 4294901760
    %877 = vmatpush.msra.mxu0 %v876
    %v878 = vand.u32 %v696, 4294901760
    %879 = vmatmul.f32.gmra.mxu0 %v878
    %v880 = vpop.f32.mrf.mxu0
    %v881 = vadd.f32 %v856, %v880
    %882 = vdwg.mxu0
    %883 = vmatpush.msra.mxu0 0.0
    %884 = vmatpush.msra.mxu0 0.0
    %885 = vmatpush.msra.mxu0 0.0
    %886 = vmatpush.msra.mxu0 0.0
    %887 = vmatpush.msra.mxu0 0.0
    %888 = vmatpush.msra.mxu0 0.0
    %889 = vmatpush.msra.mxu0 0.0
    %890 = vmatpush.msra.mxu0 0.0
    %891 = vmatpush.msra.mxu0 0.0
    %892 = vmatpush.msra.mxu0 0.0
    %893 = vmatpush.msra.mxu0 0.0
    %894 = vmatpush.msra.mxu0 0.0
    %v895 = vand.u32 %v121, 4294901760
    %896 = vmatpush.msra.mxu0 %v895
    %v897 = vand.u32 %v118, 4294901760
    %898 = vmatpush.msra.mxu0 %v897
    %v899 = vand.u32 %v115, 4294901760
    %900 = vmatpush.msra.mxu0 %v899
    %v901 = vand.u32 %v112, 4294901760
    %902 = vmatpush.msra.mxu0 %v901
    %v903 = vand.u32 %v696, 4294901760
    %v904 = vsub.f32 %v696, %v903
    %v905 = vand.u32 %v904, 4294901760
    %v906 = vsub.f32 %v904, %v905
    %v907 = vand.u32 %v906, 4294901760
    %908 = vmatmul.f32.gmra.mxu0 %v907
    %v909 = vpop.f32.mrf.mxu0
    %v910 = vadd.f32 %v508, %v909
    %911 = vdwg.mxu0
    %912 = vmatpush.msra.mxu0 0.0
    %913 = vmatpush.msra.mxu0 0.0
    %914 = vmatpush.msra.mxu0 0.0
    %915 = vmatpush.msra.mxu0 0.0
    %916 = vmatpush.msra.mxu0 0.0
    %917 = vmatpush.msra.mxu0 0.0
    %918 = vmatpush.msra.mxu0 0.0
    %919 = vmatpush.msra.mxu0 0.0
    %920 = vmatpush.msra.mxu0 0.0
    %921 = vmatpush.msra.mxu0 0.0
    %922 = vmatpush.msra.mxu0 0.0
    %923 = vmatpush.msra.mxu0 0.0
    %v924 = vand.u32 %v121, 4294901760
    %v925 = vsub.f32 %v121, %v924
    %v926 = vand.u32 %v925, 4294901760
    %v927 = vsub.f32 %v925, %v926
    %v928 = vand.u32 %v927, 4294901760
    %929 = vmatpush.msra.mxu0 %v928
    %v930 = vand.u32 %v118, 4294901760
    %v931 = vsub.f32 %v118, %v930
    %v932 = vand.u32 %v931, 4294901760
    %v933 = vsub.f32 %v931, %v932
    %v934 = vand.u32 %v933, 4294901760
    %935 = vmatpush.msra.mxu0 %v934
    %v936 = vand.u32 %v115, 4294901760
    %v937 = vsub.f32 %v115, %v936
    %v938 = vand.u32 %v937, 4294901760
    %v939 = vsub.f32 %v937, %v938
    %v940 = vand.u32 %v939, 4294901760
    %941 = vmatpush.msra.mxu0 %v940
    %v942 = vand.u32 %v112, 4294901760
    %v943 = vsub.f32 %v112, %v942
    %v944 = vand.u32 %v943, 4294901760
    %v945 = vsub.f32 %v943, %v944
    %v946 = vand.u32 %v945, 4294901760
    %947 = vmatpush.msra.mxu0 %v946
    %v948 = vand.u32 %v696, 4294901760
    %949 = vmatmul.f32.gmra.mxu0 %v948
    %v950 = vpop.f32.mrf.mxu0
    %v951 = vadd.f32 %v910, %v950
    %952 = vdwg.mxu0
    %953 = vmatpush.msra.mxu0 0.0
    %954 = vmatpush.msra.mxu0 0.0
    %955 = vmatpush.msra.mxu0 0.0
    %956 = vmatpush.msra.mxu0 0.0
    %957 = vmatpush.msra.mxu0 0.0
    %958 = vmatpush.msra.mxu0 0.0
    %959 = vmatpush.msra.mxu0 0.0
    %960 = vmatpush.msra.mxu0 0.0
    %961 = vmatpush.msra.mxu0 0.0
    %962 = vmatpush.msra.mxu0 0.0
    %963 = vmatpush.msra.mxu0 0.0
    %964 = vmatpush.msra.mxu0 0.0
    %v965 = vand.u32 %v121, 4294901760
    %v966 = vsub.f32 %v121, %v965
    %967 = vmatpush.msra.mxu0 %v966
    %v968 = vand.u32 %v118, 4294901760
    %v969 = vsub.f32 %v118, %v968
    %970 = vmatpush.msra.mxu0 %v969
    %v971 = vand.u32 %v115, 4294901760
    %v972 = vsub.f32 %v115, %v971
    %973 = vmatpush.msra.mxu0 %v972
    %v974 = vand.u32 %v112, 4294901760
    %v975 = vsub.f32 %v112, %v974
    %976 = vmatpush.msra.mxu0 %v975
    %v977 = vand.u32 %v696, 4294901760
    %v978 = vsub.f32 %v696, %v977
    %979 = vmatmul.f32.gmra.mxu0 %v978
    %v980 = vpop.f32.mrf.mxu0
    %v981 = vadd.f32 %v951, %v980
    %982 = vdwg.mxu0
    %983 = vmatpush.msra.mxu0 0.0
    %984 = vmatpush.msra.mxu0 0.0
    %985 = vmatpush.msra.mxu0 0.0
    %986 = vmatpush.msra.mxu0 0.0
    %987 = vmatpush.msra.mxu0 0.0
    %988 = vmatpush.msra.mxu0 0.0
    %989 = vmatpush.msra.mxu0 0.0
    %990 = vmatpush.msra.mxu0 0.0
    %991 = vmatpush.msra.mxu0 0.0
    %992 = vmatpush.msra.mxu0 0.0
    %993 = vmatpush.msra.mxu0 0.0
    %994 = vmatpush.msra.mxu0 0.0
    %v995 = vand.u32 %v121, 4294901760
    %996 = vmatpush.msra.mxu0 %v995
    %v997 = vand.u32 %v118, 4294901760
    %998 = vmatpush.msra.mxu0 %v997
    %v999 = vand.u32 %v115, 4294901760
    %1000 = vmatpush.msra.mxu0 %v999
    %v1001 = vand.u32 %v112, 4294901760
    %1002 = vmatpush.msra.mxu0 %v1001
    %v1003 = vand.u32 %v696, 4294901760
    %v1004 = vsub.f32 %v696, %v1003
    %v1005 = vand.u32 %v1004, 4294901760
    %1006 = vmatmul.f32.gmra.mxu0 %v1005
    %v1007 = vpop.f32.mrf.mxu0
    %v1008 = vadd.f32 %v981, %v1007
    %1009 = vdwg.mxu0
    %1010 = vmatpush.msra.mxu0 0.0
    %1011 = vmatpush.msra.mxu0 0.0
    %1012 = vmatpush.msra.mxu0 0.0
    %1013 = vmatpush.msra.mxu0 0.0
    %1014 = vmatpush.msra.mxu0 0.0
    %1015 = vmatpush.msra.mxu0 0.0
    %1016 = vmatpush.msra.mxu0 0.0
    %1017 = vmatpush.msra.mxu0 0.0
    %1018 = vmatpush.msra.mxu0 0.0
    %1019 = vmatpush.msra.mxu0 0.0
    %1020 = vmatpush.msra.mxu0 0.0
    %1021 = vmatpush.msra.mxu0 0.0
    %v1022 = vand.u32 %v121, 4294901760
    %v1023 = vsub.f32 %v121, %v1022
    %v1024 = vand.u32 %v1023, 4294901760
    %1025 = vmatpush.msra.mxu0 %v1024
    %v1026 = vand.u32 %v118, 4294901760
    %v1027 = vsub.f32 %v118, %v1026
    %v1028 = vand.u32 %v1027, 4294901760
    %1029 = vmatpush.msra.mxu0 %v1028
    %v1030 = vand.u32 %v115, 4294901760
    %v1031 = vsub.f32 %v115, %v1030
    %v1032 = vand.u32 %v1031, 4294901760
    %1033 = vmatpush.msra.mxu0 %v1032
    %v1034 = vand.u32 %v112, 4294901760
    %v1035 = vsub.f32 %v112, %v1034
    %v1036 = vand.u32 %v1035, 4294901760
    %1037 = vmatpush.msra.mxu0 %v1036
    %v1038 = vand.u32 %v696, 4294901760
    %1039 = vmatmul.f32.gmra.mxu0 %v1038
    %v1040 = vpop.f32.mrf.mxu0
    %v1041 = vadd.f32 %v1008, %v1040
    %1042 = vdwg.mxu0
    %1043 = vmatpush.msra.mxu0 0.0
    %1044 = vmatpush.msra.mxu0 0.0
    %1045 = vmatpush.msra.mxu0 0.0
    %1046 = vmatpush.msra.mxu0 0.0
    %1047 = vmatpush.msra.mxu0 0.0
    %1048 = vmatpush.msra.mxu0 0.0
    %1049 = vmatpush.msra.mxu0 0.0
    %1050 = vmatpush.msra.mxu0 0.0
    %1051 = vmatpush.msra.mxu0 0.0
    %1052 = vmatpush.msra.mxu0 0.0
    %1053 = vmatpush.msra.mxu0 0.0
    %1054 = vmatpush.msra.mxu0 0.0
    %v1055 = vand.u32 %v121, 4294901760
    %1056 = vmatpush.msra.mxu0 %v1055
    %v1057 = vand.u32 %v118, 4294901760
    %1058 = vmatpush.msra.mxu0 %v1057
    %v1059 = vand.u32 %v115, 4294901760
    %1060 = vmatpush.msra.mxu0 %v1059
    %v1061 = vand.u32 %v112, 4294901760
    %1062 = vmatpush.msra.mxu0 %v1061
    %v1063 = vand.u32 %v696, 4294901760
    %1064 = vmatmul.f32.gmra.mxu0 %v1063
    %v1065 = vpop.f32.mrf.mxu0
    %v1066 = vadd.f32 %v1041, %v1065
    %1067 = vdwg.mxu0
    %1068 = vmatpush.msra.mxu0 0.0
    %1069 = vmatpush.msra.mxu0 0.0
    %1070 = vmatpush.msra.mxu0 0.0
    %1071 = vmatpush.msra.mxu0 0.0
    %1072 = vmatpush.msra.mxu0 0.0
    %1073 = vmatpush.msra.mxu0 0.0
    %1074 = vmatpush.msra.mxu0 0.0
    %1075 = vmatpush.msra.mxu0 0.0
    %1076 = vmatpush.msra.mxu0 0.0
    %1077 = vmatpush.msra.mxu0 0.0
    %1078 = vmatpush.msra.mxu0 0.0
    %1079 = vmatpush.msra.mxu0 0.0
    %v1080 = vand.u32 %v122, 4294901760
    %1081 = vmatpush.msra.mxu0 %v1080
    %v1082 = vand.u32 %v119, 4294901760
    %1083 = vmatpush.msra.mxu0 %v1082
    %v1084 = vand.u32 %v116, 4294901760
    %1085 = vmatpush.msra.mxu0 %v1084
    %v1086 = vand.u32 %v113, 4294901760
    %1087 = vmatpush.msra.mxu0 %v1086
    %v1088 = vand.u32 %v696, 4294901760
    %v1089 = vsub.f32 %v696, %v1088
    %v1090 = vand.u32 %v1089, 4294901760
    %v1091 = vsub.f32 %v1089, %v1090
    %v1092 = vand.u32 %v1091, 4294901760
    %1093 = vmatmul.f32.gmra.mxu0 %v1092
    %v1094 = vpop.f32.mrf.mxu0
    %v1095 = vadd.f32 %v693, %v1094
    %1096 = vdwg.mxu0
    %1097 = vmatpush.msra.mxu0 0.0
    %1098 = vmatpush.msra.mxu0 0.0
    %1099 = vmatpush.msra.mxu0 0.0
    %1100 = vmatpush.msra.mxu0 0.0
    %1101 = vmatpush.msra.mxu0 0.0
    %1102 = vmatpush.msra.mxu0 0.0
    %1103 = vmatpush.msra.mxu0 0.0
    %1104 = vmatpush.msra.mxu0 0.0
    %1105 = vmatpush.msra.mxu0 0.0
    %1106 = vmatpush.msra.mxu0 0.0
    %1107 = vmatpush.msra.mxu0 0.0
    %1108 = vmatpush.msra.mxu0 0.0
    %v1109 = vand.u32 %v122, 4294901760
    %v1110 = vsub.f32 %v122, %v1109
    %v1111 = vand.u32 %v1110, 4294901760
    %v1112 = vsub.f32 %v1110, %v1111
    %v1113 = vand.u32 %v1112, 4294901760
    %1114 = vmatpush.msra.mxu0 %v1113
    %v1115 = vand.u32 %v119, 4294901760
    %v1116 = vsub.f32 %v119, %v1115
    %v1117 = vand.u32 %v1116, 4294901760
    %v1118 = vsub.f32 %v1116, %v1117
    %v1119 = vand.u32 %v1118, 4294901760
    %1120 = vmatpush.msra.mxu0 %v1119
    %v1121 = vand.u32 %v116, 4294901760
    %v1122 = vsub.f32 %v116, %v1121
    %v1123 = vand.u32 %v1122, 4294901760
    %v1124 = vsub.f32 %v1122, %v1123
    %v1125 = vand.u32 %v1124, 4294901760
    %1126 = vmatpush.msra.mxu0 %v1125
    %v1127 = vand.u32 %v113, 4294901760
    %v1128 = vsub.f32 %v113, %v1127
    %v1129 = vand.u32 %v1128, 4294901760
    %v1130 = vsub.f32 %v1128, %v1129
    %v1131 = vand.u32 %v1130, 4294901760
    %1132 = vmatpush.msra.mxu0 %v1131
    %v1133 = vand.u32 %v696, 4294901760
    %1134 = vmatmul.f32.gmra.mxu0 %v1133
    %v1135 = vpop.f32.mrf.mxu0
    %v1136 = vadd.f32 %v1095, %v1135
    %1137 = vdwg.mxu0
    %1138 = vmatpush.msra.mxu0 0.0
    %1139 = vmatpush.msra.mxu0 0.0
    %1140 = vmatpush.msra.mxu0 0.0
    %1141 = vmatpush.msra.mxu0 0.0
    %1142 = vmatpush.msra.mxu0 0.0
    %1143 = vmatpush.msra.mxu0 0.0
    %1144 = vmatpush.msra.mxu0 0.0
    %1145 = vmatpush.msra.mxu0 0.0
    %1146 = vmatpush.msra.mxu0 0.0
    %1147 = vmatpush.msra.mxu0 0.0
    %1148 = vmatpush.msra.mxu0 0.0
    %1149 = vmatpush.msra.mxu0 0.0
    %v1150 = vand.u32 %v122, 4294901760
    %v1151 = vsub.f32 %v122, %v1150
    %1152 = vmatpush.msra.mxu0 %v1151
    %v1153 = vand.u32 %v119, 4294901760
    %v1154 = vsub.f32 %v119, %v1153
    %1155 = vmatpush.msra.mxu0 %v1154
    %v1156 = vand.u32 %v116, 4294901760
    %v1157 = vsub.f32 %v116, %v1156
    %1158 = vmatpush.msra.mxu0 %v1157
    %v1159 = vand.u32 %v113, 4294901760
    %v1160 = vsub.f32 %v113, %v1159
    %1161 = vmatpush.msra.mxu0 %v1160
    %v1162 = vand.u32 %v696, 4294901760
    %v1163 = vsub.f32 %v696, %v1162
    %1164 = vmatmul.f32.gmra.mxu0 %v1163
    %v1165 = vpop.f32.mrf.mxu0
    %v1166 = vadd.f32 %v1136, %v1165
    %1167 = vdwg.mxu0
    %1168 = vmatpush.msra.mxu0 0.0
    %1169 = vmatpush.msra.mxu0 0.0
    %1170 = vmatpush.msra.mxu0 0.0
    %1171 = vmatpush.msra.mxu0 0.0
    %1172 = vmatpush.msra.mxu0 0.0
    %1173 = vmatpush.msra.mxu0 0.0
    %1174 = vmatpush.msra.mxu0 0.0
    %1175 = vmatpush.msra.mxu0 0.0
    %1176 = vmatpush.msra.mxu0 0.0
    %1177 = vmatpush.msra.mxu0 0.0
    %1178 = vmatpush.msra.mxu0 0.0
    %1179 = vmatpush.msra.mxu0 0.0
    %v1180 = vand.u32 %v122, 4294901760
    %1181 = vmatpush.msra.mxu0 %v1180
    %v1182 = vand.u32 %v119, 4294901760
    %1183 = vmatpush.msra.mxu0 %v1182
    %v1184 = vand.u32 %v116, 4294901760
    %1185 = vmatpush.msra.mxu0 %v1184
    %v1186 = vand.u32 %v113, 4294901760
    %1187 = vmatpush.msra.mxu0 %v1186
    %v1188 = vand.u32 %v696, 4294901760
    %v1189 = vsub.f32 %v696, %v1188
    %v1190 = vand.u32 %v1189, 4294901760
    %1191 = vmatmul.f32.gmra.mxu0 %v1190
    %v1192 = vpop.f32.mrf.mxu0
    %v1193 = vadd.f32 %v1166, %v1192
    %1194 = vdwg.mxu0
    %1195 = vmatpush.msra.mxu0 0.0
    %1196 = vmatpush.msra.mxu0 0.0
    %1197 = vmatpush.msra.mxu0 0.0
    %1198 = vmatpush.msra.mxu0 0.0
    %1199 = vmatpush.msra.mxu0 0.0
    %1200 = vmatpush.msra.mxu0 0.0
    %1201 = vmatpush.msra.mxu0 0.0
    %1202 = vmatpush.msra.mxu0 0.0
    %1203 = vmatpush.msra.mxu0 0.0
    %1204 = vmatpush.msra.mxu0 0.0
    %1205 = vmatpush.msra.mxu0 0.0
    %1206 = vmatpush.msra.mxu0 0.0
    %v1207 = vand.u32 %v122, 4294901760
    %v1208 = vsub.f32 %v122, %v1207
    %v1209 = vand.u32 %v1208, 4294901760
    %1210 = vmatpush.msra.mxu0 %v1209
    %v1211 = vand.u32 %v119, 4294901760
    %v1212 = vsub.f32 %v119, %v1211
    %v1213 = vand.u32 %v1212, 4294901760
    %1214 = vmatpush.msra.mxu0 %v1213
    %v1215 = vand.u32 %v116, 4294901760
    %v1216 = vsub.f32 %v116, %v1215
    %v1217 = vand.u32 %v1216, 4294901760
    %1218 = vmatpush.msra.mxu0 %v1217
    %v1219 = vand.u32 %v113, 4294901760
    %v1220 = vsub.f32 %v113, %v1219
    %v1221 = vand.u32 %v1220, 4294901760
    %1222 = vmatpush.msra.mxu0 %v1221
    %v1223 = vand.u32 %v696, 4294901760
    %1224 = vmatmul.f32.gmra.mxu0 %v1223
    %v1225 = vpop.f32.mrf.mxu0
    %v1226 = vadd.f32 %v1193, %v1225
    %1227 = vdwg.mxu0
    %1228 = vmatpush.msra.mxu0 0.0
    %1229 = vmatpush.msra.mxu0 0.0
    %1230 = vmatpush.msra.mxu0 0.0
    %1231 = vmatpush.msra.mxu0 0.0
    %1232 = vmatpush.msra.mxu0 0.0
    %1233 = vmatpush.msra.mxu0 0.0
    %1234 = vmatpush.msra.mxu0 0.0
    %1235 = vmatpush.msra.mxu0 0.0
    %1236 = vmatpush.msra.mxu0 0.0
    %1237 = vmatpush.msra.mxu0 0.0
    %1238 = vmatpush.msra.mxu0 0.0
    %1239 = vmatpush.msra.mxu0 0.0
    %v1240 = vand.u32 %v122, 4294901760
    %1241 = vmatpush.msra.mxu0 %v1240
    %v1242 = vand.u32 %v119, 4294901760
    %1243 = vmatpush.msra.mxu0 %v1242
    %v1244 = vand.u32 %v116, 4294901760
    %1245 = vmatpush.msra.mxu0 %v1244
    %v1246 = vand.u32 %v113, 4294901760
    %1247 = vmatpush.msra.mxu0 %v1246
    %v1248 = vand.u32 %v696, 4294901760
    %1249 = vmatmul.f32.gmra.mxu0 %v1248
    %v1250 = vpop.f32.mrf.mxu0
    %v1251 = vadd.f32 %v1226, %v1250
    %1252 = vdwg.mxu0
    %v1253 = vld [vmem:[#allocation6] sm:$0xff]
    %v1254 = vld [vmem:[#allocation9 + $0xc0] sm:$0xff]
    %v1255 = vld [vmem:[#allocation9 + $0xc8] sm:$0xff]
    %v1256 = vld [vmem:[#allocation9 + $0xd0] sm:$0xff]
    %v1257 = vld [vmem:[#allocation9 + $0xd8] sm:$0xff]
    %v1258 = vld [vmem:[#allocation9 + $0xe0] sm:$0xff]
    %v1259 = vld [vmem:[#allocation9 + $0xe8] sm:$0xff]
    %v1260 = vld [vmem:[#allocation9 + $0xf0] sm:$0xff]
    %v1261 = vld [vmem:[#allocation9 + $0xf8] sm:$0xff]
    %v1262 = vld [vmem:[#allocation9 + $0x100] sm:$0xff]
    %v1263 = vld [vmem:[#allocation9 + $0x108] sm:$0xff]
    %v1264 = vld [vmem:[#allocation9 + $0x110] sm:$0xff]
    %v1265 = vld [vmem:[#allocation9 + $0x118] sm:$0xff]
    %v1267 = vsel %vm136, %v1253, 0
    %1269 = vmatpush.msra.mxu0 0.0
    %1270 = vmatpush.msra.mxu0 0.0
    %1271 = vmatpush.msra.mxu0 0.0
    %1272 = vmatpush.msra.mxu0 0.0
    %1273 = vmatpush.msra.mxu0 0.0
    %1274 = vmatpush.msra.mxu0 0.0
    %1275 = vmatpush.msra.mxu0 0.0
    %1276 = vmatpush.msra.mxu0 0.0
    %1277 = vmatpush.msra.mxu0 0.0
    %1278 = vmatpush.msra.mxu0 0.0
    %1279 = vmatpush.msra.mxu0 0.0
    %1280 = vmatpush.msra.mxu0 0.0
    %v1281 = vand.u32 %v1263, 4294901760
    %1282 = vmatpush.msra.mxu0 %v1281
    %v1283 = vand.u32 %v1260, 4294901760
    %1284 = vmatpush.msra.mxu0 %v1283
    %v1285 = vand.u32 %v1257, 4294901760
    %1286 = vmatpush.msra.mxu0 %v1285
    %v1287 = vand.u32 %v1254, 4294901760
    %1288 = vmatpush.msra.mxu0 %v1287
    %v1289 = vand.u32 %v1267, 4294901760
    %v1290 = vsub.f32 %v1267, %v1289
    %v1291 = vand.u32 %v1290, 4294901760
    %v1292 = vsub.f32 %v1290, %v1291
    %v1293 = vand.u32 %v1292, 4294901760
    %1294 = vmatmul.f32.gmra.mxu0 %v1293
    %v1295 = vpop.f32.mrf.mxu0
    %v1296 = vadd.f32 0.0, %v1295
    %1297 = vdwg.mxu0
    %1298 = vmatpush.msra.mxu0 0.0
    %1299 = vmatpush.msra.mxu0 0.0
    %1300 = vmatpush.msra.mxu0 0.0
    %1301 = vmatpush.msra.mxu0 0.0
    %1302 = vmatpush.msra.mxu0 0.0
    %1303 = vmatpush.msra.mxu0 0.0
    %1304 = vmatpush.msra.mxu0 0.0
    %1305 = vmatpush.msra.mxu0 0.0
    %1306 = vmatpush.msra.mxu0 0.0
    %1307 = vmatpush.msra.mxu0 0.0
    %1308 = vmatpush.msra.mxu0 0.0
    %1309 = vmatpush.msra.mxu0 0.0
    %v1310 = vand.u32 %v1263, 4294901760
    %v1311 = vsub.f32 %v1263, %v1310
    %v1312 = vand.u32 %v1311, 4294901760
    %v1313 = vsub.f32 %v1311, %v1312
    %v1314 = vand.u32 %v1313, 4294901760
    %1315 = vmatpush.msra.mxu0 %v1314
    %v1316 = vand.u32 %v1260, 4294901760
    %v1317 = vsub.f32 %v1260, %v1316
    %v1318 = vand.u32 %v1317, 4294901760
    %v1319 = vsub.f32 %v1317, %v1318
    %v1320 = vand.u32 %v1319, 4294901760
    %1321 = vmatpush.msra.mxu0 %v1320
    %v1322 = vand.u32 %v1257, 4294901760
    %v1323 = vsub.f32 %v1257, %v1322
    %v1324 = vand.u32 %v1323, 4294901760
    %v1325 = vsub.f32 %v1323, %v1324
    %v1326 = vand.u32 %v1325, 4294901760
    %1327 = vmatpush.msra.mxu0 %v1326
    %v1328 = vand.u32 %v1254, 4294901760
    %v1329 = vsub.f32 %v1254, %v1328
    %v1330 = vand.u32 %v1329, 4294901760
    %v1331 = vsub.f32 %v1329, %v1330
    %v1332 = vand.u32 %v1331, 4294901760
    %1333 = vmatpush.msra.mxu0 %v1332
    %v1334 = vand.u32 %v1267, 4294901760
    %1335 = vmatmul.f32.gmra.mxu0 %v1334
    %v1336 = vpop.f32.mrf.mxu0
    %v1337 = vadd.f32 %v1296, %v1336
    %1338 = vdwg.mxu0
    %1339 = vmatpush.msra.mxu0 0.0
    %1340 = vmatpush.msra.mxu0 0.0
    %1341 = vmatpush.msra.mxu0 0.0
    %1342 = vmatpush.msra.mxu0 0.0
    %1343 = vmatpush.msra.mxu0 0.0
    %1344 = vmatpush.msra.mxu0 0.0
    %1345 = vmatpush.msra.mxu0 0.0
    %1346 = vmatpush.msra.mxu0 0.0
    %1347 = vmatpush.msra.mxu0 0.0
    %1348 = vmatpush.msra.mxu0 0.0
    %1349 = vmatpush.msra.mxu0 0.0
    %1350 = vmatpush.msra.mxu0 0.0
    %v1351 = vand.u32 %v1263, 4294901760
    %v1352 = vsub.f32 %v1263, %v1351
    %1353 = vmatpush.msra.mxu0 %v1352
    %v1354 = vand.u32 %v1260, 4294901760
    %v1355 = vsub.f32 %v1260, %v1354
    %1356 = vmatpush.msra.mxu0 %v1355
    %v1357 = vand.u32 %v1257, 4294901760
    %v1358 = vsub.f32 %v1257, %v1357
    %1359 = vmatpush.msra.mxu0 %v1358
    %v1360 = vand.u32 %v1254, 4294901760
    %v1361 = vsub.f32 %v1254, %v1360
    %1362 = vmatpush.msra.mxu0 %v1361
    %v1363 = vand.u32 %v1267, 4294901760
    %v1364 = vsub.f32 %v1267, %v1363
    %1365 = vmatmul.f32.gmra.mxu0 %v1364
    %v1366 = vpop.f32.mrf.mxu0
    %v1367 = vadd.f32 %v1337, %v1366
    %1368 = vdwg.mxu0
    %1369 = vmatpush.msra.mxu0 0.0
    %1370 = vmatpush.msra.mxu0 0.0
    %1371 = vmatpush.msra.mxu0 0.0
    %1372 = vmatpush.msra.mxu0 0.0
    %1373 = vmatpush.msra.mxu0 0.0
    %1374 = vmatpush.msra.mxu0 0.0
    %1375 = vmatpush.msra.mxu0 0.0
    %1376 = vmatpush.msra.mxu0 0.0
    %1377 = vmatpush.msra.mxu0 0.0
    %1378 = vmatpush.msra.mxu0 0.0
    %1379 = vmatpush.msra.mxu0 0.0
    %1380 = vmatpush.msra.mxu0 0.0
    %v1381 = vand.u32 %v1263, 4294901760
    %1382 = vmatpush.msra.mxu0 %v1381
    %v1383 = vand.u32 %v1260, 4294901760
    %1384 = vmatpush.msra.mxu0 %v1383
    %v1385 = vand.u32 %v1257, 4294901760
    %1386 = vmatpush.msra.mxu0 %v1385
    %v1387 = vand.u32 %v1254, 4294901760
    %1388 = vmatpush.msra.mxu0 %v1387
    %v1389 = vand.u32 %v1267, 4294901760
    %v1390 = vsub.f32 %v1267, %v1389
    %v1391 = vand.u32 %v1390, 4294901760
    %1392 = vmatmul.f32.gmra.mxu0 %v1391
    %v1393 = vpop.f32.mrf.mxu0
    %v1394 = vadd.f32 %v1367, %v1393
    %1395 = vdwg.mxu0
    %1396 = vmatpush.msra.mxu0 0.0
    %1397 = vmatpush.msra.mxu0 0.0
    %1398 = vmatpush.msra.mxu0 0.0
    %1399 = vmatpush.msra.mxu0 0.0
    %1400 = vmatpush.msra.mxu0 0.0
    %1401 = vmatpush.msra.mxu0 0.0
    %1402 = vmatpush.msra.mxu0 0.0
    %1403 = vmatpush.msra.mxu0 0.0
    %1404 = vmatpush.msra.mxu0 0.0
    %1405 = vmatpush.msra.mxu0 0.0
    %1406 = vmatpush.msra.mxu0 0.0
    %1407 = vmatpush.msra.mxu0 0.0
    %v1408 = vand.u32 %v1263, 4294901760
    %v1409 = vsub.f32 %v1263, %v1408
    %v1410 = vand.u32 %v1409, 4294901760
    %1411 = vmatpush.msra.mxu0 %v1410
    %v1412 = vand.u32 %v1260, 4294901760
    %v1413 = vsub.f32 %v1260, %v1412
    %v1414 = vand.u32 %v1413, 4294901760
    %1415 = vmatpush.msra.mxu0 %v1414
    %v1416 = vand.u32 %v1257, 4294901760
    %v1417 = vsub.f32 %v1257, %v1416
    %v1418 = vand.u32 %v1417, 4294901760
    %1419 = vmatpush.msra.mxu0 %v1418
    %v1420 = vand.u32 %v1254, 4294901760
    %v1421 = vsub.f32 %v1254, %v1420
    %v1422 = vand.u32 %v1421, 4294901760
    %1423 = vmatpush.msra.mxu0 %v1422
    %v1424 = vand.u32 %v1267, 4294901760
    %1425 = vmatmul.f32.gmra.mxu0 %v1424
    %v1426 = vpop.f32.mrf.mxu0
    %v1427 = vadd.f32 %v1394, %v1426
    %1428 = vdwg.mxu0
    %1429 = vmatpush.msra.mxu0 0.0
    %1430 = vmatpush.msra.mxu0 0.0
    %1431 = vmatpush.msra.mxu0 0.0
    %1432 = vmatpush.msra.mxu0 0.0
    %1433 = vmatpush.msra.mxu0 0.0
    %1434 = vmatpush.msra.mxu0 0.0
    %1435 = vmatpush.msra.mxu0 0.0
    %1436 = vmatpush.msra.mxu0 0.0
    %1437 = vmatpush.msra.mxu0 0.0
    %1438 = vmatpush.msra.mxu0 0.0
    %1439 = vmatpush.msra.mxu0 0.0
    %1440 = vmatpush.msra.mxu0 0.0
    %v1441 = vand.u32 %v1263, 4294901760
    %1442 = vmatpush.msra.mxu0 %v1441
    %v1443 = vand.u32 %v1260, 4294901760
    %1444 = vmatpush.msra.mxu0 %v1443
    %v1445 = vand.u32 %v1257, 4294901760
    %1446 = vmatpush.msra.mxu0 %v1445
    %v1447 = vand.u32 %v1254, 4294901760
    %1448 = vmatpush.msra.mxu0 %v1447
    %v1449 = vand.u32 %v1267, 4294901760
    %1450 = vmatmul.f32.gmra.mxu0 %v1449
    %v1451 = vpop.f32.mrf.mxu0
    %v1452 = vadd.f32 %v1427, %v1451
    %1453 = vdwg.mxu0
    %1454 = vmatpush.msra.mxu0 0.0
    %1455 = vmatpush.msra.mxu0 0.0
    %1456 = vmatpush.msra.mxu0 0.0
    %1457 = vmatpush.msra.mxu0 0.0
    %1458 = vmatpush.msra.mxu0 0.0
    %1459 = vmatpush.msra.mxu0 0.0
    %1460 = vmatpush.msra.mxu0 0.0
    %1461 = vmatpush.msra.mxu0 0.0
    %1462 = vmatpush.msra.mxu0 0.0
    %1463 = vmatpush.msra.mxu0 0.0
    %1464 = vmatpush.msra.mxu0 0.0
    %1465 = vmatpush.msra.mxu0 0.0
    %v1466 = vand.u32 %v1264, 4294901760
    %1467 = vmatpush.msra.mxu0 %v1466
    %v1468 = vand.u32 %v1261, 4294901760
    %1469 = vmatpush.msra.mxu0 %v1468
    %v1470 = vand.u32 %v1258, 4294901760
    %1471 = vmatpush.msra.mxu0 %v1470
    %v1472 = vand.u32 %v1255, 4294901760
    %1473 = vmatpush.msra.mxu0 %v1472
    %v1474 = vand.u32 %v1267, 4294901760
    %v1475 = vsub.f32 %v1267, %v1474
    %v1476 = vand.u32 %v1475, 4294901760
    %v1477 = vsub.f32 %v1475, %v1476
    %v1478 = vand.u32 %v1477, 4294901760
    %1479 = vmatmul.f32.gmra.mxu0 %v1478
    %v1480 = vpop.f32.mrf.mxu0
    %v1481 = vadd.f32 0.0, %v1480
    %1482 = vdwg.mxu0
    %1483 = vmatpush.msra.mxu0 0.0
    %1484 = vmatpush.msra.mxu0 0.0
    %1485 = vmatpush.msra.mxu0 0.0
    %1486 = vmatpush.msra.mxu0 0.0
    %1487 = vmatpush.msra.mxu0 0.0
    %1488 = vmatpush.msra.mxu0 0.0
    %1489 = vmatpush.msra.mxu0 0.0
    %1490 = vmatpush.msra.mxu0 0.0
    %1491 = vmatpush.msra.mxu0 0.0
    %1492 = vmatpush.msra.mxu0 0.0
    %1493 = vmatpush.msra.mxu0 0.0
    %1494 = vmatpush.msra.mxu0 0.0
    %v1495 = vand.u32 %v1264, 4294901760
    %v1496 = vsub.f32 %v1264, %v1495
    %v1497 = vand.u32 %v1496, 4294901760
    %v1498 = vsub.f32 %v1496, %v1497
    %v1499 = vand.u32 %v1498, 4294901760
    %1500 = vmatpush.msra.mxu0 %v1499
    %v1501 = vand.u32 %v1261, 4294901760
    %v1502 = vsub.f32 %v1261, %v1501
    %v1503 = vand.u32 %v1502, 4294901760
    %v1504 = vsub.f32 %v1502, %v1503
    %v1505 = vand.u32 %v1504, 4294901760
    %1506 = vmatpush.msra.mxu0 %v1505
    %v1507 = vand.u32 %v1258, 4294901760
    %v1508 = vsub.f32 %v1258, %v1507
    %v1509 = vand.u32 %v1508, 4294901760
    %v1510 = vsub.f32 %v1508, %v1509
    %v1511 = vand.u32 %v1510, 4294901760
    %1512 = vmatpush.msra.mxu0 %v1511
    %v1513 = vand.u32 %v1255, 4294901760
    %v1514 = vsub.f32 %v1255, %v1513
    %v1515 = vand.u32 %v1514, 4294901760
    %v1516 = vsub.f32 %v1514, %v1515
    %v1517 = vand.u32 %v1516, 4294901760
    %1518 = vmatpush.msra.mxu0 %v1517
    %v1519 = vand.u32 %v1267, 4294901760
    %1520 = vmatmul.f32.gmra.mxu0 %v1519
    %v1521 = vpop.f32.mrf.mxu0
    %v1522 = vadd.f32 %v1481, %v1521
    %1523 = vdwg.mxu0
    %1524 = vmatpush.msra.mxu0 0.0
    %1525 = vmatpush.msra.mxu0 0.0
    %1526 = vmatpush.msra.mxu0 0.0
    %1527 = vmatpush.msra.mxu0 0.0
    %1528 = vmatpush.msra.mxu0 0.0
    %1529 = vmatpush.msra.mxu0 0.0
    %1530 = vmatpush.msra.mxu0 0.0
    %1531 = vmatpush.msra.mxu0 0.0
    %1532 = vmatpush.msra.mxu0 0.0
    %1533 = vmatpush.msra.mxu0 0.0
    %1534 = vmatpush.msra.mxu0 0.0
    %1535 = vmatpush.msra.mxu0 0.0
    %v1536 = vand.u32 %v1264, 4294901760
    %v1537 = vsub.f32 %v1264, %v1536
    %1538 = vmatpush.msra.mxu0 %v1537
    %v1539 = vand.u32 %v1261, 4294901760
    %v1540 = vsub.f32 %v1261, %v1539
    %1541 = vmatpush.msra.mxu0 %v1540
    %v1542 = vand.u32 %v1258, 4294901760
    %v1543 = vsub.f32 %v1258, %v1542
    %1544 = vmatpush.msra.mxu0 %v1543
    %v1545 = vand.u32 %v1255, 4294901760
    %v1546 = vsub.f32 %v1255, %v1545
    %1547 = vmatpush.msra.mxu0 %v1546
    %v1548 = vand.u32 %v1267, 4294901760
    %v1549 = vsub.f32 %v1267, %v1548
    %1550 = vmatmul.f32.gmra.mxu0 %v1549
    %v1551 = vpop.f32.mrf.mxu0
    %v1552 = vadd.f32 %v1522, %v1551
    %1553 = vdwg.mxu0
    %1554 = vmatpush.msra.mxu0 0.0
    %1555 = vmatpush.msra.mxu0 0.0
    %1556 = vmatpush.msra.mxu0 0.0
    %1557 = vmatpush.msra.mxu0 0.0
    %1558 = vmatpush.msra.mxu0 0.0
    %1559 = vmatpush.msra.mxu0 0.0
    %1560 = vmatpush.msra.mxu0 0.0
    %1561 = vmatpush.msra.mxu0 0.0
    %1562 = vmatpush.msra.mxu0 0.0
    %1563 = vmatpush.msra.mxu0 0.0
    %1564 = vmatpush.msra.mxu0 0.0
    %1565 = vmatpush.msra.mxu0 0.0
    %v1566 = vand.u32 %v1264, 4294901760
    %1567 = vmatpush.msra.mxu0 %v1566
    %v1568 = vand.u32 %v1261, 4294901760
    %1569 = vmatpush.msra.mxu0 %v1568
    %v1570 = vand.u32 %v1258, 4294901760
    %1571 = vmatpush.msra.mxu0 %v1570
    %v1572 = vand.u32 %v1255, 4294901760
    %1573 = vmatpush.msra.mxu0 %v1572
    %v1574 = vand.u32 %v1267, 4294901760
    %v1575 = vsub.f32 %v1267, %v1574
    %v1576 = vand.u32 %v1575, 4294901760
    %1577 = vmatmul.f32.gmra.mxu0 %v1576
    %v1578 = vpop.f32.mrf.mxu0
    %v1579 = vadd.f32 %v1552, %v1578
    %1580 = vdwg.mxu0
    %1581 = vmatpush.msra.mxu0 0.0
    %1582 = vmatpush.msra.mxu0 0.0
    %1583 = vmatpush.msra.mxu0 0.0
    %1584 = vmatpush.msra.mxu0 0.0
    %1585 = vmatpush.msra.mxu0 0.0
    %1586 = vmatpush.msra.mxu0 0.0
    %1587 = vmatpush.msra.mxu0 0.0
    %1588 = vmatpush.msra.mxu0 0.0
    %1589 = vmatpush.msra.mxu0 0.0
    %1590 = vmatpush.msra.mxu0 0.0
    %1591 = vmatpush.msra.mxu0 0.0
    %1592 = vmatpush.msra.mxu0 0.0
    %v1593 = vand.u32 %v1264, 4294901760
    %v1594 = vsub.f32 %v1264, %v1593
    %v1595 = vand.u32 %v1594, 4294901760
    %1596 = vmatpush.msra.mxu0 %v1595
    %v1597 = vand.u32 %v1261, 4294901760
    %v1598 = vsub.f32 %v1261, %v1597
    %v1599 = vand.u32 %v1598, 4294901760
    %1600 = vmatpush.msra.mxu0 %v1599
    %v1601 = vand.u32 %v1258, 4294901760
    %v1602 = vsub.f32 %v1258, %v1601
    %v1603 = vand.u32 %v1602, 4294901760
    %1604 = vmatpush.msra.mxu0 %v1603
    %v1605 = vand.u32 %v1255, 4294901760
    %v1606 = vsub.f32 %v1255, %v1605
    %v1607 = vand.u32 %v1606, 4294901760
    %1608 = vmatpush.msra.mxu0 %v1607
    %v1609 = vand.u32 %v1267, 4294901760
    %1610 = vmatmul.f32.gmra.mxu0 %v1609
    %v1611 = vpop.f32.mrf.mxu0
    %v1612 = vadd.f32 %v1579, %v1611
    %1613 = vdwg.mxu0
    %1614 = vmatpush.msra.mxu0 0.0
    %1615 = vmatpush.msra.mxu0 0.0
    %1616 = vmatpush.msra.mxu0 0.0
    %1617 = vmatpush.msra.mxu0 0.0
    %1618 = vmatpush.msra.mxu0 0.0
    %1619 = vmatpush.msra.mxu0 0.0
    %1620 = vmatpush.msra.mxu0 0.0
    %1621 = vmatpush.msra.mxu0 0.0
    %1622 = vmatpush.msra.mxu0 0.0
    %1623 = vmatpush.msra.mxu0 0.0
    %1624 = vmatpush.msra.mxu0 0.0
    %1625 = vmatpush.msra.mxu0 0.0
    %v1626 = vand.u32 %v1264, 4294901760
    %1627 = vmatpush.msra.mxu0 %v1626
    %v1628 = vand.u32 %v1261, 4294901760
    %1629 = vmatpush.msra.mxu0 %v1628
    %v1630 = vand.u32 %v1258, 4294901760
    %1631 = vmatpush.msra.mxu0 %v1630
    %v1632 = vand.u32 %v1255, 4294901760
    %1633 = vmatpush.msra.mxu0 %v1632
    %v1634 = vand.u32 %v1267, 4294901760
    %1635 = vmatmul.f32.gmra.mxu0 %v1634
    %v1636 = vpop.f32.mrf.mxu0
    %v1637 = vadd.f32 %v1612, %v1636
    %1638 = vdwg.mxu0
    %1639 = vmatpush.msra.mxu0 0.0
    %1640 = vmatpush.msra.mxu0 0.0
    %1641 = vmatpush.msra.mxu0 0.0
    %1642 = vmatpush.msra.mxu0 0.0
    %1643 = vmatpush.msra.mxu0 0.0
    %1644 = vmatpush.msra.mxu0 0.0
    %1645 = vmatpush.msra.mxu0 0.0
    %1646 = vmatpush.msra.mxu0 0.0
    %1647 = vmatpush.msra.mxu0 0.0
    %1648 = vmatpush.msra.mxu0 0.0
    %1649 = vmatpush.msra.mxu0 0.0
    %1650 = vmatpush.msra.mxu0 0.0
    %v1651 = vand.u32 %v1265, 4294901760
    %1652 = vmatpush.msra.mxu0 %v1651
    %v1653 = vand.u32 %v1262, 4294901760
    %1654 = vmatpush.msra.mxu0 %v1653
    %v1655 = vand.u32 %v1259, 4294901760
    %1656 = vmatpush.msra.mxu0 %v1655
    %v1657 = vand.u32 %v1256, 4294901760
    %1658 = vmatpush.msra.mxu0 %v1657
    %v1659 = vand.u32 %v1267, 4294901760
    %v1660 = vsub.f32 %v1267, %v1659
    %v1661 = vand.u32 %v1660, 4294901760
    %v1662 = vsub.f32 %v1660, %v1661
    %v1663 = vand.u32 %v1662, 4294901760
    %1664 = vmatmul.f32.gmra.mxu0 %v1663
    %v1665 = vpop.f32.mrf.mxu0
    %v1666 = vadd.f32 0.0, %v1665
    %1667 = vdwg.mxu0
    %1668 = vmatpush.msra.mxu0 0.0
    %1669 = vmatpush.msra.mxu0 0.0
    %1670 = vmatpush.msra.mxu0 0.0
    %1671 = vmatpush.msra.mxu0 0.0
    %1672 = vmatpush.msra.mxu0 0.0
    %1673 = vmatpush.msra.mxu0 0.0
    %1674 = vmatpush.msra.mxu0 0.0
    %1675 = vmatpush.msra.mxu0 0.0
    %1676 = vmatpush.msra.mxu0 0.0
    %1677 = vmatpush.msra.mxu0 0.0
    %1678 = vmatpush.msra.mxu0 0.0
    %1679 = vmatpush.msra.mxu0 0.0
    %v1680 = vand.u32 %v1265, 4294901760
    %v1681 = vsub.f32 %v1265, %v1680
    %v1682 = vand.u32 %v1681, 4294901760
    %v1683 = vsub.f32 %v1681, %v1682
    %v1684 = vand.u32 %v1683, 4294901760
    %1685 = vmatpush.msra.mxu0 %v1684
    %v1686 = vand.u32 %v1262, 4294901760
    %v1687 = vsub.f32 %v1262, %v1686
    %v1688 = vand.u32 %v1687, 4294901760
    %v1689 = vsub.f32 %v1687, %v1688
    %v1690 = vand.u32 %v1689, 4294901760
    %1691 = vmatpush.msra.mxu0 %v1690
    %v1692 = vand.u32 %v1259, 4294901760
    %v1693 = vsub.f32 %v1259, %v1692
    %v1694 = vand.u32 %v1693, 4294901760
    %v1695 = vsub.f32 %v1693, %v1694
    %v1696 = vand.u32 %v1695, 4294901760
    %1697 = vmatpush.msra.mxu0 %v1696
    %v1698 = vand.u32 %v1256, 4294901760
    %v1699 = vsub.f32 %v1256, %v1698
    %v1700 = vand.u32 %v1699, 4294901760
    %v1701 = vsub.f32 %v1699, %v1700
    %v1702 = vand.u32 %v1701, 4294901760
    %1703 = vmatpush.msra.mxu0 %v1702
    %v1704 = vand.u32 %v1267, 4294901760
    %1705 = vmatmul.f32.gmra.mxu0 %v1704
    %v1706 = vpop.f32.mrf.mxu0
    %v1707 = vadd.f32 %v1666, %v1706
    %1708 = vdwg.mxu0
    %1709 = vmatpush.msra.mxu0 0.0
    %1710 = vmatpush.msra.mxu0 0.0
    %1711 = vmatpush.msra.mxu0 0.0
    %1712 = vmatpush.msra.mxu0 0.0
    %1713 = vmatpush.msra.mxu0 0.0
    %1714 = vmatpush.msra.mxu0 0.0
    %1715 = vmatpush.msra.mxu0 0.0
    %1716 = vmatpush.msra.mxu0 0.0
    %1717 = vmatpush.msra.mxu0 0.0
    %1718 = vmatpush.msra.mxu0 0.0
    %1719 = vmatpush.msra.mxu0 0.0
    %1720 = vmatpush.msra.mxu0 0.0
    %v1721 = vand.u32 %v1265, 4294901760
    %v1722 = vsub.f32 %v1265, %v1721
    %1723 = vmatpush.msra.mxu0 %v1722
    %v1724 = vand.u32 %v1262, 4294901760
    %v1725 = vsub.f32 %v1262, %v1724
    %1726 = vmatpush.msra.mxu0 %v1725
    %v1727 = vand.u32 %v1259, 4294901760
    %v1728 = vsub.f32 %v1259, %v1727
    %1729 = vmatpush.msra.mxu0 %v1728
    %v1730 = vand.u32 %v1256, 4294901760
    %v1731 = vsub.f32 %v1256, %v1730
    %1732 = vmatpush.msra.mxu0 %v1731
    %v1733 = vand.u32 %v1267, 4294901760
    %v1734 = vsub.f32 %v1267, %v1733
    %1735 = vmatmul.f32.gmra.mxu0 %v1734
    %v1736 = vpop.f32.mrf.mxu0
    %v1737 = vadd.f32 %v1707, %v1736
    %1738 = vdwg.mxu0
    %1739 = vmatpush.msra.mxu0 0.0
    %1740 = vmatpush.msra.mxu0 0.0
    %1741 = vmatpush.msra.mxu0 0.0
    %1742 = vmatpush.msra.mxu0 0.0
    %1743 = vmatpush.msra.mxu0 0.0
    %1744 = vmatpush.msra.mxu0 0.0
    %1745 = vmatpush.msra.mxu0 0.0
    %1746 = vmatpush.msra.mxu0 0.0
    %1747 = vmatpush.msra.mxu0 0.0
    %1748 = vmatpush.msra.mxu0 0.0
    %1749 = vmatpush.msra.mxu0 0.0
    %1750 = vmatpush.msra.mxu0 0.0
    %v1751 = vand.u32 %v1265, 4294901760
    %1752 = vmatpush.msra.mxu0 %v1751
    %v1753 = vand.u32 %v1262, 4294901760
    %1754 = vmatpush.msra.mxu0 %v1753
    %v1755 = vand.u32 %v1259, 4294901760
    %1756 = vmatpush.msra.mxu0 %v1755
    %v1757 = vand.u32 %v1256, 4294901760
    %1758 = vmatpush.msra.mxu0 %v1757
    %v1759 = vand.u32 %v1267, 4294901760
    %v1760 = vsub.f32 %v1267, %v1759
    %v1761 = vand.u32 %v1760, 4294901760
    %1762 = vmatmul.f32.gmra.mxu0 %v1761
    %v1763 = vpop.f32.mrf.mxu0
    %v1764 = vadd.f32 %v1737, %v1763
    %1765 = vdwg.mxu0
    %1766 = vmatpush.msra.mxu0 0.0
    %1767 = vmatpush.msra.mxu0 0.0
    %1768 = vmatpush.msra.mxu0 0.0
    %1769 = vmatpush.msra.mxu0 0.0
    %1770 = vmatpush.msra.mxu0 0.0
    %1771 = vmatpush.msra.mxu0 0.0
    %1772 = vmatpush.msra.mxu0 0.0
    %1773 = vmatpush.msra.mxu0 0.0
    %1774 = vmatpush.msra.mxu0 0.0
    %1775 = vmatpush.msra.mxu0 0.0
    %1776 = vmatpush.msra.mxu0 0.0
    %1777 = vmatpush.msra.mxu0 0.0
    %v1778 = vand.u32 %v1265, 4294901760
    %v1779 = vsub.f32 %v1265, %v1778
    %v1780 = vand.u32 %v1779, 4294901760
    %1781 = vmatpush.msra.mxu0 %v1780
    %v1782 = vand.u32 %v1262, 4294901760
    %v1783 = vsub.f32 %v1262, %v1782
    %v1784 = vand.u32 %v1783, 4294901760
    %1785 = vmatpush.msra.mxu0 %v1784
    %v1786 = vand.u32 %v1259, 4294901760
    %v1787 = vsub.f32 %v1259, %v1786
    %v1788 = vand.u32 %v1787, 4294901760
    %1789 = vmatpush.msra.mxu0 %v1788
    %v1790 = vand.u32 %v1256, 4294901760
    %v1791 = vsub.f32 %v1256, %v1790
    %v1792 = vand.u32 %v1791, 4294901760
    %1793 = vmatpush.msra.mxu0 %v1792
    %v1794 = vand.u32 %v1267, 4294901760
    %1795 = vmatmul.f32.gmra.mxu0 %v1794
    %v1796 = vpop.f32.mrf.mxu0
    %v1797 = vadd.f32 %v1764, %v1796
    %1798 = vdwg.mxu0
    %1799 = vmatpush.msra.mxu0 0.0
    %1800 = vmatpush.msra.mxu0 0.0
    %1801 = vmatpush.msra.mxu0 0.0
    %1802 = vmatpush.msra.mxu0 0.0
    %1803 = vmatpush.msra.mxu0 0.0
    %1804 = vmatpush.msra.mxu0 0.0
    %1805 = vmatpush.msra.mxu0 0.0
    %1806 = vmatpush.msra.mxu0 0.0
    %1807 = vmatpush.msra.mxu0 0.0
    %1808 = vmatpush.msra.mxu0 0.0
    %1809 = vmatpush.msra.mxu0 0.0
    %1810 = vmatpush.msra.mxu0 0.0
    %v1811 = vand.u32 %v1265, 4294901760
    %1812 = vmatpush.msra.mxu0 %v1811
    %v1813 = vand.u32 %v1262, 4294901760
    %1814 = vmatpush.msra.mxu0 %v1813
    %v1815 = vand.u32 %v1259, 4294901760
    %1816 = vmatpush.msra.mxu0 %v1815
    %v1817 = vand.u32 %v1256, 4294901760
    %1818 = vmatpush.msra.mxu0 %v1817
    %v1819 = vand.u32 %v1267, 4294901760
    %1820 = vmatmul.f32.gmra.mxu0 %v1819
    %v1821 = vpop.f32.mrf.mxu0
    %v1822 = vadd.f32 %v1797, %v1821
    %1823 = vdwg.mxu0
    %v1824 = vadd.f32 %v881, %v1452
    %v1825 = vadd.f32 %v1066, %v1637
    %v1826 = vadd.f32 %v1251, %v1822
    %v1827 = vld [vmem:[#allocation7] sm:$0xff]
    %v1828 = vld [vmem:[#allocation9 + $0x120] sm:$0xff]
    %v1829 = vld [vmem:[#allocation9 + $0x128] sm:$0xff]
    %v1830 = vld [vmem:[#allocation9 + $0x130] sm:$0xff]
    %v1831 = vld [vmem:[#allocation9 + $0x138] sm:$0xff]
    %v1832 = vld [vmem:[#allocation9 + $0x140] sm:$0xff]
    %v1833 = vld [vmem:[#allocation9 + $0x148] sm:$0xff]
    %v1834 = vld [vmem:[#allocation9 + $0x150] sm:$0xff]
    %v1835 = vld [vmem:[#allocation9 + $0x158] sm:$0xff]
    %v1836 = vld [vmem:[#allocation9 + $0x160] sm:$0xff]
    %v1837 = vld [vmem:[#allocation9 + $0x168] sm:$0xff]
    %v1838 = vld [vmem:[#allocation9 + $0x170] sm:$0xff]
    %v1839 = vld [vmem:[#allocation9 + $0x178] sm:$0xff]
    %v1841 = vsel %vm136, %v1827, 0
    %1843 = vmatpush.msra.mxu0 0.0
    %1844 = vmatpush.msra.mxu0 0.0
    %1845 = vmatpush.msra.mxu0 0.0
    %1846 = vmatpush.msra.mxu0 0.0
    %1847 = vmatpush.msra.mxu0 0.0
    %1848 = vmatpush.msra.mxu0 0.0
    %1849 = vmatpush.msra.mxu0 0.0
    %1850 = vmatpush.msra.mxu0 0.0
    %1851 = vmatpush.msra.mxu0 0.0
    %1852 = vmatpush.msra.mxu0 0.0
    %1853 = vmatpush.msra.mxu0 0.0
    %1854 = vmatpush.msra.mxu0 0.0
    %v1855 = vand.u32 %v1837, 4294901760
    %1856 = vmatpush.msra.mxu0 %v1855
    %v1857 = vand.u32 %v1834, 4294901760
    %1858 = vmatpush.msra.mxu0 %v1857
    %v1859 = vand.u32 %v1831, 4294901760
    %1860 = vmatpush.msra.mxu0 %v1859
    %v1861 = vand.u32 %v1828, 4294901760
    %1862 = vmatpush.msra.mxu0 %v1861
    %v1863 = vand.u32 %v1841, 4294901760
    %v1864 = vsub.f32 %v1841, %v1863
    %v1865 = vand.u32 %v1864, 4294901760
    %v1866 = vsub.f32 %v1864, %v1865
    %v1867 = vand.u32 %v1866, 4294901760
    %1868 = vmatmul.f32.gmra.mxu0 %v1867
    %v1869 = vpop.f32.mrf.mxu0
    %v1870 = vadd.f32 0.0, %v1869
    %1871 = vdwg.mxu0
    %1872 = vmatpush.msra.mxu0 0.0
    %1873 = vmatpush.msra.mxu0 0.0
    %1874 = vmatpush.msra.mxu0 0.0
    %1875 = vmatpush.msra.mxu0 0.0
    %1876 = vmatpush.msra.mxu0 0.0
    %1877 = vmatpush.msra.mxu0 0.0
    %1878 = vmatpush.msra.mxu0 0.0
    %1879 = vmatpush.msra.mxu0 0.0
    %1880 = vmatpush.msra.mxu0 0.0
    %1881 = vmatpush.msra.mxu0 0.0
    %1882 = vmatpush.msra.mxu0 0.0
    %1883 = vmatpush.msra.mxu0 0.0
    %v1884 = vand.u32 %v1837, 4294901760
    %v1885 = vsub.f32 %v1837, %v1884
    %v1886 = vand.u32 %v1885, 4294901760
    %v1887 = vsub.f32 %v1885, %v1886
    %v1888 = vand.u32 %v1887, 4294901760
    %1889 = vmatpush.msra.mxu0 %v1888
    %v1890 = vand.u32 %v1834, 4294901760
    %v1891 = vsub.f32 %v1834, %v1890
    %v1892 = vand.u32 %v1891, 4294901760
    %v1893 = vsub.f32 %v1891, %v1892
    %v1894 = vand.u32 %v1893, 4294901760
    %1895 = vmatpush.msra.mxu0 %v1894
    %v1896 = vand.u32 %v1831, 4294901760
    %v1897 = vsub.f32 %v1831, %v1896
    %v1898 = vand.u32 %v1897, 4294901760
    %v1899 = vsub.f32 %v1897, %v1898
    %v1900 = vand.u32 %v1899, 4294901760
    %1901 = vmatpush.msra.mxu0 %v1900
    %v1902 = vand.u32 %v1828, 4294901760
    %v1903 = vsub.f32 %v1828, %v1902
    %v1904 = vand.u32 %v1903, 4294901760
    %v1905 = vsub.f32 %v1903, %v1904
    %v1906 = vand.u32 %v1905, 4294901760
    %1907 = vmatpush.msra.mxu0 %v1906
    %v1908 = vand.u32 %v1841, 4294901760
    %1909 = vmatmul.f32.gmra.mxu0 %v1908
    %v1910 = vpop.f32.mrf.mxu0
    %v1911 = vadd.f32 %v1870, %v1910
    %1912 = vdwg.mxu0
    %1913 = vmatpush.msra.mxu0 0.0
    %1914 = vmatpush.msra.mxu0 0.0
    %1915 = vmatpush.msra.mxu0 0.0
    %1916 = vmatpush.msra.mxu0 0.0
    %1917 = vmatpush.msra.mxu0 0.0
    %1918 = vmatpush.msra.mxu0 0.0
    %1919 = vmatpush.msra.mxu0 0.0
    %1920 = vmatpush.msra.mxu0 0.0
    %1921 = vmatpush.msra.mxu0 0.0
    %1922 = vmatpush.msra.mxu0 0.0
    %1923 = vmatpush.msra.mxu0 0.0
    %1924 = vmatpush.msra.mxu0 0.0
    %v1925 = vand.u32 %v1837, 4294901760
    %v1926 = vsub.f32 %v1837, %v1925
    %1927 = vmatpush.msra.mxu0 %v1926
    %v1928 = vand.u32 %v1834, 4294901760
    %v1929 = vsub.f32 %v1834, %v1928
    %1930 = vmatpush.msra.mxu0 %v1929
    %v1931 = vand.u32 %v1831, 4294901760
    %v1932 = vsub.f32 %v1831, %v1931
    %1933 = vmatpush.msra.mxu0 %v1932
    %v1934 = vand.u32 %v1828, 4294901760
    %v1935 = vsub.f32 %v1828, %v1934
    %1936 = vmatpush.msra.mxu0 %v1935
    %v1937 = vand.u32 %v1841, 4294901760
    %v1938 = vsub.f32 %v1841, %v1937
    %1939 = vmatmul.f32.gmra.mxu0 %v1938
    %v1940 = vpop.f32.mrf.mxu0
    %v1941 = vadd.f32 %v1911, %v1940
    %1942 = vdwg.mxu0
    %1943 = vmatpush.msra.mxu0 0.0
    %1944 = vmatpush.msra.mxu0 0.0
    %1945 = vmatpush.msra.mxu0 0.0
    %1946 = vmatpush.msra.mxu0 0.0
    %1947 = vmatpush.msra.mxu0 0.0
    %1948 = vmatpush.msra.mxu0 0.0
    %1949 = vmatpush.msra.mxu0 0.0
    %1950 = vmatpush.msra.mxu0 0.0
    %1951 = vmatpush.msra.mxu0 0.0
    %1952 = vmatpush.msra.mxu0 0.0
    %1953 = vmatpush.msra.mxu0 0.0
    %1954 = vmatpush.msra.mxu0 0.0
    %v1955 = vand.u32 %v1837, 4294901760
    %1956 = vmatpush.msra.mxu0 %v1955
    %v1957 = vand.u32 %v1834, 4294901760
    %1958 = vmatpush.msra.mxu0 %v1957
    %v1959 = vand.u32 %v1831, 4294901760
    %1960 = vmatpush.msra.mxu0 %v1959
    %v1961 = vand.u32 %v1828, 4294901760
    %1962 = vmatpush.msra.mxu0 %v1961
    %v1963 = vand.u32 %v1841, 4294901760
    %v1964 = vsub.f32 %v1841, %v1963
    %v1965 = vand.u32 %v1964, 4294901760
    %1966 = vmatmul.f32.gmra.mxu0 %v1965
    %v1967 = vpop.f32.mrf.mxu0
    %v1968 = vadd.f32 %v1941, %v1967
    %1969 = vdwg.mxu0
    %1970 = vmatpush.msra.mxu0 0.0
    %1971 = vmatpush.msra.mxu0 0.0
    %1972 = vmatpush.msra.mxu0 0.0
    %1973 = vmatpush.msra.mxu0 0.0
    %1974 = vmatpush.msra.mxu0 0.0
    %1975 = vmatpush.msra.mxu0 0.0
    %1976 = vmatpush.msra.mxu0 0.0
    %1977 = vmatpush.msra.mxu0 0.0
    %1978 = vmatpush.msra.mxu0 0.0
    %1979 = vmatpush.msra.mxu0 0.0
    %1980 = vmatpush.msra.mxu0 0.0
    %1981 = vmatpush.msra.mxu0 0.0
    %v1982 = vand.u32 %v1837, 4294901760
    %v1983 = vsub.f32 %v1837, %v1982
    %v1984 = vand.u32 %v1983, 4294901760
    %1985 = vmatpush.msra.mxu0 %v1984
    %v1986 = vand.u32 %v1834, 4294901760
    %v1987 = vsub.f32 %v1834, %v1986
    %v1988 = vand.u32 %v1987, 4294901760
    %1989 = vmatpush.msra.mxu0 %v1988
    %v1990 = vand.u32 %v1831, 4294901760
    %v1991 = vsub.f32 %v1831, %v1990
    %v1992 = vand.u32 %v1991, 4294901760
    %1993 = vmatpush.msra.mxu0 %v1992
    %v1994 = vand.u32 %v1828, 4294901760
    %v1995 = vsub.f32 %v1828, %v1994
    %v1996 = vand.u32 %v1995, 4294901760
    %1997 = vmatpush.msra.mxu0 %v1996
    %v1998 = vand.u32 %v1841, 4294901760
    %1999 = vmatmul.f32.gmra.mxu0 %v1998
    %v2000 = vpop.f32.mrf.mxu0
    %v2001 = vadd.f32 %v1968, %v2000
    %2002 = vdwg.mxu0
    %2003 = vmatpush.msra.mxu0 0.0
    %2004 = vmatpush.msra.mxu0 0.0
    %2005 = vmatpush.msra.mxu0 0.0
    %2006 = vmatpush.msra.mxu0 0.0
    %2007 = vmatpush.msra.mxu0 0.0
    %2008 = vmatpush.msra.mxu0 0.0
    %2009 = vmatpush.msra.mxu0 0.0
    %2010 = vmatpush.msra.mxu0 0.0
    %2011 = vmatpush.msra.mxu0 0.0
    %2012 = vmatpush.msra.mxu0 0.0
    %2013 = vmatpush.msra.mxu0 0.0
    %2014 = vmatpush.msra.mxu0 0.0
    %v2015 = vand.u32 %v1837, 4294901760
    %2016 = vmatpush.msra.mxu0 %v2015
    %v2017 = vand.u32 %v1834, 4294901760
    %2018 = vmatpush.msra.mxu0 %v2017
    %v2019 = vand.u32 %v1831, 4294901760
    %2020 = vmatpush.msra.mxu0 %v2019
    %v2021 = vand.u32 %v1828, 4294901760
    %2022 = vmatpush.msra.mxu0 %v2021
    %v2023 = vand.u32 %v1841, 4294901760
    %2024 = vmatmul.f32.gmra.mxu0 %v2023
    %v2025 = vpop.f32.mrf.mxu0
    %v2026 = vadd.f32 %v2001, %v2025
    %2027 = vdwg.mxu0
    %2028 = vmatpush.msra.mxu0 0.0
    %2029 = vmatpush.msra.mxu0 0.0
    %2030 = vmatpush.msra.mxu0 0.0
    %2031 = vmatpush.msra.mxu0 0.0
    %2032 = vmatpush.msra.mxu0 0.0
    %2033 = vmatpush.msra.mxu0 0.0
    %2034 = vmatpush.msra.mxu0 0.0
    %2035 = vmatpush.msra.mxu0 0.0
    %2036 = vmatpush.msra.mxu0 0.0
    %2037 = vmatpush.msra.mxu0 0.0
    %2038 = vmatpush.msra.mxu0 0.0
    %2039 = vmatpush.msra.mxu0 0.0
    %v2040 = vand.u32 %v1838, 4294901760
    %2041 = vmatpush.msra.mxu0 %v2040
    %v2042 = vand.u32 %v1835, 4294901760
    %2043 = vmatpush.msra.mxu0 %v2042
    %v2044 = vand.u32 %v1832, 4294901760
    %2045 = vmatpush.msra.mxu0 %v2044
    %v2046 = vand.u32 %v1829, 4294901760
    %2047 = vmatpush.msra.mxu0 %v2046
    %v2048 = vand.u32 %v1841, 4294901760
    %v2049 = vsub.f32 %v1841, %v2048
    %v2050 = vand.u32 %v2049, 4294901760
    %v2051 = vsub.f32 %v2049, %v2050
    %v2052 = vand.u32 %v2051, 4294901760
    %2053 = vmatmul.f32.gmra.mxu0 %v2052
    %v2054 = vpop.f32.mrf.mxu0
    %v2055 = vadd.f32 0.0, %v2054
    %2056 = vdwg.mxu0
    %2057 = vmatpush.msra.mxu0 0.0
    %2058 = vmatpush.msra.mxu0 0.0
    %2059 = vmatpush.msra.mxu0 0.0
    %2060 = vmatpush.msra.mxu0 0.0
    %2061 = vmatpush.msra.mxu0 0.0
    %2062 = vmatpush.msra.mxu0 0.0
    %2063 = vmatpush.msra.mxu0 0.0
    %2064 = vmatpush.msra.mxu0 0.0
    %2065 = vmatpush.msra.mxu0 0.0
    %2066 = vmatpush.msra.mxu0 0.0
    %2067 = vmatpush.msra.mxu0 0.0
    %2068 = vmatpush.msra.mxu0 0.0
    %v2069 = vand.u32 %v1838, 4294901760
    %v2070 = vsub.f32 %v1838, %v2069
    %v2071 = vand.u32 %v2070, 4294901760
    %v2072 = vsub.f32 %v2070, %v2071
    %v2073 = vand.u32 %v2072, 4294901760
    %2074 = vmatpush.msra.mxu0 %v2073
    %v2075 = vand.u32 %v1835, 4294901760
    %v2076 = vsub.f32 %v1835, %v2075
    %v2077 = vand.u32 %v2076, 4294901760
    %v2078 = vsub.f32 %v2076, %v2077
    %v2079 = vand.u32 %v2078, 4294901760
    %2080 = vmatpush.msra.mxu0 %v2079
    %v2081 = vand.u32 %v1832, 4294901760
    %v2082 = vsub.f32 %v1832, %v2081
    %v2083 = vand.u32 %v2082, 4294901760
    %v2084 = vsub.f32 %v2082, %v2083
    %v2085 = vand.u32 %v2084, 4294901760
    %2086 = vmatpush.msra.mxu0 %v2085
    %v2087 = vand.u32 %v1829, 4294901760
    %v2088 = vsub.f32 %v1829, %v2087
    %v2089 = vand.u32 %v2088, 4294901760
    %v2090 = vsub.f32 %v2088, %v2089
    %v2091 = vand.u32 %v2090, 4294901760
    %2092 = vmatpush.msra.mxu0 %v2091
    %v2093 = vand.u32 %v1841, 4294901760
    %2094 = vmatmul.f32.gmra.mxu0 %v2093
    %v2095 = vpop.f32.mrf.mxu0
    %v2096 = vadd.f32 %v2055, %v2095
    %2097 = vdwg.mxu0
    %2098 = vmatpush.msra.mxu0 0.0
    %2099 = vmatpush.msra.mxu0 0.0
    %2100 = vmatpush.msra.mxu0 0.0
    %2101 = vmatpush.msra.mxu0 0.0
    %2102 = vmatpush.msra.mxu0 0.0
    %2103 = vmatpush.msra.mxu0 0.0
    %2104 = vmatpush.msra.mxu0 0.0
    %2105 = vmatpush.msra.mxu0 0.0
    %2106 = vmatpush.msra.mxu0 0.0
    %2107 = vmatpush.msra.mxu0 0.0
    %2108 = vmatpush.msra.mxu0 0.0
    %2109 = vmatpush.msra.mxu0 0.0
    %v2110 = vand.u32 %v1838, 4294901760
    %v2111 = vsub.f32 %v1838, %v2110
    %2112 = vmatpush.msra.mxu0 %v2111
    %v2113 = vand.u32 %v1835, 4294901760
    %v2114 = vsub.f32 %v1835, %v2113
    %2115 = vmatpush.msra.mxu0 %v2114
    %v2116 = vand.u32 %v1832, 4294901760
    %v2117 = vsub.f32 %v1832, %v2116
    %2118 = vmatpush.msra.mxu0 %v2117
    %v2119 = vand.u32 %v1829, 4294901760
    %v2120 = vsub.f32 %v1829, %v2119
    %2121 = vmatpush.msra.mxu0 %v2120
    %v2122 = vand.u32 %v1841, 4294901760
    %v2123 = vsub.f32 %v1841, %v2122
    %2124 = vmatmul.f32.gmra.mxu0 %v2123
    %v2125 = vpop.f32.mrf.mxu0
    %v2126 = vadd.f32 %v2096, %v2125
    %2127 = vdwg.mxu0
    %2128 = vmatpush.msra.mxu0 0.0
    %2129 = vmatpush.msra.mxu0 0.0
    %2130 = vmatpush.msra.mxu0 0.0
    %2131 = vmatpush.msra.mxu0 0.0
    %2132 = vmatpush.msra.mxu0 0.0
    %2133 = vmatpush.msra.mxu0 0.0
    %2134 = vmatpush.msra.mxu0 0.0
    %2135 = vmatpush.msra.mxu0 0.0
    %2136 = vmatpush.msra.mxu0 0.0
    %2137 = vmatpush.msra.mxu0 0.0
    %2138 = vmatpush.msra.mxu0 0.0
    %2139 = vmatpush.msra.mxu0 0.0
    %v2140 = vand.u32 %v1838, 4294901760
    %2141 = vmatpush.msra.mxu0 %v2140
    %v2142 = vand.u32 %v1835, 4294901760
    %2143 = vmatpush.msra.mxu0 %v2142
    %v2144 = vand.u32 %v1832, 4294901760
    %2145 = vmatpush.msra.mxu0 %v2144
    %v2146 = vand.u32 %v1829, 4294901760
    %2147 = vmatpush.msra.mxu0 %v2146
    %v2148 = vand.u32 %v1841, 4294901760
    %v2149 = vsub.f32 %v1841, %v2148
    %v2150 = vand.u32 %v2149, 4294901760
    %2151 = vmatmul.f32.gmra.mxu0 %v2150
    %v2152 = vpop.f32.mrf.mxu0
    %v2153 = vadd.f32 %v2126, %v2152
    %2154 = vdwg.mxu0
    %2155 = vmatpush.msra.mxu0 0.0
    %2156 = vmatpush.msra.mxu0 0.0
    %2157 = vmatpush.msra.mxu0 0.0
    %2158 = vmatpush.msra.mxu0 0.0
    %2159 = vmatpush.msra.mxu0 0.0
    %2160 = vmatpush.msra.mxu0 0.0
    %2161 = vmatpush.msra.mxu0 0.0
    %2162 = vmatpush.msra.mxu0 0.0
    %2163 = vmatpush.msra.mxu0 0.0
    %2164 = vmatpush.msra.mxu0 0.0
    %2165 = vmatpush.msra.mxu0 0.0
    %2166 = vmatpush.msra.mxu0 0.0
    %v2167 = vand.u32 %v1838, 4294901760
    %v2168 = vsub.f32 %v1838, %v2167
    %v2169 = vand.u32 %v2168, 4294901760
    %2170 = vmatpush.msra.mxu0 %v2169
    %v2171 = vand.u32 %v1835, 4294901760
    %v2172 = vsub.f32 %v1835, %v2171
    %v2173 = vand.u32 %v2172, 4294901760
    %2174 = vmatpush.msra.mxu0 %v2173
    %v2175 = vand.u32 %v1832, 4294901760
    %v2176 = vsub.f32 %v1832, %v2175
    %v2177 = vand.u32 %v2176, 4294901760
    %2178 = vmatpush.msra.mxu0 %v2177
    %v2179 = vand.u32 %v1829, 4294901760
    %v2180 = vsub.f32 %v1829, %v2179
    %v2181 = vand.u32 %v2180, 4294901760
    %2182 = vmatpush.msra.mxu0 %v2181
    %v2183 = vand.u32 %v1841, 4294901760
    %2184 = vmatmul.f32.gmra.mxu0 %v2183
    %v2185 = vpop.f32.mrf.mxu0
    %v2186 = vadd.f32 %v2153, %v2185
    %2187 = vdwg.mxu0
    %2188 = vmatpush.msra.mxu0 0.0
    %2189 = vmatpush.msra.mxu0 0.0
    %2190 = vmatpush.msra.mxu0 0.0
    %2191 = vmatpush.msra.mxu0 0.0
    %2192 = vmatpush.msra.mxu0 0.0
    %2193 = vmatpush.msra.mxu0 0.0
    %2194 = vmatpush.msra.mxu0 0.0
    %2195 = vmatpush.msra.mxu0 0.0
    %2196 = vmatpush.msra.mxu0 0.0
    %2197 = vmatpush.msra.mxu0 0.0
    %2198 = vmatpush.msra.mxu0 0.0
    %2199 = vmatpush.msra.mxu0 0.0
    %v2200 = vand.u32 %v1838, 4294901760
    %2201 = vmatpush.msra.mxu0 %v2200
    %v2202 = vand.u32 %v1835, 4294901760
    %2203 = vmatpush.msra.mxu0 %v2202
    %v2204 = vand.u32 %v1832, 4294901760
    %2205 = vmatpush.msra.mxu0 %v2204
    %v2206 = vand.u32 %v1829, 4294901760
    %2207 = vmatpush.msra.mxu0 %v2206
    %v2208 = vand.u32 %v1841, 4294901760
    %2209 = vmatmul.f32.gmra.mxu0 %v2208
    %v2210 = vpop.f32.mrf.mxu0
    %v2211 = vadd.f32 %v2186, %v2210
    %2212 = vdwg.mxu0
    %2213 = vmatpush.msra.mxu0 0.0
    %2214 = vmatpush.msra.mxu0 0.0
    %2215 = vmatpush.msra.mxu0 0.0
    %2216 = vmatpush.msra.mxu0 0.0
    %2217 = vmatpush.msra.mxu0 0.0
    %2218 = vmatpush.msra.mxu0 0.0
    %2219 = vmatpush.msra.mxu0 0.0
    %2220 = vmatpush.msra.mxu0 0.0
    %2221 = vmatpush.msra.mxu0 0.0
    %2222 = vmatpush.msra.mxu0 0.0
    %2223 = vmatpush.msra.mxu0 0.0
    %2224 = vmatpush.msra.mxu0 0.0
    %v2225 = vand.u32 %v1839, 4294901760
    %2226 = vmatpush.msra.mxu0 %v2225
    %v2227 = vand.u32 %v1836, 4294901760
    %2228 = vmatpush.msra.mxu0 %v2227
    %v2229 = vand.u32 %v1833, 4294901760
    %2230 = vmatpush.msra.mxu0 %v2229
    %v2231 = vand.u32 %v1830, 4294901760
    %2232 = vmatpush.msra.mxu0 %v2231
    %v2233 = vand.u32 %v1841, 4294901760
    %v2234 = vsub.f32 %v1841, %v2233
    %v2235 = vand.u32 %v2234, 4294901760
    %v2236 = vsub.f32 %v2234, %v2235
    %v2237 = vand.u32 %v2236, 4294901760
    %2238 = vmatmul.f32.gmra.mxu0 %v2237
    %v2239 = vpop.f32.mrf.mxu0
    %v2240 = vadd.f32 0.0, %v2239
    %2241 = vdwg.mxu0
    %2242 = vmatpush.msra.mxu0 0.0
    %2243 = vmatpush.msra.mxu0 0.0
    %2244 = vmatpush.msra.mxu0 0.0
    %2245 = vmatpush.msra.mxu0 0.0
    %2246 = vmatpush.msra.mxu0 0.0
    %2247 = vmatpush.msra.mxu0 0.0
    %2248 = vmatpush.msra.mxu0 0.0
    %2249 = vmatpush.msra.mxu0 0.0
    %2250 = vmatpush.msra.mxu0 0.0
    %2251 = vmatpush.msra.mxu0 0.0
    %2252 = vmatpush.msra.mxu0 0.0
    %2253 = vmatpush.msra.mxu0 0.0
    %v2254 = vand.u32 %v1839, 4294901760
    %v2255 = vsub.f32 %v1839, %v2254
    %v2256 = vand.u32 %v2255, 4294901760
    %v2257 = vsub.f32 %v2255, %v2256
    %v2258 = vand.u32 %v2257, 4294901760
    %2259 = vmatpush.msra.mxu0 %v2258
    %v2260 = vand.u32 %v1836, 4294901760
    %v2261 = vsub.f32 %v1836, %v2260
    %v2262 = vand.u32 %v2261, 4294901760
    %v2263 = vsub.f32 %v2261, %v2262
    %v2264 = vand.u32 %v2263, 4294901760
    %2265 = vmatpush.msra.mxu0 %v2264
    %v2266 = vand.u32 %v1833, 4294901760
    %v2267 = vsub.f32 %v1833, %v2266
    %v2268 = vand.u32 %v2267, 4294901760
    %v2269 = vsub.f32 %v2267, %v2268
    %v2270 = vand.u32 %v2269, 4294901760
    %2271 = vmatpush.msra.mxu0 %v2270
    %v2272 = vand.u32 %v1830, 4294901760
    %v2273 = vsub.f32 %v1830, %v2272
    %v2274 = vand.u32 %v2273, 4294901760
    %v2275 = vsub.f32 %v2273, %v2274
    %v2276 = vand.u32 %v2275, 4294901760
    %2277 = vmatpush.msra.mxu0 %v2276
    %v2278 = vand.u32 %v1841, 4294901760
    %2279 = vmatmul.f32.gmra.mxu0 %v2278
    %v2280 = vpop.f32.mrf.mxu0
    %v2281 = vadd.f32 %v2240, %v2280
    %2282 = vdwg.mxu0
    %2283 = vmatpush.msra.mxu0 0.0
    %2284 = vmatpush.msra.mxu0 0.0
    %2285 = vmatpush.msra.mxu0 0.0
    %2286 = vmatpush.msra.mxu0 0.0
    %2287 = vmatpush.msra.mxu0 0.0
    %2288 = vmatpush.msra.mxu0 0.0
    %2289 = vmatpush.msra.mxu0 0.0
    %2290 = vmatpush.msra.mxu0 0.0
    %2291 = vmatpush.msra.mxu0 0.0
    %2292 = vmatpush.msra.mxu0 0.0
    %2293 = vmatpush.msra.mxu0 0.0
    %2294 = vmatpush.msra.mxu0 0.0
    %v2295 = vand.u32 %v1839, 4294901760
    %v2296 = vsub.f32 %v1839, %v2295
    %2297 = vmatpush.msra.mxu0 %v2296
    %v2298 = vand.u32 %v1836, 4294901760
    %v2299 = vsub.f32 %v1836, %v2298
    %2300 = vmatpush.msra.mxu0 %v2299
    %v2301 = vand.u32 %v1833, 4294901760
    %v2302 = vsub.f32 %v1833, %v2301
    %2303 = vmatpush.msra.mxu0 %v2302
    %v2304 = vand.u32 %v1830, 4294901760
    %v2305 = vsub.f32 %v1830, %v2304
    %2306 = vmatpush.msra.mxu0 %v2305
    %v2307 = vand.u32 %v1841, 4294901760
    %v2308 = vsub.f32 %v1841, %v2307
    %2309 = vmatmul.f32.gmra.mxu0 %v2308
    %v2310 = vpop.f32.mrf.mxu0
    %v2311 = vadd.f32 %v2281, %v2310
    %2312 = vdwg.mxu0
    %2313 = vmatpush.msra.mxu0 0.0
    %2314 = vmatpush.msra.mxu0 0.0
    %2315 = vmatpush.msra.mxu0 0.0
    %2316 = vmatpush.msra.mxu0 0.0
    %2317 = vmatpush.msra.mxu0 0.0
    %2318 = vmatpush.msra.mxu0 0.0
    %2319 = vmatpush.msra.mxu0 0.0
    %2320 = vmatpush.msra.mxu0 0.0
    %2321 = vmatpush.msra.mxu0 0.0
    %2322 = vmatpush.msra.mxu0 0.0
    %2323 = vmatpush.msra.mxu0 0.0
    %2324 = vmatpush.msra.mxu0 0.0
    %v2325 = vand.u32 %v1839, 4294901760
    %2326 = vmatpush.msra.mxu0 %v2325
    %v2327 = vand.u32 %v1836, 4294901760
    %2328 = vmatpush.msra.mxu0 %v2327
    %v2329 = vand.u32 %v1833, 4294901760
    %2330 = vmatpush.msra.mxu0 %v2329
    %v2331 = vand.u32 %v1830, 4294901760
    %2332 = vmatpush.msra.mxu0 %v2331
    %v2333 = vand.u32 %v1841, 4294901760
    %v2334 = vsub.f32 %v1841, %v2333
    %v2335 = vand.u32 %v2334, 4294901760
    %2336 = vmatmul.f32.gmra.mxu0 %v2335
    %v2337 = vpop.f32.mrf.mxu0
    %v2338 = vadd.f32 %v2311, %v2337
    %2339 = vdwg.mxu0
    %2340 = vmatpush.msra.mxu0 0.0
    %2341 = vmatpush.msra.mxu0 0.0
    %2342 = vmatpush.msra.mxu0 0.0
    %2343 = vmatpush.msra.mxu0 0.0
    %2344 = vmatpush.msra.mxu0 0.0
    %2345 = vmatpush.msra.mxu0 0.0
    %2346 = vmatpush.msra.mxu0 0.0
    %2347 = vmatpush.msra.mxu0 0.0
    %2348 = vmatpush.msra.mxu0 0.0
    %2349 = vmatpush.msra.mxu0 0.0
    %2350 = vmatpush.msra.mxu0 0.0
    %2351 = vmatpush.msra.mxu0 0.0
    %v2352 = vand.u32 %v1839, 4294901760
    %v2353 = vsub.f32 %v1839, %v2352
    %v2354 = vand.u32 %v2353, 4294901760
    %2355 = vmatpush.msra.mxu0 %v2354
    %v2356 = vand.u32 %v1836, 4294901760
    %v2357 = vsub.f32 %v1836, %v2356
    %v2358 = vand.u32 %v2357, 4294901760
    %2359 = vmatpush.msra.mxu0 %v2358
    %v2360 = vand.u32 %v1833, 4294901760
    %v2361 = vsub.f32 %v1833, %v2360
    %v2362 = vand.u32 %v2361, 4294901760
    %2363 = vmatpush.msra.mxu0 %v2362
    %v2364 = vand.u32 %v1830, 4294901760
    %v2365 = vsub.f32 %v1830, %v2364
    %v2366 = vand.u32 %v2365, 4294901760
    %2367 = vmatpush.msra.mxu0 %v2366
    %v2368 = vand.u32 %v1841, 4294901760
    %2369 = vmatmul.f32.gmra.mxu0 %v2368
    %v2370 = vpop.f32.mrf.mxu0
    %v2371 = vadd.f32 %v2338, %v2370
    %2372 = vdwg.mxu0
    %2373 = vmatpush.msra.mxu0 0.0
    %2374 = vmatpush.msra.mxu0 0.0
    %2375 = vmatpush.msra.mxu0 0.0
    %2376 = vmatpush.msra.mxu0 0.0
    %2377 = vmatpush.msra.mxu0 0.0
    %2378 = vmatpush.msra.mxu0 0.0
    %2379 = vmatpush.msra.mxu0 0.0
    %2380 = vmatpush.msra.mxu0 0.0
    %2381 = vmatpush.msra.mxu0 0.0
    %2382 = vmatpush.msra.mxu0 0.0
    %2383 = vmatpush.msra.mxu0 0.0
    %2384 = vmatpush.msra.mxu0 0.0
    %v2385 = vand.u32 %v1839, 4294901760
    %2386 = vmatpush.msra.mxu0 %v2385
    %v2387 = vand.u32 %v1836, 4294901760
    %2388 = vmatpush.msra.mxu0 %v2387
    %v2389 = vand.u32 %v1833, 4294901760
    %2390 = vmatpush.msra.mxu0 %v2389
    %v2391 = vand.u32 %v1830, 4294901760
    %2392 = vmatpush.msra.mxu0 %v2391
    %v2393 = vand.u32 %v1841, 4294901760
    %2394 = vmatmul.f32.gmra.mxu0 %v2393
    %v2395 = vpop.f32.mrf.mxu0
    %v2396 = vadd.f32 %v2371, %v2395
    %2397 = vdwg.mxu0
    %v2398 = vadd.f32 %v1824, %v2026
    %v2399 = vadd.f32 %v1825, %v2211
    %v2400 = vadd.f32 %v1826, %v2396
    %v2401 = vld [vmem:[%s5] sm:$0x7]
    %v2403 = vperm.slane %v2401, 0
    %v2404 = vperm.slane %v2401, 1
    %v2405 = vperm.slane %v2401, 2
    %v2409 = vadd.f32 %v2398, %v2403
    %v2410 = vadd.f32 %v2399, %v2404
    %v2411 = vadd.f32 %v2400, %v2405
    %v2412 = vmul.f32 %v2409, %v2409
    %v2413 = vmul.f32 %v2410, %v2410
    %v2414 = vmul.f32 %v2411, %v2411
    %v2415 = vld [vmem:[#allocation9 + $0x180] sm:$0xff]
    %v2416 = vld [vmem:[#allocation9 + $0x188] sm:$0xff]
    %v2417 = vld [vmem:[#allocation9 + $0x190] sm:$0xff]
    %v2418 = vld [vmem:[#allocation9 + $0x198] sm:$0xff]
    %v2419 = vld [vmem:[#allocation9 + $0x1a0] sm:$0xff]
    %v2420 = vld [vmem:[#allocation9 + $0x1a8] sm:$0xff]
    %v2421 = vld [vmem:[#allocation9 + $0x1b0] sm:$0xff]
    %v2422 = vld [vmem:[#allocation9 + $0x1b8] sm:$0xff]
    %v2423 = vld [vmem:[#allocation9 + $0x1c0] sm:$0xff]
    %v2424 = vld [vmem:[#allocation9 + $0x1c8] sm:$0xff]
    %v2425 = vld [vmem:[#allocation9 + $0x1d0] sm:$0xff]
    %v2426 = vld [vmem:[#allocation9 + $0x1d8] sm:$0xff]
    %v2427 = vld [vmem:[#allocation9 + $0x1e0] sm:$0xff]
    %v2428 = vld [vmem:[#allocation9 + $0x1e8] sm:$0xff]
    %v2429 = vld [vmem:[#allocation9 + $0x1f0] sm:$0xff]
    %v2430 = vld [vmem:[#allocation9 + $0x1f8] sm:$0xff]
    %v2431 = vld [vmem:[#allocation9 + $0x200] sm:$0xff]
    %v2432 = vld [vmem:[#allocation9 + $0x208] sm:$0xff]
    %v2433 = vld [vmem:[#allocation9 + $0x210] sm:$0xff]
    %v2434 = vld [vmem:[#allocation9 + $0x218] sm:$0xff]
    %v2435 = vld [vmem:[#allocation9 + $0x220] sm:$0xff]
    %v2436 = vld [vmem:[#allocation9 + $0x228] sm:$0xff]
    %v2437 = vld [vmem:[#allocation9 + $0x230] sm:$0xff]
    %v2438 = vld [vmem:[#allocation9 + $0x238] sm:$0xff]
    %v2439 = vld [vmem:[#allocation9 + $0x240] sm:$0xff]
    %v2440 = vld [vmem:[#allocation9 + $0x248] sm:$0xff]
    %v2441 = vld [vmem:[#allocation9 + $0x250] sm:$0xff]
    %v2442 = vld [vmem:[#allocation9 + $0x258] sm:$0xff]
    %v2443 = vld [vmem:[#allocation9 + $0x260] sm:$0xff]
    %v2444 = vld [vmem:[#allocation9 + $0x268] sm:$0xff]
    %v2445 = vld [vmem:[#allocation9 + $0x270] sm:$0xff]
    %v2446 = vld [vmem:[#allocation9 + $0x278] sm:$0xff]
    %v2447 = vld [vmem:[#allocation9 + $0x280] sm:$0xff]
    %v2448 = vld [vmem:[#allocation9 + $0x288] sm:$0xff]
    %v2449 = vld [vmem:[#allocation9 + $0x290] sm:$0xff]
    %v2450 = vld [vmem:[#allocation9 + $0x298] sm:$0xff]
    %v2451 = vld [vmem:[#allocation9 + $0x2a0] sm:$0xff]
    %v2452 = vld [vmem:[#allocation9 + $0x2a8] sm:$0xff]
    %v2453 = vld [vmem:[#allocation9 + $0x2b0] sm:$0xff]
    %v2454 = vld [vmem:[#allocation9 + $0x2b8] sm:$0xff]
    %v2455 = vld [vmem:[#allocation9 + $0x2c0] sm:$0xff]
    %v2456 = vld [vmem:[#allocation9 + $0x2c8] sm:$0xff]
    %v2457 = vld [vmem:[#allocation9 + $0x2d0] sm:$0xff]
    %v2458 = vld [vmem:[#allocation9 + $0x2d8] sm:$0xff]
    %v2459 = vld [vmem:[#allocation9 + $0x2e0] sm:$0xff]
    %v2460 = vld [vmem:[#allocation9 + $0x2e8] sm:$0xff]
    %v2461 = vld [vmem:[#allocation9 + $0x2f0] sm:$0xff]
    %v2462 = vld [vmem:[#allocation9 + $0x2f8] sm:$0xff]
    %v2463 = vld [vmem:[#allocation9 + $0x300] sm:$0xff]
    %v2464 = vld [vmem:[#allocation9 + $0x308] sm:$0xff]
    %v2465 = vld [vmem:[#allocation9 + $0x310] sm:$0xff]
    %v2466 = vld [vmem:[#allocation9 + $0x318] sm:$0xff]
    %v2467 = vld [vmem:[#allocation9 + $0x320] sm:$0xff]
    %v2468 = vld [vmem:[#allocation9 + $0x328] sm:$0xff]
    %v2469 = vld [vmem:[#allocation9 + $0x330] sm:$0xff]
    %v2470 = vld [vmem:[#allocation9 + $0x338] sm:$0xff]
    %v2471 = vld [vmem:[#allocation9 + $0x340] sm:$0xff]
    %v2472 = vld [vmem:[#allocation9 + $0x348] sm:$0xff]
    %v2473 = vld [vmem:[#allocation9 + $0x350] sm:$0xff]
    %v2474 = vld [vmem:[#allocation9 + $0x358] sm:$0xff]
    %v2475 = vld [vmem:[#allocation9 + $0x360] sm:$0xff]
    %v2476 = vld [vmem:[#allocation9 + $0x368] sm:$0xff]
    %v2477 = vld [vmem:[#allocation9 + $0x370] sm:$0xff]
    %v2478 = vld [vmem:[#allocation9 + $0x378] sm:$0xff]
    %v2479 = vld [vmem:[#allocation9 + $0x380] sm:$0xff]
    %v2480 = vld [vmem:[#allocation9 + $0x388] sm:$0xff]
    %v2481 = vld [vmem:[#allocation9 + $0x390] sm:$0xff]
    %v2482 = vld [vmem:[#allocation9 + $0x398] sm:$0xff]
    %v2483 = vld [vmem:[#allocation9 + $0x3a0] sm:$0xff]
    %v2484 = vld [vmem:[#allocation9 + $0x3a8] sm:$0xff]
    %v2485 = vld [vmem:[#allocation9 + $0x3b0] sm:$0xff]
    %v2486 = vld [vmem:[#allocation9 + $0x3b8] sm:$0xff]
    %v2487 = vld [vmem:[#allocation9 + $0x3c0] sm:$0xff]
    %v2488 = vld [vmem:[#allocation9 + $0x3c8] sm:$0xff]
    %v2489 = vld [vmem:[#allocation9 + $0x3d0] sm:$0xff]
    %v2490 = vld [vmem:[#allocation9 + $0x3d8] sm:$0xff]
    %v2491 = vld [vmem:[#allocation9 + $0x3e0] sm:$0xff]
    %v2492 = vld [vmem:[#allocation9 + $0x3e8] sm:$0xff]
    %v2493 = vld [vmem:[#allocation9 + $0x3f0] sm:$0xff]
    %v2494 = vld [vmem:[#allocation9 + $0x3f8] sm:$0xff]
    %v2495 = vld [vmem:[#allocation9 + $0x400] sm:$0xff]
    %v2496 = vld [vmem:[#allocation9 + $0x408] sm:$0xff]
    %v2497 = vld [vmem:[#allocation9 + $0x410] sm:$0xff]
    %v2498 = vld [vmem:[#allocation9 + $0x418] sm:$0xff]
    %v2499 = vld [vmem:[#allocation9 + $0x420] sm:$0xff]
    %v2500 = vld [vmem:[#allocation9 + $0x428] sm:$0xff]
    %v2501 = vld [vmem:[#allocation9 + $0x430] sm:$0xff]
    %v2502 = vld [vmem:[#allocation9 + $0x438] sm:$0xff]
    %v2503 = vld [vmem:[#allocation9 + $0x440] sm:$0xff]
    %v2504 = vld [vmem:[#allocation9 + $0x448] sm:$0xff]
    %v2505 = vld [vmem:[#allocation9 + $0x450] sm:$0xff]
    %v2506 = vld [vmem:[#allocation9 + $0x458] sm:$0xff]
    %v2507 = vld [vmem:[#allocation9 + $0x460] sm:$0xff]
    %v2508 = vld [vmem:[#allocation9 + $0x468] sm:$0xff]
    %v2509 = vld [vmem:[#allocation9 + $0x470] sm:$0xff]
    %v2510 = vld [vmem:[#allocation9 + $0x478] sm:$0xff]
    %v2511 = vld [vmem:[#allocation9 + $0x480] sm:$0xff]
    %v2512 = vld [vmem:[#allocation9 + $0x488] sm:$0xff]
    %v2513 = vld [vmem:[#allocation9 + $0x490] sm:$0xff]
    %v2514 = vld [vmem:[#allocation9 + $0x498] sm:$0xff]
    %v2515 = vld [vmem:[#allocation9 + $0x4a0] sm:$0xff]
    %v2516 = vld [vmem:[#allocation9 + $0x4a8] sm:$0xff]
    %v2517 = vld [vmem:[#allocation9 + $0x4b0] sm:$0xff]
    %v2518 = vld [vmem:[#allocation9 + $0x4b8] sm:$0xff]
    %v2519 = vld [vmem:[#allocation9 + $0x4c0] sm:$0xff]
    %v2520 = vld [vmem:[#allocation9 + $0x4c8] sm:$0xff]
    %v2521 = vld [vmem:[#allocation9 + $0x4d0] sm:$0xff]
    %v2522 = vld [vmem:[#allocation9 + $0x4d8] sm:$0xff]
    %v2523 = vld [vmem:[#allocation9 + $0x4e0] sm:$0xff]
    %v2524 = vld [vmem:[#allocation9 + $0x4e8] sm:$0xff]
    %v2525 = vld [vmem:[#allocation9 + $0x4f0] sm:$0xff]
    %v2526 = vld [vmem:[#allocation9 + $0x4f8] sm:$0xff]
    %v2527 = vld [vmem:[#allocation9 + $0x500] sm:$0xff]
    %v2528 = vld [vmem:[#allocation9 + $0x508] sm:$0xff]
    %v2529 = vld [vmem:[#allocation9 + $0x510] sm:$0xff]
    %v2530 = vld [vmem:[#allocation9 + $0x518] sm:$0xff]
    %v2531 = vld [vmem:[#allocation9 + $0x520] sm:$0xff]
    %v2532 = vld [vmem:[#allocation9 + $0x528] sm:$0xff]
    %v2533 = vld [vmem:[#allocation9 + $0x530] sm:$0xff]
    %v2534 = vld [vmem:[#allocation9 + $0x538] sm:$0xff]
    %v2535 = vld [vmem:[#allocation9 + $0x540] sm:$0xff]
    %v2536 = vld [vmem:[#allocation9 + $0x548] sm:$0xff]
    %v2537 = vld [vmem:[#allocation9 + $0x550] sm:$0xff]
    %v2538 = vld [vmem:[#allocation9 + $0x558] sm:$0xff]
    %v2539 = vld [vmem:[#allocation9 + $0x560] sm:$0xff]
    %v2540 = vld [vmem:[#allocation9 + $0x568] sm:$0xff]
    %v2541 = vld [vmem:[#allocation9 + $0x570] sm:$0xff]
    %v2542 = vld [vmem:[#allocation9 + $0x578] sm:$0xff]
    %v2543 = vld [vmem:[#allocation9 + $0x580] sm:$0xff]
    %v2544 = vld [vmem:[#allocation9 + $0x588] sm:$0xff]
    %v2545 = vld [vmem:[#allocation9 + $0x590] sm:$0xff]
    %v2546 = vld [vmem:[#allocation9 + $0x598] sm:$0xff]
    %v2547 = vld [vmem:[#allocation9 + $0x5a0] sm:$0xff]
    %v2548 = vld [vmem:[#allocation9 + $0x5a8] sm:$0xff]
    %v2549 = vld [vmem:[#allocation9 + $0x5b0] sm:$0xff]
    %v2550 = vld [vmem:[#allocation9 + $0x5b8] sm:$0xff]
    %v2551 = vld [vmem:[#allocation9 + $0x5c0] sm:$0xff]
    %v2552 = vld [vmem:[#allocation9 + $0x5c8] sm:$0xff]
    %v2553 = vld [vmem:[#allocation9 + $0x5d0] sm:$0xff]
    %v2554 = vld [vmem:[#allocation9 + $0x5d8] sm:$0xff]
    %v2555 = vld [vmem:[#allocation9 + $0x5e0] sm:$0xff]
    %v2556 = vld [vmem:[#allocation9 + $0x5e8] sm:$0xff]
    %v2557 = vld [vmem:[#allocation9 + $0x5f0] sm:$0xff]
    %v2558 = vld [vmem:[#allocation9 + $0x5f8] sm:$0xff]
    %v2559 = vand.u32 %v2460, 4294901760
    %2560 = vmatpush.msra.mxu0 %v2559
    %v2561 = vand.u32 %v2457, 4294901760
    %2562 = vmatpush.msra.mxu0 %v2561
    %v2563 = vand.u32 %v2454, 4294901760
    %2564 = vmatpush.msra.mxu0 %v2563
    %v2565 = vand.u32 %v2451, 4294901760
    %2566 = vmatpush.msra.mxu0 %v2565
    %v2567 = vand.u32 %v2448, 4294901760
    %2568 = vmatpush.msra.mxu0 %v2567
    %v2569 = vand.u32 %v2445, 4294901760
    %2570 = vmatpush.msra.mxu0 %v2569
    %v2571 = vand.u32 %v2442, 4294901760
    %2572 = vmatpush.msra.mxu0 %v2571
    %v2573 = vand.u32 %v2439, 4294901760
    %2574 = vmatpush.msra.mxu0 %v2573
    %v2575 = vand.u32 %v2436, 4294901760
    %2576 = vmatpush.msra.mxu0 %v2575
    %v2577 = vand.u32 %v2433, 4294901760
    %2578 = vmatpush.msra.mxu0 %v2577
    %v2579 = vand.u32 %v2430, 4294901760
    %2580 = vmatpush.msra.mxu0 %v2579
    %v2581 = vand.u32 %v2427, 4294901760
    %2582 = vmatpush.msra.mxu0 %v2581
    %v2583 = vand.u32 %v2424, 4294901760
    %2584 = vmatpush.msra.mxu0 %v2583
    %v2585 = vand.u32 %v2421, 4294901760
    %2586 = vmatpush.msra.mxu0 %v2585
    %v2587 = vand.u32 %v2418, 4294901760
    %2588 = vmatpush.msra.mxu0 %v2587
    %v2589 = vand.u32 %v2415, 4294901760
    %2590 = vmatpush.msra.mxu0 %v2589
    %v2591 = vand.u32 %v2412, 4294901760
    %v2592 = vsub.f32 %v2412, %v2591
    %v2593 = vand.u32 %v2592, 4294901760
    %v2594 = vsub.f32 %v2592, %v2593
    %v2595 = vand.u32 %v2594, 4294901760
    %2596 = vmatmul.f32.gmra.mxu0 %v2595
    %v2597 = vpop.f32.mrf.mxu0
    %v2598 = vadd.f32 0.0, %v2597
    %2599 = vdwg.mxu0
    %v2600 = vand.u32 %v2460, 4294901760
    %v2601 = vsub.f32 %v2460, %v2600
    %v2602 = vand.u32 %v2601, 4294901760
    %v2603 = vsub.f32 %v2601, %v2602
    %v2604 = vand.u32 %v2603, 4294901760
    %2605 = vmatpush.msra.mxu0 %v2604
    %v2606 = vand.u32 %v2457, 4294901760
    %v2607 = vsub.f32 %v2457, %v2606
    %v2608 = vand.u32 %v2607, 4294901760
    %v2609 = vsub.f32 %v2607, %v2608
    %v2610 = vand.u32 %v2609, 4294901760
    %2611 = vmatpush.msra.mxu0 %v2610
    %v2612 = vand.u32 %v2454, 4294901760
    %v2613 = vsub.f32 %v2454, %v2612
    %v2614 = vand.u32 %v2613, 4294901760
    %v2615 = vsub.f32 %v2613, %v2614
    %v2616 = vand.u32 %v2615, 4294901760
    %2617 = vmatpush.msra.mxu0 %v2616
    %v2618 = vand.u32 %v2451, 4294901760
    %v2619 = vsub.f32 %v2451, %v2618
    %v2620 = vand.u32 %v2619, 4294901760
    %v2621 = vsub.f32 %v2619, %v2620
    %v2622 = vand.u32 %v2621, 4294901760
    %2623 = vmatpush.msra.mxu0 %v2622
    %v2624 = vand.u32 %v2448, 4294901760
    %v2625 = vsub.f32 %v2448, %v2624
    %v2626 = vand.u32 %v2625, 4294901760
    %v2627 = vsub.f32 %v2625, %v2626
    %v2628 = vand.u32 %v2627, 4294901760
    %2629 = vmatpush.msra.mxu0 %v2628
    %v2630 = vand.u32 %v2445, 4294901760
    %v2631 = vsub.f32 %v2445, %v2630
    %v2632 = vand.u32 %v2631, 4294901760
    %v2633 = vsub.f32 %v2631, %v2632
    %v2634 = vand.u32 %v2633, 4294901760
    %2635 = vmatpush.msra.mxu0 %v2634
    %v2636 = vand.u32 %v2442, 4294901760
    %v2637 = vsub.f32 %v2442, %v2636
    %v2638 = vand.u32 %v2637, 4294901760
    %v2639 = vsub.f32 %v2637, %v2638
    %v2640 = vand.u32 %v2639, 4294901760
    %2641 = vmatpush.msra.mxu0 %v2640
    %v2642 = vand.u32 %v2439, 4294901760
    %v2643 = vsub.f32 %v2439, %v2642
    %v2644 = vand.u32 %v2643, 4294901760
    %v2645 = vsub.f32 %v2643, %v2644
    %v2646 = vand.u32 %v2645, 4294901760
    %2647 = vmatpush.msra.mxu0 %v2646
    %v2648 = vand.u32 %v2436, 4294901760
    %v2649 = vsub.f32 %v2436, %v2648
    %v2650 = vand.u32 %v2649, 4294901760
    %v2651 = vsub.f32 %v2649, %v2650
    %v2652 = vand.u32 %v2651, 4294901760
    %2653 = vmatpush.msra.mxu0 %v2652
    %v2654 = vand.u32 %v2433, 4294901760
    %v2655 = vsub.f32 %v2433, %v2654
    %v2656 = vand.u32 %v2655, 4294901760
    %v2657 = vsub.f32 %v2655, %v2656
    %v2658 = vand.u32 %v2657, 4294901760
    %2659 = vmatpush.msra.mxu0 %v2658
    %v2660 = vand.u32 %v2430, 4294901760
    %v2661 = vsub.f32 %v2430, %v2660
    %v2662 = vand.u32 %v2661, 4294901760
    %v2663 = vsub.f32 %v2661, %v2662
    %v2664 = vand.u32 %v2663, 4294901760
    %2665 = vmatpush.msra.mxu0 %v2664
    %v2666 = vand.u32 %v2427, 4294901760
    %v2667 = vsub.f32 %v2427, %v2666
    %v2668 = vand.u32 %v2667, 4294901760
    %v2669 = vsub.f32 %v2667, %v2668
    %v2670 = vand.u32 %v2669, 4294901760
    %2671 = vmatpush.msra.mxu0 %v2670
    %v2672 = vand.u32 %v2424, 4294901760
    %v2673 = vsub.f32 %v2424, %v2672
    %v2674 = vand.u32 %v2673, 4294901760
    %v2675 = vsub.f32 %v2673, %v2674
    %v2676 = vand.u32 %v2675, 4294901760
    %2677 = vmatpush.msra.mxu0 %v2676
    %v2678 = vand.u32 %v2421, 4294901760
    %v2679 = vsub.f32 %v2421, %v2678
    %v2680 = vand.u32 %v2679, 4294901760
    %v2681 = vsub.f32 %v2679, %v2680
    %v2682 = vand.u32 %v2681, 4294901760
    %2683 = vmatpush.msra.mxu0 %v2682
    %v2684 = vand.u32 %v2418, 4294901760
    %v2685 = vsub.f32 %v2418, %v2684
    %v2686 = vand.u32 %v2685, 4294901760
    %v2687 = vsub.f32 %v2685, %v2686
    %v2688 = vand.u32 %v2687, 4294901760
    %2689 = vmatpush.msra.mxu0 %v2688
    %v2690 = vand.u32 %v2415, 4294901760
    %v2691 = vsub.f32 %v2415, %v2690
    %v2692 = vand.u32 %v2691, 4294901760
    %v2693 = vsub.f32 %v2691, %v2692
    %v2694 = vand.u32 %v2693, 4294901760
    %2695 = vmatpush.msra.mxu0 %v2694
    %v2696 = vand.u32 %v2412, 4294901760
    %2697 = vmatmul.f32.gmra.mxu0 %v2696
    %v2698 = vpop.f32.mrf.mxu0
    %v2699 = vadd.f32 %v2598, %v2698
    %2700 = vdwg.mxu0
    %v2701 = vand.u32 %v2460, 4294901760
    %v2702 = vsub.f32 %v2460, %v2701
    %2703 = vmatpush.msra.mxu0 %v2702
    %v2704 = vand.u32 %v2457, 4294901760
    %v2705 = vsub.f32 %v2457, %v2704
    %2706 = vmatpush.msra.mxu0 %v2705
    %v2707 = vand.u32 %v2454, 4294901760
    %v2708 = vsub.f32 %v2454, %v2707
    %2709 = vmatpush.msra.mxu0 %v2708
    %v2710 = vand.u32 %v2451, 4294901760
    %v2711 = vsub.f32 %v2451, %v2710
    %2712 = vmatpush.msra.mxu0 %v2711
    %v2713 = vand.u32 %v2448, 4294901760
    %v2714 = vsub.f32 %v2448, %v2713
    %2715 = vmatpush.msra.mxu0 %v2714
    %v2716 = vand.u32 %v2445, 4294901760
    %v2717 = vsub.f32 %v2445, %v2716
    %2718 = vmatpush.msra.mxu0 %v2717
    %v2719 = vand.u32 %v2442, 4294901760
    %v2720 = vsub.f32 %v2442, %v2719
    %2721 = vmatpush.msra.mxu0 %v2720
    %v2722 = vand.u32 %v2439, 4294901760
    %v2723 = vsub.f32 %v2439, %v2722
    %2724 = vmatpush.msra.mxu0 %v2723
    %v2725 = vand.u32 %v2436, 4294901760
    %v2726 = vsub.f32 %v2436, %v2725
    %2727 = vmatpush.msra.mxu0 %v2726
    %v2728 = vand.u32 %v2433, 4294901760
    %v2729 = vsub.f32 %v2433, %v2728
    %2730 = vmatpush.msra.mxu0 %v2729
    %v2731 = vand.u32 %v2430, 4294901760
    %v2732 = vsub.f32 %v2430, %v2731
    %2733 = vmatpush.msra.mxu0 %v2732
    %v2734 = vand.u32 %v2427, 4294901760
    %v2735 = vsub.f32 %v2427, %v2734
    %2736 = vmatpush.msra.mxu0 %v2735
    %v2737 = vand.u32 %v2424, 4294901760
    %v2738 = vsub.f32 %v2424, %v2737
    %2739 = vmatpush.msra.mxu0 %v2738
    %v2740 = vand.u32 %v2421, 4294901760
    %v2741 = vsub.f32 %v2421, %v2740
    %2742 = vmatpush.msra.mxu0 %v2741
    %v2743 = vand.u32 %v2418, 4294901760
    %v2744 = vsub.f32 %v2418, %v2743
    %2745 = vmatpush.msra.mxu0 %v2744
    %v2746 = vand.u32 %v2415, 4294901760
    %v2747 = vsub.f32 %v2415, %v2746
    %2748 = vmatpush.msra.mxu0 %v2747
    %v2749 = vand.u32 %v2412, 4294901760
    %v2750 = vsub.f32 %v2412, %v2749
    %2751 = vmatmul.f32.gmra.mxu0 %v2750
    %v2752 = vpop.f32.mrf.mxu0
    %v2753 = vadd.f32 %v2699, %v2752
    %2754 = vdwg.mxu0
    %v2755 = vand.u32 %v2460, 4294901760
    %2756 = vmatpush.msra.mxu0 %v2755
    %v2757 = vand.u32 %v2457, 4294901760
    %2758 = vmatpush.msra.mxu0 %v2757
    %v2759 = vand.u32 %v2454, 4294901760
    %2760 = vmatpush.msra.mxu0 %v2759
    %v2761 = vand.u32 %v2451, 4294901760
    %2762 = vmatpush.msra.mxu0 %v2761
    %v2763 = vand.u32 %v2448, 4294901760
    %2764 = vmatpush.msra.mxu0 %v2763
    %v2765 = vand.u32 %v2445, 4294901760
    %2766 = vmatpush.msra.mxu0 %v2765
    %v2767 = vand.u32 %v2442, 4294901760
    %2768 = vmatpush.msra.mxu0 %v2767
    %v2769 = vand.u32 %v2439, 4294901760
    %2770 = vmatpush.msra.mxu0 %v2769
    %v2771 = vand.u32 %v2436, 4294901760
    %2772 = vmatpush.msra.mxu0 %v2771
    %v2773 = vand.u32 %v2433, 4294901760
    %2774 = vmatpush.msra.mxu0 %v2773
    %v2775 = vand.u32 %v2430, 4294901760
    %2776 = vmatpush.msra.mxu0 %v2775
    %v2777 = vand.u32 %v2427, 4294901760
    %2778 = vmatpush.msra.mxu0 %v2777
    %v2779 = vand.u32 %v2424, 4294901760
    %2780 = vmatpush.msra.mxu0 %v2779
    %v2781 = vand.u32 %v2421, 4294901760
    %2782 = vmatpush.msra.mxu0 %v2781
    %v2783 = vand.u32 %v2418, 4294901760
    %2784 = vmatpush.msra.mxu0 %v2783
    %v2785 = vand.u32 %v2415, 4294901760
    %2786 = vmatpush.msra.mxu0 %v2785
    %v2787 = vand.u32 %v2412, 4294901760
    %v2788 = vsub.f32 %v2412, %v2787
    %v2789 = vand.u32 %v2788, 4294901760
    %2790 = vmatmul.f32.gmra.mxu0 %v2789
    %v2791 = vpop.f32.mrf.mxu0
    %v2792 = vadd.f32 %v2753, %v2791
    %2793 = vdwg.mxu0
    %v2794 = vand.u32 %v2460, 4294901760
    %v2795 = vsub.f32 %v2460, %v2794
    %v2796 = vand.u32 %v2795, 4294901760
    %2797 = vmatpush.msra.mxu0 %v2796
    %v2798 = vand.u32 %v2457, 4294901760
    %v2799 = vsub.f32 %v2457, %v2798
    %v2800 = vand.u32 %v2799, 4294901760
    %2801 = vmatpush.msra.mxu0 %v2800
    %v2802 = vand.u32 %v2454, 4294901760
    %v2803 = vsub.f32 %v2454, %v2802
    %v2804 = vand.u32 %v2803, 4294901760
    %2805 = vmatpush.msra.mxu0 %v2804
    %v2806 = vand.u32 %v2451, 4294901760
    %v2807 = vsub.f32 %v2451, %v2806
    %v2808 = vand.u32 %v2807, 4294901760
    %2809 = vmatpush.msra.mxu0 %v2808
    %v2810 = vand.u32 %v2448, 4294901760
    %v2811 = vsub.f32 %v2448, %v2810
    %v2812 = vand.u32 %v2811, 4294901760
    %2813 = vmatpush.msra.mxu0 %v2812
    %v2814 = vand.u32 %v2445, 4294901760
    %v2815 = vsub.f32 %v2445, %v2814
    %v2816 = vand.u32 %v2815, 4294901760
    %2817 = vmatpush.msra.mxu0 %v2816
    %v2818 = vand.u32 %v2442, 4294901760
    %v2819 = vsub.f32 %v2442, %v2818
    %v2820 = vand.u32 %v2819, 4294901760
    %2821 = vmatpush.msra.mxu0 %v2820
    %v2822 = vand.u32 %v2439, 4294901760
    %v2823 = vsub.f32 %v2439, %v2822
    %v2824 = vand.u32 %v2823, 4294901760
    %2825 = vmatpush.msra.mxu0 %v2824
    %v2826 = vand.u32 %v2436, 4294901760
    %v2827 = vsub.f32 %v2436, %v2826
    %v2828 = vand.u32 %v2827, 4294901760
    %2829 = vmatpush.msra.mxu0 %v2828
    %v2830 = vand.u32 %v2433, 4294901760
    %v2831 = vsub.f32 %v2433, %v2830
    %v2832 = vand.u32 %v2831, 4294901760
    %2833 = vmatpush.msra.mxu0 %v2832
    %v2834 = vand.u32 %v2430, 4294901760
    %v2835 = vsub.f32 %v2430, %v2834
    %v2836 = vand.u32 %v2835, 4294901760
    %2837 = vmatpush.msra.mxu0 %v2836
    %v2838 = vand.u32 %v2427, 4294901760
    %v2839 = vsub.f32 %v2427, %v2838
    %v2840 = vand.u32 %v2839, 4294901760
    %2841 = vmatpush.msra.mxu0 %v2840
    %v2842 = vand.u32 %v2424, 4294901760
    %v2843 = vsub.f32 %v2424, %v2842
    %v2844 = vand.u32 %v2843, 4294901760
    %2845 = vmatpush.msra.mxu0 %v2844
    %v2846 = vand.u32 %v2421, 4294901760
    %v2847 = vsub.f32 %v2421, %v2846
    %v2848 = vand.u32 %v2847, 4294901760
    %2849 = vmatpush.msra.mxu0 %v2848
    %v2850 = vand.u32 %v2418, 4294901760
    %v2851 = vsub.f32 %v2418, %v2850
    %v2852 = vand.u32 %v2851, 4294901760
    %2853 = vmatpush.msra.mxu0 %v2852
    %v2854 = vand.u32 %v2415, 4294901760
    %v2855 = vsub.f32 %v2415, %v2854
    %v2856 = vand.u32 %v2855, 4294901760
    %2857 = vmatpush.msra.mxu0 %v2856
    %v2858 = vand.u32 %v2412, 4294901760
    %2859 = vmatmul.f32.gmra.mxu0 %v2858
    %v2860 = vpop.f32.mrf.mxu0
    %v2861 = vadd.f32 %v2792, %v2860
    %2862 = vdwg.mxu0
    %v2863 = vand.u32 %v2460, 4294901760
    %2864 = vmatpush.msra.mxu0 %v2863
    %v2865 = vand.u32 %v2457, 4294901760
    %2866 = vmatpush.msra.mxu0 %v2865
    %v2867 = vand.u32 %v2454, 4294901760
    %2868 = vmatpush.msra.mxu0 %v2867
    %v2869 = vand.u32 %v2451, 4294901760
    %2870 = vmatpush.msra.mxu0 %v2869
    %v2871 = vand.u32 %v2448, 4294901760
    %2872 = vmatpush.msra.mxu0 %v2871
    %v2873 = vand.u32 %v2445, 4294901760
    %2874 = vmatpush.msra.mxu0 %v2873
    %v2875 = vand.u32 %v2442, 4294901760
    %2876 = vmatpush.msra.mxu0 %v2875
    %v2877 = vand.u32 %v2439, 4294901760
    %2878 = vmatpush.msra.mxu0 %v2877
    %v2879 = vand.u32 %v2436, 4294901760
    %2880 = vmatpush.msra.mxu0 %v2879
    %v2881 = vand.u32 %v2433, 4294901760
    %2882 = vmatpush.msra.mxu0 %v2881
    %v2883 = vand.u32 %v2430, 4294901760
    %2884 = vmatpush.msra.mxu0 %v2883
    %v2885 = vand.u32 %v2427, 4294901760
    %2886 = vmatpush.msra.mxu0 %v2885
    %v2887 = vand.u32 %v2424, 4294901760
    %2888 = vmatpush.msra.mxu0 %v2887
    %v2889 = vand.u32 %v2421, 4294901760
    %2890 = vmatpush.msra.mxu0 %v2889
    %v2891 = vand.u32 %v2418, 4294901760
    %2892 = vmatpush.msra.mxu0 %v2891
    %v2893 = vand.u32 %v2415, 4294901760
    %2894 = vmatpush.msra.mxu0 %v2893
    %v2895 = vand.u32 %v2412, 4294901760
    %2896 = vmatmul.f32.gmra.mxu0 %v2895
    %v2897 = vpop.f32.mrf.mxu0
    %v2898 = vadd.f32 %v2861, %v2897
    %2899 = vdwg.mxu0
    %v2900 = vand.u32 %v2508, 4294901760
    %2901 = vmatpush.msra.mxu0 %v2900
    %v2902 = vand.u32 %v2505, 4294901760
    %2903 = vmatpush.msra.mxu0 %v2902
    %v2904 = vand.u32 %v2502, 4294901760
    %2905 = vmatpush.msra.mxu0 %v2904
    %v2906 = vand.u32 %v2499, 4294901760
    %2907 = vmatpush.msra.mxu0 %v2906
    %v2908 = vand.u32 %v2496, 4294901760
    %2909 = vmatpush.msra.mxu0 %v2908
    %v2910 = vand.u32 %v2493, 4294901760
    %2911 = vmatpush.msra.mxu0 %v2910
    %v2912 = vand.u32 %v2490, 4294901760
    %2913 = vmatpush.msra.mxu0 %v2912
    %v2914 = vand.u32 %v2487, 4294901760
    %2915 = vmatpush.msra.mxu0 %v2914
    %v2916 = vand.u32 %v2484, 4294901760
    %2917 = vmatpush.msra.mxu0 %v2916
    %v2918 = vand.u32 %v2481, 4294901760
    %2919 = vmatpush.msra.mxu0 %v2918
    %v2920 = vand.u32 %v2478, 4294901760
    %2921 = vmatpush.msra.mxu0 %v2920
    %v2922 = vand.u32 %v2475, 4294901760
    %2923 = vmatpush.msra.mxu0 %v2922
    %v2924 = vand.u32 %v2472, 4294901760
    %2925 = vmatpush.msra.mxu0 %v2924
    %v2926 = vand.u32 %v2469, 4294901760
    %2927 = vmatpush.msra.mxu0 %v2926
    %v2928 = vand.u32 %v2466, 4294901760
    %2929 = vmatpush.msra.mxu0 %v2928
    %v2930 = vand.u32 %v2463, 4294901760
    %2931 = vmatpush.msra.mxu0 %v2930
    %v2932 = vand.u32 %v2413, 4294901760
    %v2933 = vsub.f32 %v2413, %v2932
    %v2934 = vand.u32 %v2933, 4294901760
    %v2935 = vsub.f32 %v2933, %v2934
    %v2936 = vand.u32 %v2935, 4294901760
    %2937 = vmatmul.f32.gmra.mxu0 %v2936
    %v2938 = vpop.f32.mrf.mxu0
    %v2939 = vadd.f32 %v2898, %v2938
    %2940 = vdwg.mxu0
    %v2941 = vand.u32 %v2508, 4294901760
    %v2942 = vsub.f32 %v2508, %v2941
    %v2943 = vand.u32 %v2942, 4294901760
    %v2944 = vsub.f32 %v2942, %v2943
    %v2945 = vand.u32 %v2944, 4294901760
    %2946 = vmatpush.msra.mxu0 %v2945
    %v2947 = vand.u32 %v2505, 4294901760
    %v2948 = vsub.f32 %v2505, %v2947
    %v2949 = vand.u32 %v2948, 4294901760
    %v2950 = vsub.f32 %v2948, %v2949
    %v2951 = vand.u32 %v2950, 4294901760
    %2952 = vmatpush.msra.mxu0 %v2951
    %v2953 = vand.u32 %v2502, 4294901760
    %v2954 = vsub.f32 %v2502, %v2953
    %v2955 = vand.u32 %v2954, 4294901760
    %v2956 = vsub.f32 %v2954, %v2955
    %v2957 = vand.u32 %v2956, 4294901760
    %2958 = vmatpush.msra.mxu0 %v2957
    %v2959 = vand.u32 %v2499, 4294901760
    %v2960 = vsub.f32 %v2499, %v2959
    %v2961 = vand.u32 %v2960, 4294901760
    %v2962 = vsub.f32 %v2960, %v2961
    %v2963 = vand.u32 %v2962, 4294901760
    %2964 = vmatpush.msra.mxu0 %v2963
    %v2965 = vand.u32 %v2496, 4294901760
    %v2966 = vsub.f32 %v2496, %v2965
    %v2967 = vand.u32 %v2966, 4294901760
    %v2968 = vsub.f32 %v2966, %v2967
    %v2969 = vand.u32 %v2968, 4294901760
    %2970 = vmatpush.msra.mxu0 %v2969
    %v2971 = vand.u32 %v2493, 4294901760
    %v2972 = vsub.f32 %v2493, %v2971
    %v2973 = vand.u32 %v2972, 4294901760
    %v2974 = vsub.f32 %v2972, %v2973
    %v2975 = vand.u32 %v2974, 4294901760
    %2976 = vmatpush.msra.mxu0 %v2975
    %v2977 = vand.u32 %v2490, 4294901760
    %v2978 = vsub.f32 %v2490, %v2977
    %v2979 = vand.u32 %v2978, 4294901760
    %v2980 = vsub.f32 %v2978, %v2979
    %v2981 = vand.u32 %v2980, 4294901760
    %2982 = vmatpush.msra.mxu0 %v2981
    %v2983 = vand.u32 %v2487, 4294901760
    %v2984 = vsub.f32 %v2487, %v2983
    %v2985 = vand.u32 %v2984, 4294901760
    %v2986 = vsub.f32 %v2984, %v2985
    %v2987 = vand.u32 %v2986, 4294901760
    %2988 = vmatpush.msra.mxu0 %v2987
    %v2989 = vand.u32 %v2484, 4294901760
    %v2990 = vsub.f32 %v2484, %v2989
    %v2991 = vand.u32 %v2990, 4294901760
    %v2992 = vsub.f32 %v2990, %v2991
    %v2993 = vand.u32 %v2992, 4294901760
    %2994 = vmatpush.msra.mxu0 %v2993
    %v2995 = vand.u32 %v2481, 4294901760
    %v2996 = vsub.f32 %v2481, %v2995
    %v2997 = vand.u32 %v2996, 4294901760
    %v2998 = vsub.f32 %v2996, %v2997
    %v2999 = vand.u32 %v2998, 4294901760
    %3000 = vmatpush.msra.mxu0 %v2999
    %v3001 = vand.u32 %v2478, 4294901760
    %v3002 = vsub.f32 %v2478, %v3001
    %v3003 = vand.u32 %v3002, 4294901760
    %v3004 = vsub.f32 %v3002, %v3003
    %v3005 = vand.u32 %v3004, 4294901760
    %3006 = vmatpush.msra.mxu0 %v3005
    %v3007 = vand.u32 %v2475, 4294901760
    %v3008 = vsub.f32 %v2475, %v3007
    %v3009 = vand.u32 %v3008, 4294901760
    %v3010 = vsub.f32 %v3008, %v3009
    %v3011 = vand.u32 %v3010, 4294901760
    %3012 = vmatpush.msra.mxu0 %v3011
    %v3013 = vand.u32 %v2472, 4294901760
    %v3014 = vsub.f32 %v2472, %v3013
    %v3015 = vand.u32 %v3014, 4294901760
    %v3016 = vsub.f32 %v3014, %v3015
    %v3017 = vand.u32 %v3016, 4294901760
    %3018 = vmatpush.msra.mxu0 %v3017
    %v3019 = vand.u32 %v2469, 4294901760
    %v3020 = vsub.f32 %v2469, %v3019
    %v3021 = vand.u32 %v3020, 4294901760
    %v3022 = vsub.f32 %v3020, %v3021
    %v3023 = vand.u32 %v3022, 4294901760
    %3024 = vmatpush.msra.mxu0 %v3023
    %v3025 = vand.u32 %v2466, 4294901760
    %v3026 = vsub.f32 %v2466, %v3025
    %v3027 = vand.u32 %v3026, 4294901760
    %v3028 = vsub.f32 %v3026, %v3027
    %v3029 = vand.u32 %v3028, 4294901760
    %3030 = vmatpush.msra.mxu0 %v3029
    %v3031 = vand.u32 %v2463, 4294901760
    %v3032 = vsub.f32 %v2463, %v3031
    %v3033 = vand.u32 %v3032, 4294901760
    %v3034 = vsub.f32 %v3032, %v3033
    %v3035 = vand.u32 %v3034, 4294901760
    %3036 = vmatpush.msra.mxu0 %v3035
    %v3037 = vand.u32 %v2413, 4294901760
    %3038 = vmatmul.f32.gmra.mxu0 %v3037
    %v3039 = vpop.f32.mrf.mxu0
    %v3040 = vadd.f32 %v2939, %v3039
    %3041 = vdwg.mxu0
    %v3042 = vand.u32 %v2508, 4294901760
    %v3043 = vsub.f32 %v2508, %v3042
    %3044 = vmatpush.msra.mxu0 %v3043
    %v3045 = vand.u32 %v2505, 4294901760
    %v3046 = vsub.f32 %v2505, %v3045
    %3047 = vmatpush.msra.mxu0 %v3046
    %v3048 = vand.u32 %v2502, 4294901760
    %v3049 = vsub.f32 %v2502, %v3048
    %3050 = vmatpush.msra.mxu0 %v3049
    %v3051 = vand.u32 %v2499, 4294901760
    %v3052 = vsub.f32 %v2499, %v3051
    %3053 = vmatpush.msra.mxu0 %v3052
    %v3054 = vand.u32 %v2496, 4294901760
    %v3055 = vsub.f32 %v2496, %v3054
    %3056 = vmatpush.msra.mxu0 %v3055
    %v3057 = vand.u32 %v2493, 4294901760
    %v3058 = vsub.f32 %v2493, %v3057
    %3059 = vmatpush.msra.mxu0 %v3058
    %v3060 = vand.u32 %v2490, 4294901760
    %v3061 = vsub.f32 %v2490, %v3060
    %3062 = vmatpush.msra.mxu0 %v3061
    %v3063 = vand.u32 %v2487, 4294901760
    %v3064 = vsub.f32 %v2487, %v3063
    %3065 = vmatpush.msra.mxu0 %v3064
    %v3066 = vand.u32 %v2484, 4294901760
    %v3067 = vsub.f32 %v2484, %v3066
    %3068 = vmatpush.msra.mxu0 %v3067
    %v3069 = vand.u32 %v2481, 4294901760
    %v3070 = vsub.f32 %v2481, %v3069
    %3071 = vmatpush.msra.mxu0 %v3070
    %v3072 = vand.u32 %v2478, 4294901760
    %v3073 = vsub.f32 %v2478, %v3072
    %3074 = vmatpush.msra.mxu0 %v3073
    %v3075 = vand.u32 %v2475, 4294901760
    %v3076 = vsub.f32 %v2475, %v3075
    %3077 = vmatpush.msra.mxu0 %v3076
    %v3078 = vand.u32 %v2472, 4294901760
    %v3079 = vsub.f32 %v2472, %v3078
    %3080 = vmatpush.msra.mxu0 %v3079
    %v3081 = vand.u32 %v2469, 4294901760
    %v3082 = vsub.f32 %v2469, %v3081
    %3083 = vmatpush.msra.mxu0 %v3082
    %v3084 = vand.u32 %v2466, 4294901760
    %v3085 = vsub.f32 %v2466, %v3084
    %3086 = vmatpush.msra.mxu0 %v3085
    %v3087 = vand.u32 %v2463, 4294901760
    %v3088 = vsub.f32 %v2463, %v3087
    %3089 = vmatpush.msra.mxu0 %v3088
    %v3090 = vand.u32 %v2413, 4294901760
    %v3091 = vsub.f32 %v2413, %v3090
    %3092 = vmatmul.f32.gmra.mxu0 %v3091
    %v3093 = vpop.f32.mrf.mxu0
    %v3094 = vadd.f32 %v3040, %v3093
    %3095 = vdwg.mxu0
    %v3096 = vand.u32 %v2508, 4294901760
    %3097 = vmatpush.msra.mxu0 %v3096
    %v3098 = vand.u32 %v2505, 4294901760
    %3099 = vmatpush.msra.mxu0 %v3098
    %v3100 = vand.u32 %v2502, 4294901760
    %3101 = vmatpush.msra.mxu0 %v3100
    %v3102 = vand.u32 %v2499, 4294901760
    %3103 = vmatpush.msra.mxu0 %v3102
    %v3104 = vand.u32 %v2496, 4294901760
    %3105 = vmatpush.msra.mxu0 %v3104
    %v3106 = vand.u32 %v2493, 4294901760
    %3107 = vmatpush.msra.mxu0 %v3106
    %v3108 = vand.u32 %v2490, 4294901760
    %3109 = vmatpush.msra.mxu0 %v3108
    %v3110 = vand.u32 %v2487, 4294901760
    %3111 = vmatpush.msra.mxu0 %v3110
    %v3112 = vand.u32 %v2484, 4294901760
    %3113 = vmatpush.msra.mxu0 %v3112
    %v3114 = vand.u32 %v2481, 4294901760
    %3115 = vmatpush.msra.mxu0 %v3114
    %v3116 = vand.u32 %v2478, 4294901760
    %3117 = vmatpush.msra.mxu0 %v3116
    %v3118 = vand.u32 %v2475, 4294901760
    %3119 = vmatpush.msra.mxu0 %v3118
    %v3120 = vand.u32 %v2472, 4294901760
    %3121 = vmatpush.msra.mxu0 %v3120
    %v3122 = vand.u32 %v2469, 4294901760
    %3123 = vmatpush.msra.mxu0 %v3122
    %v3124 = vand.u32 %v2466, 4294901760
    %3125 = vmatpush.msra.mxu0 %v3124
    %v3126 = vand.u32 %v2463, 4294901760
    %3127 = vmatpush.msra.mxu0 %v3126
    %v3128 = vand.u32 %v2413, 4294901760
    %v3129 = vsub.f32 %v2413, %v3128
    %v3130 = vand.u32 %v3129, 4294901760
    %3131 = vmatmul.f32.gmra.mxu0 %v3130
    %v3132 = vpop.f32.mrf.mxu0
    %v3133 = vadd.f32 %v3094, %v3132
    %3134 = vdwg.mxu0
    %v3135 = vand.u32 %v2508, 4294901760
    %v3136 = vsub.f32 %v2508, %v3135
    %v3137 = vand.u32 %v3136, 4294901760
    %3138 = vmatpush.msra.mxu0 %v3137
    %v3139 = vand.u32 %v2505, 4294901760
    %v3140 = vsub.f32 %v2505, %v3139
    %v3141 = vand.u32 %v3140, 4294901760
    %3142 = vmatpush.msra.mxu0 %v3141
    %v3143 = vand.u32 %v2502, 4294901760
    %v3144 = vsub.f32 %v2502, %v3143
    %v3145 = vand.u32 %v3144, 4294901760
    %3146 = vmatpush.msra.mxu0 %v3145
    %v3147 = vand.u32 %v2499, 4294901760
    %v3148 = vsub.f32 %v2499, %v3147
    %v3149 = vand.u32 %v3148, 4294901760
    %3150 = vmatpush.msra.mxu0 %v3149
    %v3151 = vand.u32 %v2496, 4294901760
    %v3152 = vsub.f32 %v2496, %v3151
    %v3153 = vand.u32 %v3152, 4294901760
    %3154 = vmatpush.msra.mxu0 %v3153
    %v3155 = vand.u32 %v2493, 4294901760
    %v3156 = vsub.f32 %v2493, %v3155
    %v3157 = vand.u32 %v3156, 4294901760
    %3158 = vmatpush.msra.mxu0 %v3157
    %v3159 = vand.u32 %v2490, 4294901760
    %v3160 = vsub.f32 %v2490, %v3159
    %v3161 = vand.u32 %v3160, 4294901760
    %3162 = vmatpush.msra.mxu0 %v3161
    %v3163 = vand.u32 %v2487, 4294901760
    %v3164 = vsub.f32 %v2487, %v3163
    %v3165 = vand.u32 %v3164, 4294901760
    %3166 = vmatpush.msra.mxu0 %v3165
    %v3167 = vand.u32 %v2484, 4294901760
    %v3168 = vsub.f32 %v2484, %v3167
    %v3169 = vand.u32 %v3168, 4294901760
    %3170 = vmatpush.msra.mxu0 %v3169
    %v3171 = vand.u32 %v2481, 4294901760
    %v3172 = vsub.f32 %v2481, %v3171
    %v3173 = vand.u32 %v3172, 4294901760
    %3174 = vmatpush.msra.mxu0 %v3173
    %v3175 = vand.u32 %v2478, 4294901760
    %v3176 = vsub.f32 %v2478, %v3175
    %v3177 = vand.u32 %v3176, 4294901760
    %3178 = vmatpush.msra.mxu0 %v3177
    %v3179 = vand.u32 %v2475, 4294901760
    %v3180 = vsub.f32 %v2475, %v3179
    %v3181 = vand.u32 %v3180, 4294901760
    %3182 = vmatpush.msra.mxu0 %v3181
    %v3183 = vand.u32 %v2472, 4294901760
    %v3184 = vsub.f32 %v2472, %v3183
    %v3185 = vand.u32 %v3184, 4294901760
    %3186 = vmatpush.msra.mxu0 %v3185
    %v3187 = vand.u32 %v2469, 4294901760
    %v3188 = vsub.f32 %v2469, %v3187
    %v3189 = vand.u32 %v3188, 4294901760
    %3190 = vmatpush.msra.mxu0 %v3189
    %v3191 = vand.u32 %v2466, 4294901760
    %v3192 = vsub.f32 %v2466, %v3191
    %v3193 = vand.u32 %v3192, 4294901760
    %3194 = vmatpush.msra.mxu0 %v3193
    %v3195 = vand.u32 %v2463, 4294901760
    %v3196 = vsub.f32 %v2463, %v3195
    %v3197 = vand.u32 %v3196, 4294901760
    %3198 = vmatpush.msra.mxu0 %v3197
    %v3199 = vand.u32 %v2413, 4294901760
    %3200 = vmatmul.f32.gmra.mxu0 %v3199
    %v3201 = vpop.f32.mrf.mxu0
    %v3202 = vadd.f32 %v3133, %v3201
    %3203 = vdwg.mxu0
    %v3204 = vand.u32 %v2508, 4294901760
    %3205 = vmatpush.msra.mxu0 %v3204
    %v3206 = vand.u32 %v2505, 4294901760
    %3207 = vmatpush.msra.mxu0 %v3206
    %v3208 = vand.u32 %v2502, 4294901760
    %3209 = vmatpush.msra.mxu0 %v3208
    %v3210 = vand.u32 %v2499, 4294901760
    %3211 = vmatpush.msra.mxu0 %v3210
    %v3212 = vand.u32 %v2496, 4294901760
    %3213 = vmatpush.msra.mxu0 %v3212
    %v3214 = vand.u32 %v2493, 4294901760
    %3215 = vmatpush.msra.mxu0 %v3214
    %v3216 = vand.u32 %v2490, 4294901760
    %3217 = vmatpush.msra.mxu0 %v3216
    %v3218 = vand.u32 %v2487, 4294901760
    %3219 = vmatpush.msra.mxu0 %v3218
    %v3220 = vand.u32 %v2484, 4294901760
    %3221 = vmatpush.msra.mxu0 %v3220
    %v3222 = vand.u32 %v2481, 4294901760
    %3223 = vmatpush.msra.mxu0 %v3222
    %v3224 = vand.u32 %v2478, 4294901760
    %3225 = vmatpush.msra.mxu0 %v3224
    %v3226 = vand.u32 %v2475, 4294901760
    %3227 = vmatpush.msra.mxu0 %v3226
    %v3228 = vand.u32 %v2472, 4294901760
    %3229 = vmatpush.msra.mxu0 %v3228
    %v3230 = vand.u32 %v2469, 4294901760
    %3231 = vmatpush.msra.mxu0 %v3230
    %v3232 = vand.u32 %v2466, 4294901760
    %3233 = vmatpush.msra.mxu0 %v3232
    %v3234 = vand.u32 %v2463, 4294901760
    %3235 = vmatpush.msra.mxu0 %v3234
    %v3236 = vand.u32 %v2413, 4294901760
    %3237 = vmatmul.f32.gmra.mxu0 %v3236
    %v3238 = vpop.f32.mrf.mxu0
    %v3239 = vadd.f32 %v3202, %v3238
    %3240 = vdwg.mxu0
    %v3241 = vand.u32 %v2556, 4294901760
    %3242 = vmatpush.msra.mxu0 %v3241
    %v3243 = vand.u32 %v2553, 4294901760
    %3244 = vmatpush.msra.mxu0 %v3243
    %v3245 = vand.u32 %v2550, 4294901760
    %3246 = vmatpush.msra.mxu0 %v3245
    %v3247 = vand.u32 %v2547, 4294901760
    %3248 = vmatpush.msra.mxu0 %v3247
    %v3249 = vand.u32 %v2544, 4294901760
    %3250 = vmatpush.msra.mxu0 %v3249
    %v3251 = vand.u32 %v2541, 4294901760
    %3252 = vmatpush.msra.mxu0 %v3251
    %v3253 = vand.u32 %v2538, 4294901760
    %3254 = vmatpush.msra.mxu0 %v3253
    %v3255 = vand.u32 %v2535, 4294901760
    %3256 = vmatpush.msra.mxu0 %v3255
    %v3257 = vand.u32 %v2532, 4294901760
    %3258 = vmatpush.msra.mxu0 %v3257
    %v3259 = vand.u32 %v2529, 4294901760
    %3260 = vmatpush.msra.mxu0 %v3259
    %v3261 = vand.u32 %v2526, 4294901760
    %3262 = vmatpush.msra.mxu0 %v3261
    %v3263 = vand.u32 %v2523, 4294901760
    %3264 = vmatpush.msra.mxu0 %v3263
    %v3265 = vand.u32 %v2520, 4294901760
    %3266 = vmatpush.msra.mxu0 %v3265
    %v3267 = vand.u32 %v2517, 4294901760
    %3268 = vmatpush.msra.mxu0 %v3267
    %v3269 = vand.u32 %v2514, 4294901760
    %3270 = vmatpush.msra.mxu0 %v3269
    %v3271 = vand.u32 %v2511, 4294901760
    %3272 = vmatpush.msra.mxu0 %v3271
    %v3273 = vand.u32 %v2414, 4294901760
    %v3274 = vsub.f32 %v2414, %v3273
    %v3275 = vand.u32 %v3274, 4294901760
    %v3276 = vsub.f32 %v3274, %v3275
    %v3277 = vand.u32 %v3276, 4294901760
    %3278 = vmatmul.f32.gmra.mxu0 %v3277
    %v3279 = vpop.f32.mrf.mxu0
    %v3280 = vadd.f32 %v3239, %v3279
    %3281 = vdwg.mxu0
    %v3282 = vand.u32 %v2556, 4294901760
    %v3283 = vsub.f32 %v2556, %v3282
    %v3284 = vand.u32 %v3283, 4294901760
    %v3285 = vsub.f32 %v3283, %v3284
    %v3286 = vand.u32 %v3285, 4294901760
    %3287 = vmatpush.msra.mxu0 %v3286
    %v3288 = vand.u32 %v2553, 4294901760
    %v3289 = vsub.f32 %v2553, %v3288
    %v3290 = vand.u32 %v3289, 4294901760
    %v3291 = vsub.f32 %v3289, %v3290
    %v3292 = vand.u32 %v3291, 4294901760
    %3293 = vmatpush.msra.mxu0 %v3292
    %v3294 = vand.u32 %v2550, 4294901760
    %v3295 = vsub.f32 %v2550, %v3294
    %v3296 = vand.u32 %v3295, 4294901760
    %v3297 = vsub.f32 %v3295, %v3296
    %v3298 = vand.u32 %v3297, 4294901760
    %3299 = vmatpush.msra.mxu0 %v3298
    %v3300 = vand.u32 %v2547, 4294901760
    %v3301 = vsub.f32 %v2547, %v3300
    %v3302 = vand.u32 %v3301, 4294901760
    %v3303 = vsub.f32 %v3301, %v3302
    %v3304 = vand.u32 %v3303, 4294901760
    %3305 = vmatpush.msra.mxu0 %v3304
    %v3306 = vand.u32 %v2544, 4294901760
    %v3307 = vsub.f32 %v2544, %v3306
    %v3308 = vand.u32 %v3307, 4294901760
    %v3309 = vsub.f32 %v3307, %v3308
    %v3310 = vand.u32 %v3309, 4294901760
    %3311 = vmatpush.msra.mxu0 %v3310
    %v3312 = vand.u32 %v2541, 4294901760
    %v3313 = vsub.f32 %v2541, %v3312
    %v3314 = vand.u32 %v3313, 4294901760
    %v3315 = vsub.f32 %v3313, %v3314
    %v3316 = vand.u32 %v3315, 4294901760
    %3317 = vmatpush.msra.mxu0 %v3316
    %v3318 = vand.u32 %v2538, 4294901760
    %v3319 = vsub.f32 %v2538, %v3318
    %v3320 = vand.u32 %v3319, 4294901760
    %v3321 = vsub.f32 %v3319, %v3320
    %v3322 = vand.u32 %v3321, 4294901760
    %3323 = vmatpush.msra.mxu0 %v3322
    %v3324 = vand.u32 %v2535, 4294901760
    %v3325 = vsub.f32 %v2535, %v3324
    %v3326 = vand.u32 %v3325, 4294901760
    %v3327 = vsub.f32 %v3325, %v3326
    %v3328 = vand.u32 %v3327, 4294901760
    %3329 = vmatpush.msra.mxu0 %v3328
    %v3330 = vand.u32 %v2532, 4294901760
    %v3331 = vsub.f32 %v2532, %v3330
    %v3332 = vand.u32 %v3331, 4294901760
    %v3333 = vsub.f32 %v3331, %v3332
    %v3334 = vand.u32 %v3333, 4294901760
    %3335 = vmatpush.msra.mxu0 %v3334
    %v3336 = vand.u32 %v2529, 4294901760
    %v3337 = vsub.f32 %v2529, %v3336
    %v3338 = vand.u32 %v3337, 4294901760
    %v3339 = vsub.f32 %v3337, %v3338
    %v3340 = vand.u32 %v3339, 4294901760
    %3341 = vmatpush.msra.mxu0 %v3340
    %v3342 = vand.u32 %v2526, 4294901760
    %v3343 = vsub.f32 %v2526, %v3342
    %v3344 = vand.u32 %v3343, 4294901760
    %v3345 = vsub.f32 %v3343, %v3344
    %v3346 = vand.u32 %v3345, 4294901760
    %3347 = vmatpush.msra.mxu0 %v3346
    %v3348 = vand.u32 %v2523, 4294901760
    %v3349 = vsub.f32 %v2523, %v3348
    %v3350 = vand.u32 %v3349, 4294901760
    %v3351 = vsub.f32 %v3349, %v3350
    %v3352 = vand.u32 %v3351, 4294901760
    %3353 = vmatpush.msra.mxu0 %v3352
    %v3354 = vand.u32 %v2520, 4294901760
    %v3355 = vsub.f32 %v2520, %v3354
    %v3356 = vand.u32 %v3355, 4294901760
    %v3357 = vsub.f32 %v3355, %v3356
    %v3358 = vand.u32 %v3357, 4294901760
    %3359 = vmatpush.msra.mxu0 %v3358
    %v3360 = vand.u32 %v2517, 4294901760
    %v3361 = vsub.f32 %v2517, %v3360
    %v3362 = vand.u32 %v3361, 4294901760
    %v3363 = vsub.f32 %v3361, %v3362
    %v3364 = vand.u32 %v3363, 4294901760
    %3365 = vmatpush.msra.mxu0 %v3364
    %v3366 = vand.u32 %v2514, 4294901760
    %v3367 = vsub.f32 %v2514, %v3366
    %v3368 = vand.u32 %v3367, 4294901760
    %v3369 = vsub.f32 %v3367, %v3368
    %v3370 = vand.u32 %v3369, 4294901760
    %3371 = vmatpush.msra.mxu0 %v3370
    %v3372 = vand.u32 %v2511, 4294901760
    %v3373 = vsub.f32 %v2511, %v3372
    %v3374 = vand.u32 %v3373, 4294901760
    %v3375 = vsub.f32 %v3373, %v3374
    %v3376 = vand.u32 %v3375, 4294901760
    %3377 = vmatpush.msra.mxu0 %v3376
    %v3378 = vand.u32 %v2414, 4294901760
    %3379 = vmatmul.f32.gmra.mxu0 %v3378
    %v3380 = vpop.f32.mrf.mxu0
    %v3381 = vadd.f32 %v3280, %v3380
    %3382 = vdwg.mxu0
    %v3383 = vand.u32 %v2556, 4294901760
    %v3384 = vsub.f32 %v2556, %v3383
    %3385 = vmatpush.msra.mxu0 %v3384
    %v3386 = vand.u32 %v2553, 4294901760
    %v3387 = vsub.f32 %v2553, %v3386
    %3388 = vmatpush.msra.mxu0 %v3387
    %v3389 = vand.u32 %v2550, 4294901760
    %v3390 = vsub.f32 %v2550, %v3389
    %3391 = vmatpush.msra.mxu0 %v3390
    %v3392 = vand.u32 %v2547, 4294901760
    %v3393 = vsub.f32 %v2547, %v3392
    %3394 = vmatpush.msra.mxu0 %v3393
    %v3395 = vand.u32 %v2544, 4294901760
    %v3396 = vsub.f32 %v2544, %v3395
    %3397 = vmatpush.msra.mxu0 %v3396
    %v3398 = vand.u32 %v2541, 4294901760
    %v3399 = vsub.f32 %v2541, %v3398
    %3400 = vmatpush.msra.mxu0 %v3399
    %v3401 = vand.u32 %v2538, 4294901760
    %v3402 = vsub.f32 %v2538, %v3401
    %3403 = vmatpush.msra.mxu0 %v3402
    %v3404 = vand.u32 %v2535, 4294901760
    %v3405 = vsub.f32 %v2535, %v3404
    %3406 = vmatpush.msra.mxu0 %v3405
    %v3407 = vand.u32 %v2532, 4294901760
    %v3408 = vsub.f32 %v2532, %v3407
    %3409 = vmatpush.msra.mxu0 %v3408
    %v3410 = vand.u32 %v2529, 4294901760
    %v3411 = vsub.f32 %v2529, %v3410
    %3412 = vmatpush.msra.mxu0 %v3411
    %v3413 = vand.u32 %v2526, 4294901760
    %v3414 = vsub.f32 %v2526, %v3413
    %3415 = vmatpush.msra.mxu0 %v3414
    %v3416 = vand.u32 %v2523, 4294901760
    %v3417 = vsub.f32 %v2523, %v3416
    %3418 = vmatpush.msra.mxu0 %v3417
    %v3419 = vand.u32 %v2520, 4294901760
    %v3420 = vsub.f32 %v2520, %v3419
    %3421 = vmatpush.msra.mxu0 %v3420
    %v3422 = vand.u32 %v2517, 4294901760
    %v3423 = vsub.f32 %v2517, %v3422
    %3424 = vmatpush.msra.mxu0 %v3423
    %v3425 = vand.u32 %v2514, 4294901760
    %v3426 = vsub.f32 %v2514, %v3425
    %3427 = vmatpush.msra.mxu0 %v3426
    %v3428 = vand.u32 %v2511, 4294901760
    %v3429 = vsub.f32 %v2511, %v3428
    %3430 = vmatpush.msra.mxu0 %v3429
    %v3431 = vand.u32 %v2414, 4294901760
    %v3432 = vsub.f32 %v2414, %v3431
    %3433 = vmatmul.f32.gmra.mxu0 %v3432
    %v3434 = vpop.f32.mrf.mxu0
    %v3435 = vadd.f32 %v3381, %v3434
    %3436 = vdwg.mxu0
    %v3437 = vand.u32 %v2556, 4294901760
    %3438 = vmatpush.msra.mxu0 %v3437
    %v3439 = vand.u32 %v2553, 4294901760
    %3440 = vmatpush.msra.mxu0 %v3439
    %v3441 = vand.u32 %v2550, 4294901760
    %3442 = vmatpush.msra.mxu0 %v3441
    %v3443 = vand.u32 %v2547, 4294901760
    %3444 = vmatpush.msra.mxu0 %v3443
    %v3445 = vand.u32 %v2544, 4294901760
    %3446 = vmatpush.msra.mxu0 %v3445
    %v3447 = vand.u32 %v2541, 4294901760
    %3448 = vmatpush.msra.mxu0 %v3447
    %v3449 = vand.u32 %v2538, 4294901760
    %3450 = vmatpush.msra.mxu0 %v3449
    %v3451 = vand.u32 %v2535, 4294901760
    %3452 = vmatpush.msra.mxu0 %v3451
    %v3453 = vand.u32 %v2532, 4294901760
    %3454 = vmatpush.msra.mxu0 %v3453
    %v3455 = vand.u32 %v2529, 4294901760
    %3456 = vmatpush.msra.mxu0 %v3455
    %v3457 = vand.u32 %v2526, 4294901760
    %3458 = vmatpush.msra.mxu0 %v3457
    %v3459 = vand.u32 %v2523, 4294901760
    %3460 = vmatpush.msra.mxu0 %v3459
    %v3461 = vand.u32 %v2520, 4294901760
    %3462 = vmatpush.msra.mxu0 %v3461
    %v3463 = vand.u32 %v2517, 4294901760
    %3464 = vmatpush.msra.mxu0 %v3463
    %v3465 = vand.u32 %v2514, 4294901760
    %3466 = vmatpush.msra.mxu0 %v3465
    %v3467 = vand.u32 %v2511, 4294901760
    %3468 = vmatpush.msra.mxu0 %v3467
    %v3469 = vand.u32 %v2414, 4294901760
    %v3470 = vsub.f32 %v2414, %v3469
    %v3471 = vand.u32 %v3470, 4294901760
    %3472 = vmatmul.f32.gmra.mxu0 %v3471
    %v3473 = vpop.f32.mrf.mxu0
    %v3474 = vadd.f32 %v3435, %v3473
    %3475 = vdwg.mxu0
    %v3476 = vand.u32 %v2556, 4294901760
    %v3477 = vsub.f32 %v2556, %v3476
    %v3478 = vand.u32 %v3477, 4294901760
    %3479 = vmatpush.msra.mxu0 %v3478
    %v3480 = vand.u32 %v2553, 4294901760
    %v3481 = vsub.f32 %v2553, %v3480
    %v3482 = vand.u32 %v3481, 4294901760
    %3483 = vmatpush.msra.mxu0 %v3482
    %v3484 = vand.u32 %v2550, 4294901760
    %v3485 = vsub.f32 %v2550, %v3484
    %v3486 = vand.u32 %v3485, 4294901760
    %3487 = vmatpush.msra.mxu0 %v3486
    %v3488 = vand.u32 %v2547, 4294901760
    %v3489 = vsub.f32 %v2547, %v3488
    %v3490 = vand.u32 %v3489, 4294901760
    %3491 = vmatpush.msra.mxu0 %v3490
    %v3492 = vand.u32 %v2544, 4294901760
    %v3493 = vsub.f32 %v2544, %v3492
    %v3494 = vand.u32 %v3493, 4294901760
    %3495 = vmatpush.msra.mxu0 %v3494
    %v3496 = vand.u32 %v2541, 4294901760
    %v3497 = vsub.f32 %v2541, %v3496
    %v3498 = vand.u32 %v3497, 4294901760
    %3499 = vmatpush.msra.mxu0 %v3498
    %v3500 = vand.u32 %v2538, 4294901760
    %v3501 = vsub.f32 %v2538, %v3500
    %v3502 = vand.u32 %v3501, 4294901760
    %3503 = vmatpush.msra.mxu0 %v3502
    %v3504 = vand.u32 %v2535, 4294901760
    %v3505 = vsub.f32 %v2535, %v3504
    %v3506 = vand.u32 %v3505, 4294901760
    %3507 = vmatpush.msra.mxu0 %v3506
    %v3508 = vand.u32 %v2532, 4294901760
    %v3509 = vsub.f32 %v2532, %v3508
    %v3510 = vand.u32 %v3509, 4294901760
    %3511 = vmatpush.msra.mxu0 %v3510
    %v3512 = vand.u32 %v2529, 4294901760
    %v3513 = vsub.f32 %v2529, %v3512
    %v3514 = vand.u32 %v3513, 4294901760
    %3515 = vmatpush.msra.mxu0 %v3514
    %v3516 = vand.u32 %v2526, 4294901760
    %v3517 = vsub.f32 %v2526, %v3516
    %v3518 = vand.u32 %v3517, 4294901760
    %3519 = vmatpush.msra.mxu0 %v3518
    %v3520 = vand.u32 %v2523, 4294901760
    %v3521 = vsub.f32 %v2523, %v3520
    %v3522 = vand.u32 %v3521, 4294901760
    %3523 = vmatpush.msra.mxu0 %v3522
    %v3524 = vand.u32 %v2520, 4294901760
    %v3525 = vsub.f32 %v2520, %v3524
    %v3526 = vand.u32 %v3525, 4294901760
    %3527 = vmatpush.msra.mxu0 %v3526
    %v3528 = vand.u32 %v2517, 4294901760
    %v3529 = vsub.f32 %v2517, %v3528
    %v3530 = vand.u32 %v3529, 4294901760
    %3531 = vmatpush.msra.mxu0 %v3530
    %v3532 = vand.u32 %v2514, 4294901760
    %v3533 = vsub.f32 %v2514, %v3532
    %v3534 = vand.u32 %v3533, 4294901760
    %3535 = vmatpush.msra.mxu0 %v3534
    %v3536 = vand.u32 %v2511, 4294901760
    %v3537 = vsub.f32 %v2511, %v3536
    %v3538 = vand.u32 %v3537, 4294901760
    %3539 = vmatpush.msra.mxu0 %v3538
    %v3540 = vand.u32 %v2414, 4294901760
    %3541 = vmatmul.f32.gmra.mxu0 %v3540
    %v3542 = vpop.f32.mrf.mxu0
    %v3543 = vadd.f32 %v3474, %v3542
    %3544 = vdwg.mxu0
    %v3545 = vand.u32 %v2556, 4294901760
    %3546 = vmatpush.msra.mxu0 %v3545
    %v3547 = vand.u32 %v2553, 4294901760
    %3548 = vmatpush.msra.mxu0 %v3547
    %v3549 = vand.u32 %v2550, 4294901760
    %3550 = vmatpush.msra.mxu0 %v3549
    %v3551 = vand.u32 %v2547, 4294901760
    %3552 = vmatpush.msra.mxu0 %v3551
    %v3553 = vand.u32 %v2544, 4294901760
    %3554 = vmatpush.msra.mxu0 %v3553
    %v3555 = vand.u32 %v2541, 4294901760
    %3556 = vmatpush.msra.mxu0 %v3555
    %v3557 = vand.u32 %v2538, 4294901760
    %3558 = vmatpush.msra.mxu0 %v3557
    %v3559 = vand.u32 %v2535, 4294901760
    %3560 = vmatpush.msra.mxu0 %v3559
    %v3561 = vand.u32 %v2532, 4294901760
    %3562 = vmatpush.msra.mxu0 %v3561
    %v3563 = vand.u32 %v2529, 4294901760
    %3564 = vmatpush.msra.mxu0 %v3563
    %v3565 = vand.u32 %v2526, 4294901760
    %3566 = vmatpush.msra.mxu0 %v3565
    %v3567 = vand.u32 %v2523, 4294901760
    %3568 = vmatpush.msra.mxu0 %v3567
    %v3569 = vand.u32 %v2520, 4294901760
    %3570 = vmatpush.msra.mxu0 %v3569
    %v3571 = vand.u32 %v2517, 4294901760
    %3572 = vmatpush.msra.mxu0 %v3571
    %v3573 = vand.u32 %v2514, 4294901760
    %3574 = vmatpush.msra.mxu0 %v3573
    %v3575 = vand.u32 %v2511, 4294901760
    %3576 = vmatpush.msra.mxu0 %v3575
    %v3577 = vand.u32 %v2414, 4294901760
    %3578 = vmatmul.f32.gmra.mxu0 %v3577
    %v3579 = vpop.f32.mrf.mxu0
    %v3580 = vadd.f32 %v3543, %v3579
    %3581 = vdwg.mxu0
    %v3582 = vand.u32 %v2461, 4294901760
    %3583 = vmatpush.msra.mxu0 %v3582
    %v3584 = vand.u32 %v2458, 4294901760
    %3585 = vmatpush.msra.mxu0 %v3584
    %v3586 = vand.u32 %v2455, 4294901760
    %3587 = vmatpush.msra.mxu0 %v3586
    %v3588 = vand.u32 %v2452, 4294901760
    %3589 = vmatpush.msra.mxu0 %v3588
    %v3590 = vand.u32 %v2449, 4294901760
    %3591 = vmatpush.msra.mxu0 %v3590
    %v3592 = vand.u32 %v2446, 4294901760
    %3593 = vmatpush.msra.mxu0 %v3592
    %v3594 = vand.u32 %v2443, 4294901760
    %3595 = vmatpush.msra.mxu0 %v3594
    %v3596 = vand.u32 %v2440, 4294901760
    %3597 = vmatpush.msra.mxu0 %v3596
    %v3598 = vand.u32 %v2437, 4294901760
    %3599 = vmatpush.msra.mxu0 %v3598
    %v3600 = vand.u32 %v2434, 4294901760
    %3601 = vmatpush.msra.mxu0 %v3600
    %v3602 = vand.u32 %v2431, 4294901760
    %3603 = vmatpush.msra.mxu0 %v3602
    %v3604 = vand.u32 %v2428, 4294901760
    %3605 = vmatpush.msra.mxu0 %v3604
    %v3606 = vand.u32 %v2425, 4294901760
    %3607 = vmatpush.msra.mxu0 %v3606
    %v3608 = vand.u32 %v2422, 4294901760
    %3609 = vmatpush.msra.mxu0 %v3608
    %v3610 = vand.u32 %v2419, 4294901760
    %3611 = vmatpush.msra.mxu0 %v3610
    %v3612 = vand.u32 %v2416, 4294901760
    %3613 = vmatpush.msra.mxu0 %v3612
    %v3614 = vand.u32 %v2412, 4294901760
    %v3615 = vsub.f32 %v2412, %v3614
    %v3616 = vand.u32 %v3615, 4294901760
    %v3617 = vsub.f32 %v3615, %v3616
    %v3618 = vand.u32 %v3617, 4294901760
    %3619 = vmatmul.f32.gmra.mxu0 %v3618
    %v3620 = vpop.f32.mrf.mxu0
    %v3621 = vadd.f32 0.0, %v3620
    %3622 = vdwg.mxu0
    %v3623 = vand.u32 %v2461, 4294901760
    %v3624 = vsub.f32 %v2461, %v3623
    %v3625 = vand.u32 %v3624, 4294901760
    %v3626 = vsub.f32 %v3624, %v3625
    %v3627 = vand.u32 %v3626, 4294901760
    %3628 = vmatpush.msra.mxu0 %v3627
    %v3629 = vand.u32 %v2458, 4294901760
    %v3630 = vsub.f32 %v2458, %v3629
    %v3631 = vand.u32 %v3630, 4294901760
    %v3632 = vsub.f32 %v3630, %v3631
    %v3633 = vand.u32 %v3632, 4294901760
    %3634 = vmatpush.msra.mxu0 %v3633
    %v3635 = vand.u32 %v2455, 4294901760
    %v3636 = vsub.f32 %v2455, %v3635
    %v3637 = vand.u32 %v3636, 4294901760
    %v3638 = vsub.f32 %v3636, %v3637
    %v3639 = vand.u32 %v3638, 4294901760
    %3640 = vmatpush.msra.mxu0 %v3639
    %v3641 = vand.u32 %v2452, 4294901760
    %v3642 = vsub.f32 %v2452, %v3641
    %v3643 = vand.u32 %v3642, 4294901760
    %v3644 = vsub.f32 %v3642, %v3643
    %v3645 = vand.u32 %v3644, 4294901760
    %3646 = vmatpush.msra.mxu0 %v3645
    %v3647 = vand.u32 %v2449, 4294901760
    %v3648 = vsub.f32 %v2449, %v3647
    %v3649 = vand.u32 %v3648, 4294901760
    %v3650 = vsub.f32 %v3648, %v3649
    %v3651 = vand.u32 %v3650, 4294901760
    %3652 = vmatpush.msra.mxu0 %v3651
    %v3653 = vand.u32 %v2446, 4294901760
    %v3654 = vsub.f32 %v2446, %v3653
    %v3655 = vand.u32 %v3654, 4294901760
    %v3656 = vsub.f32 %v3654, %v3655
    %v3657 = vand.u32 %v3656, 4294901760
    %3658 = vmatpush.msra.mxu0 %v3657
    %v3659 = vand.u32 %v2443, 4294901760
    %v3660 = vsub.f32 %v2443, %v3659
    %v3661 = vand.u32 %v3660, 4294901760
    %v3662 = vsub.f32 %v3660, %v3661
    %v3663 = vand.u32 %v3662, 4294901760
    %3664 = vmatpush.msra.mxu0 %v3663
    %v3665 = vand.u32 %v2440, 4294901760
    %v3666 = vsub.f32 %v2440, %v3665
    %v3667 = vand.u32 %v3666, 4294901760
    %v3668 = vsub.f32 %v3666, %v3667
    %v3669 = vand.u32 %v3668, 4294901760
    %3670 = vmatpush.msra.mxu0 %v3669
    %v3671 = vand.u32 %v2437, 4294901760
    %v3672 = vsub.f32 %v2437, %v3671
    %v3673 = vand.u32 %v3672, 4294901760
    %v3674 = vsub.f32 %v3672, %v3673
    %v3675 = vand.u32 %v3674, 4294901760
    %3676 = vmatpush.msra.mxu0 %v3675
    %v3677 = vand.u32 %v2434, 4294901760
    %v3678 = vsub.f32 %v2434, %v3677
    %v3679 = vand.u32 %v3678, 4294901760
    %v3680 = vsub.f32 %v3678, %v3679
    %v3681 = vand.u32 %v3680, 4294901760
    %3682 = vmatpush.msra.mxu0 %v3681
    %v3683 = vand.u32 %v2431, 4294901760
    %v3684 = vsub.f32 %v2431, %v3683
    %v3685 = vand.u32 %v3684, 4294901760
    %v3686 = vsub.f32 %v3684, %v3685
    %v3687 = vand.u32 %v3686, 4294901760
    %3688 = vmatpush.msra.mxu0 %v3687
    %v3689 = vand.u32 %v2428, 4294901760
    %v3690 = vsub.f32 %v2428, %v3689
    %v3691 = vand.u32 %v3690, 4294901760
    %v3692 = vsub.f32 %v3690, %v3691
    %v3693 = vand.u32 %v3692, 4294901760
    %3694 = vmatpush.msra.mxu0 %v3693
    %v3695 = vand.u32 %v2425, 4294901760
    %v3696 = vsub.f32 %v2425, %v3695
    %v3697 = vand.u32 %v3696, 4294901760
    %v3698 = vsub.f32 %v3696, %v3697
    %v3699 = vand.u32 %v3698, 4294901760
    %3700 = vmatpush.msra.mxu0 %v3699
    %v3701 = vand.u32 %v2422, 4294901760
    %v3702 = vsub.f32 %v2422, %v3701
    %v3703 = vand.u32 %v3702, 4294901760
    %v3704 = vsub.f32 %v3702, %v3703
    %v3705 = vand.u32 %v3704, 4294901760
    %3706 = vmatpush.msra.mxu0 %v3705
    %v3707 = vand.u32 %v2419, 4294901760
    %v3708 = vsub.f32 %v2419, %v3707
    %v3709 = vand.u32 %v3708, 4294901760
    %v3710 = vsub.f32 %v3708, %v3709
    %v3711 = vand.u32 %v3710, 4294901760
    %3712 = vmatpush.msra.mxu0 %v3711
    %v3713 = vand.u32 %v2416, 4294901760
    %v3714 = vsub.f32 %v2416, %v3713
    %v3715 = vand.u32 %v3714, 4294901760
    %v3716 = vsub.f32 %v3714, %v3715
    %v3717 = vand.u32 %v3716, 4294901760
    %3718 = vmatpush.msra.mxu0 %v3717
    %v3719 = vand.u32 %v2412, 4294901760
    %3720 = vmatmul.f32.gmra.mxu0 %v3719
    %v3721 = vpop.f32.mrf.mxu0
    %v3722 = vadd.f32 %v3621, %v3721
    %3723 = vdwg.mxu0
    %v3724 = vand.u32 %v2461, 4294901760
    %v3725 = vsub.f32 %v2461, %v3724
    %3726 = vmatpush.msra.mxu0 %v3725
    %v3727 = vand.u32 %v2458, 4294901760
    %v3728 = vsub.f32 %v2458, %v3727
    %3729 = vmatpush.msra.mxu0 %v3728
    %v3730 = vand.u32 %v2455, 4294901760
    %v3731 = vsub.f32 %v2455, %v3730
    %3732 = vmatpush.msra.mxu0 %v3731
    %v3733 = vand.u32 %v2452, 4294901760
    %v3734 = vsub.f32 %v2452, %v3733
    %3735 = vmatpush.msra.mxu0 %v3734
    %v3736 = vand.u32 %v2449, 4294901760
    %v3737 = vsub.f32 %v2449, %v3736
    %3738 = vmatpush.msra.mxu0 %v3737
    %v3739 = vand.u32 %v2446, 4294901760
    %v3740 = vsub.f32 %v2446, %v3739
    %3741 = vmatpush.msra.mxu0 %v3740
    %v3742 = vand.u32 %v2443, 4294901760
    %v3743 = vsub.f32 %v2443, %v3742
    %3744 = vmatpush.msra.mxu0 %v3743
    %v3745 = vand.u32 %v2440, 4294901760
    %v3746 = vsub.f32 %v2440, %v3745
    %3747 = vmatpush.msra.mxu0 %v3746
    %v3748 = vand.u32 %v2437, 4294901760
    %v3749 = vsub.f32 %v2437, %v3748
    %3750 = vmatpush.msra.mxu0 %v3749
    %v3751 = vand.u32 %v2434, 4294901760
    %v3752 = vsub.f32 %v2434, %v3751
    %3753 = vmatpush.msra.mxu0 %v3752
    %v3754 = vand.u32 %v2431, 4294901760
    %v3755 = vsub.f32 %v2431, %v3754
    %3756 = vmatpush.msra.mxu0 %v3755
    %v3757 = vand.u32 %v2428, 4294901760
    %v3758 = vsub.f32 %v2428, %v3757
    %3759 = vmatpush.msra.mxu0 %v3758
    %v3760 = vand.u32 %v2425, 4294901760
    %v3761 = vsub.f32 %v2425, %v3760
    %3762 = vmatpush.msra.mxu0 %v3761
    %v3763 = vand.u32 %v2422, 4294901760
    %v3764 = vsub.f32 %v2422, %v3763
    %3765 = vmatpush.msra.mxu0 %v3764
    %v3766 = vand.u32 %v2419, 4294901760
    %v3767 = vsub.f32 %v2419, %v3766
    %3768 = vmatpush.msra.mxu0 %v3767
    %v3769 = vand.u32 %v2416, 4294901760
    %v3770 = vsub.f32 %v2416, %v3769
    %3771 = vmatpush.msra.mxu0 %v3770
    %v3772 = vand.u32 %v2412, 4294901760
    %v3773 = vsub.f32 %v2412, %v3772
    %3774 = vmatmul.f32.gmra.mxu0 %v3773
    %v3775 = vpop.f32.mrf.mxu0
    %v3776 = vadd.f32 %v3722, %v3775
    %3777 = vdwg.mxu0
    %v3778 = vand.u32 %v2461, 4294901760
    %3779 = vmatpush.msra.mxu0 %v3778
    %v3780 = vand.u32 %v2458, 4294901760
    %3781 = vmatpush.msra.mxu0 %v3780
    %v3782 = vand.u32 %v2455, 4294901760
    %3783 = vmatpush.msra.mxu0 %v3782
    %v3784 = vand.u32 %v2452, 4294901760
    %3785 = vmatpush.msra.mxu0 %v3784
    %v3786 = vand.u32 %v2449, 4294901760
    %3787 = vmatpush.msra.mxu0 %v3786
    %v3788 = vand.u32 %v2446, 4294901760
    %3789 = vmatpush.msra.mxu0 %v3788
    %v3790 = vand.u32 %v2443, 4294901760
    %3791 = vmatpush.msra.mxu0 %v3790
    %v3792 = vand.u32 %v2440, 4294901760
    %3793 = vmatpush.msra.mxu0 %v3792
    %v3794 = vand.u32 %v2437, 4294901760
    %3795 = vmatpush.msra.mxu0 %v3794
    %v3796 = vand.u32 %v2434, 4294901760
    %3797 = vmatpush.msra.mxu0 %v3796
    %v3798 = vand.u32 %v2431, 4294901760
    %3799 = vmatpush.msra.mxu0 %v3798
    %v3800 = vand.u32 %v2428, 4294901760
    %3801 = vmatpush.msra.mxu0 %v3800
    %v3802 = vand.u32 %v2425, 4294901760
    %3803 = vmatpush.msra.mxu0 %v3802
    %v3804 = vand.u32 %v2422, 4294901760
    %3805 = vmatpush.msra.mxu0 %v3804
    %v3806 = vand.u32 %v2419, 4294901760
    %3807 = vmatpush.msra.mxu0 %v3806
    %v3808 = vand.u32 %v2416, 4294901760
    %3809 = vmatpush.msra.mxu0 %v3808
    %v3810 = vand.u32 %v2412, 4294901760
    %v3811 = vsub.f32 %v2412, %v3810
    %v3812 = vand.u32 %v3811, 4294901760
    %3813 = vmatmul.f32.gmra.mxu0 %v3812
    %v3814 = vpop.f32.mrf.mxu0
    %v3815 = vadd.f32 %v3776, %v3814
    %3816 = vdwg.mxu0
    %v3817 = vand.u32 %v2461, 4294901760
    %v3818 = vsub.f32 %v2461, %v3817
    %v3819 = vand.u32 %v3818, 4294901760
    %3820 = vmatpush.msra.mxu0 %v3819
    %v3821 = vand.u32 %v2458, 4294901760
    %v3822 = vsub.f32 %v2458, %v3821
    %v3823 = vand.u32 %v3822, 4294901760
    %3824 = vmatpush.msra.mxu0 %v3823
    %v3825 = vand.u32 %v2455, 4294901760
    %v3826 = vsub.f32 %v2455, %v3825
    %v3827 = vand.u32 %v3826, 4294901760
    %3828 = vmatpush.msra.mxu0 %v3827
    %v3829 = vand.u32 %v2452, 4294901760
    %v3830 = vsub.f32 %v2452, %v3829
    %v3831 = vand.u32 %v3830, 4294901760
    %3832 = vmatpush.msra.mxu0 %v3831
    %v3833 = vand.u32 %v2449, 4294901760
    %v3834 = vsub.f32 %v2449, %v3833
    %v3835 = vand.u32 %v3834, 4294901760
    %3836 = vmatpush.msra.mxu0 %v3835
    %v3837 = vand.u32 %v2446, 4294901760
    %v3838 = vsub.f32 %v2446, %v3837
    %v3839 = vand.u32 %v3838, 4294901760
    %3840 = vmatpush.msra.mxu0 %v3839
    %v3841 = vand.u32 %v2443, 4294901760
    %v3842 = vsub.f32 %v2443, %v3841
    %v3843 = vand.u32 %v3842, 4294901760
    %3844 = vmatpush.msra.mxu0 %v3843
    %v3845 = vand.u32 %v2440, 4294901760
    %v3846 = vsub.f32 %v2440, %v3845
    %v3847 = vand.u32 %v3846, 4294901760
    %3848 = vmatpush.msra.mxu0 %v3847
    %v3849 = vand.u32 %v2437, 4294901760
    %v3850 = vsub.f32 %v2437, %v3849
    %v3851 = vand.u32 %v3850, 4294901760
    %3852 = vmatpush.msra.mxu0 %v3851
    %v3853 = vand.u32 %v2434, 4294901760
    %v3854 = vsub.f32 %v2434, %v3853
    %v3855 = vand.u32 %v3854, 4294901760
    %3856 = vmatpush.msra.mxu0 %v3855
    %v3857 = vand.u32 %v2431, 4294901760
    %v3858 = vsub.f32 %v2431, %v3857
    %v3859 = vand.u32 %v3858, 4294901760
    %3860 = vmatpush.msra.mxu0 %v3859
    %v3861 = vand.u32 %v2428, 4294901760
    %v3862 = vsub.f32 %v2428, %v3861
    %v3863 = vand.u32 %v3862, 4294901760
    %3864 = vmatpush.msra.mxu0 %v3863
    %v3865 = vand.u32 %v2425, 4294901760
    %v3866 = vsub.f32 %v2425, %v3865
    %v3867 = vand.u32 %v3866, 4294901760
    %3868 = vmatpush.msra.mxu0 %v3867
    %v3869 = vand.u32 %v2422, 4294901760
    %v3870 = vsub.f32 %v2422, %v3869
    %v3871 = vand.u32 %v3870, 4294901760
    %3872 = vmatpush.msra.mxu0 %v3871
    %v3873 = vand.u32 %v2419, 4294901760
    %v3874 = vsub.f32 %v2419, %v3873
    %v3875 = vand.u32 %v3874, 4294901760
    %3876 = vmatpush.msra.mxu0 %v3875
    %v3877 = vand.u32 %v2416, 4294901760
    %v3878 = vsub.f32 %v2416, %v3877
    %v3879 = vand.u32 %v3878, 4294901760
    %3880 = vmatpush.msra.mxu0 %v3879
    %v3881 = vand.u32 %v2412, 4294901760
    %3882 = vmatmul.f32.gmra.mxu0 %v3881
    %v3883 = vpop.f32.mrf.mxu0
    %v3884 = vadd.f32 %v3815, %v3883
    %3885 = vdwg.mxu0
    %v3886 = vand.u32 %v2461, 4294901760
    %3887 = vmatpush.msra.mxu0 %v3886
    %v3888 = vand.u32 %v2458, 4294901760
    %3889 = vmatpush.msra.mxu0 %v3888
    %v3890 = vand.u32 %v2455, 4294901760
    %3891 = vmatpush.msra.mxu0 %v3890
    %v3892 = vand.u32 %v2452, 4294901760
    %3893 = vmatpush.msra.mxu0 %v3892
    %v3894 = vand.u32 %v2449, 4294901760
    %3895 = vmatpush.msra.mxu0 %v3894
    %v3896 = vand.u32 %v2446, 4294901760
    %3897 = vmatpush.msra.mxu0 %v3896
    %v3898 = vand.u32 %v2443, 4294901760
    %3899 = vmatpush.msra.mxu0 %v3898
    %v3900 = vand.u32 %v2440, 4294901760
    %3901 = vmatpush.msra.mxu0 %v3900
    %v3902 = vand.u32 %v2437, 4294901760
    %3903 = vmatpush.msra.mxu0 %v3902
    %v3904 = vand.u32 %v2434, 4294901760
    %3905 = vmatpush.msra.mxu0 %v3904
    %v3906 = vand.u32 %v2431, 4294901760
    %3907 = vmatpush.msra.mxu0 %v3906
    %v3908 = vand.u32 %v2428, 4294901760
    %3909 = vmatpush.msra.mxu0 %v3908
    %v3910 = vand.u32 %v2425, 4294901760
    %3911 = vmatpush.msra.mxu0 %v3910
    %v3912 = vand.u32 %v2422, 4294901760
    %3913 = vmatpush.msra.mxu0 %v3912
    %v3914 = vand.u32 %v2419, 4294901760
    %3915 = vmatpush.msra.mxu0 %v3914
    %v3916 = vand.u32 %v2416, 4294901760
    %3917 = vmatpush.msra.mxu0 %v3916
    %v3918 = vand.u32 %v2412, 4294901760
    %3919 = vmatmul.f32.gmra.mxu0 %v3918
    %v3920 = vpop.f32.mrf.mxu0
    %v3921 = vadd.f32 %v3884, %v3920
    %3922 = vdwg.mxu0
    %v3923 = vand.u32 %v2509, 4294901760
    %3924 = vmatpush.msra.mxu0 %v3923
    %v3925 = vand.u32 %v2506, 4294901760
    %3926 = vmatpush.msra.mxu0 %v3925
    %v3927 = vand.u32 %v2503, 4294901760
    %3928 = vmatpush.msra.mxu0 %v3927
    %v3929 = vand.u32 %v2500, 4294901760
    %3930 = vmatpush.msra.mxu0 %v3929
    %v3931 = vand.u32 %v2497, 4294901760
    %3932 = vmatpush.msra.mxu0 %v3931
    %v3933 = vand.u32 %v2494, 4294901760
    %3934 = vmatpush.msra.mxu0 %v3933
    %v3935 = vand.u32 %v2491, 4294901760
    %3936 = vmatpush.msra.mxu0 %v3935
    %v3937 = vand.u32 %v2488, 4294901760
    %3938 = vmatpush.msra.mxu0 %v3937
    %v3939 = vand.u32 %v2485, 4294901760
    %3940 = vmatpush.msra.mxu0 %v3939
    %v3941 = vand.u32 %v2482, 4294901760
    %3942 = vmatpush.msra.mxu0 %v3941
    %v3943 = vand.u32 %v2479, 4294901760
    %3944 = vmatpush.msra.mxu0 %v3943
    %v3945 = vand.u32 %v2476, 4294901760
    %3946 = vmatpush.msra.mxu0 %v3945
    %v3947 = vand.u32 %v2473, 4294901760
    %3948 = vmatpush.msra.mxu0 %v3947
    %v3949 = vand.u32 %v2470, 4294901760
    %3950 = vmatpush.msra.mxu0 %v3949
    %v3951 = vand.u32 %v2467, 4294901760
    %3952 = vmatpush.msra.mxu0 %v3951
    %v3953 = vand.u32 %v2464, 4294901760
    %3954 = vmatpush.msra.mxu0 %v3953
    %v3955 = vand.u32 %v2413, 4294901760
    %v3956 = vsub.f32 %v2413, %v3955
    %v3957 = vand.u32 %v3956, 4294901760
    %v3958 = vsub.f32 %v3956, %v3957
    %v3959 = vand.u32 %v3958, 4294901760
    %3960 = vmatmul.f32.gmra.mxu0 %v3959
    %v3961 = vpop.f32.mrf.mxu0
    %v3962 = vadd.f32 %v3921, %v3961
    %3963 = vdwg.mxu0
    %v3964 = vand.u32 %v2509, 4294901760
    %v3965 = vsub.f32 %v2509, %v3964
    %v3966 = vand.u32 %v3965, 4294901760
    %v3967 = vsub.f32 %v3965, %v3966
    %v3968 = vand.u32 %v3967, 4294901760
    %3969 = vmatpush.msra.mxu0 %v3968
    %v3970 = vand.u32 %v2506, 4294901760
    %v3971 = vsub.f32 %v2506, %v3970
    %v3972 = vand.u32 %v3971, 4294901760
    %v3973 = vsub.f32 %v3971, %v3972
    %v3974 = vand.u32 %v3973, 4294901760
    %3975 = vmatpush.msra.mxu0 %v3974
    %v3976 = vand.u32 %v2503, 4294901760
    %v3977 = vsub.f32 %v2503, %v3976
    %v3978 = vand.u32 %v3977, 4294901760
    %v3979 = vsub.f32 %v3977, %v3978
    %v3980 = vand.u32 %v3979, 4294901760
    %3981 = vmatpush.msra.mxu0 %v3980
    %v3982 = vand.u32 %v2500, 4294901760
    %v3983 = vsub.f32 %v2500, %v3982
    %v3984 = vand.u32 %v3983, 4294901760
    %v3985 = vsub.f32 %v3983, %v3984
    %v3986 = vand.u32 %v3985, 4294901760
    %3987 = vmatpush.msra.mxu0 %v3986
    %v3988 = vand.u32 %v2497, 4294901760
    %v3989 = vsub.f32 %v2497, %v3988
    %v3990 = vand.u32 %v3989, 4294901760
    %v3991 = vsub.f32 %v3989, %v3990
    %v3992 = vand.u32 %v3991, 4294901760
    %3993 = vmatpush.msra.mxu0 %v3992
    %v3994 = vand.u32 %v2494, 4294901760
    %v3995 = vsub.f32 %v2494, %v3994
    %v3996 = vand.u32 %v3995, 4294901760
    %v3997 = vsub.f32 %v3995, %v3996
    %v3998 = vand.u32 %v3997, 4294901760
    %3999 = vmatpush.msra.mxu0 %v3998
    %v4000 = vand.u32 %v2491, 4294901760
    %v4001 = vsub.f32 %v2491, %v4000
    %v4002 = vand.u32 %v4001, 4294901760
    %v4003 = vsub.f32 %v4001, %v4002
    %v4004 = vand.u32 %v4003, 4294901760
    %4005 = vmatpush.msra.mxu0 %v4004
    %v4006 = vand.u32 %v2488, 4294901760
    %v4007 = vsub.f32 %v2488, %v4006
    %v4008 = vand.u32 %v4007, 4294901760
    %v4009 = vsub.f32 %v4007, %v4008
    %v4010 = vand.u32 %v4009, 4294901760
    %4011 = vmatpush.msra.mxu0 %v4010
    %v4012 = vand.u32 %v2485, 4294901760
    %v4013 = vsub.f32 %v2485, %v4012
    %v4014 = vand.u32 %v4013, 4294901760
    %v4015 = vsub.f32 %v4013, %v4014
    %v4016 = vand.u32 %v4015, 4294901760
    %4017 = vmatpush.msra.mxu0 %v4016
    %v4018 = vand.u32 %v2482, 4294901760
    %v4019 = vsub.f32 %v2482, %v4018
    %v4020 = vand.u32 %v4019, 4294901760
    %v4021 = vsub.f32 %v4019, %v4020
    %v4022 = vand.u32 %v4021, 4294901760
    %4023 = vmatpush.msra.mxu0 %v4022
    %v4024 = vand.u32 %v2479, 4294901760
    %v4025 = vsub.f32 %v2479, %v4024
    %v4026 = vand.u32 %v4025, 4294901760
    %v4027 = vsub.f32 %v4025, %v4026
    %v4028 = vand.u32 %v4027, 4294901760
    %4029 = vmatpush.msra.mxu0 %v4028
    %v4030 = vand.u32 %v2476, 4294901760
    %v4031 = vsub.f32 %v2476, %v4030
    %v4032 = vand.u32 %v4031, 4294901760
    %v4033 = vsub.f32 %v4031, %v4032
    %v4034 = vand.u32 %v4033, 4294901760
    %4035 = vmatpush.msra.mxu0 %v4034
    %v4036 = vand.u32 %v2473, 4294901760
    %v4037 = vsub.f32 %v2473, %v4036
    %v4038 = vand.u32 %v4037, 4294901760
    %v4039 = vsub.f32 %v4037, %v4038
    %v4040 = vand.u32 %v4039, 4294901760
    %4041 = vmatpush.msra.mxu0 %v4040
    %v4042 = vand.u32 %v2470, 4294901760
    %v4043 = vsub.f32 %v2470, %v4042
    %v4044 = vand.u32 %v4043, 4294901760
    %v4045 = vsub.f32 %v4043, %v4044
    %v4046 = vand.u32 %v4045, 4294901760
    %4047 = vmatpush.msra.mxu0 %v4046
    %v4048 = vand.u32 %v2467, 4294901760
    %v4049 = vsub.f32 %v2467, %v4048
    %v4050 = vand.u32 %v4049, 4294901760
    %v4051 = vsub.f32 %v4049, %v4050
    %v4052 = vand.u32 %v4051, 4294901760
    %4053 = vmatpush.msra.mxu0 %v4052
    %v4054 = vand.u32 %v2464, 4294901760
    %v4055 = vsub.f32 %v2464, %v4054
    %v4056 = vand.u32 %v4055, 4294901760
    %v4057 = vsub.f32 %v4055, %v4056
    %v4058 = vand.u32 %v4057, 4294901760
    %4059 = vmatpush.msra.mxu0 %v4058
    %v4060 = vand.u32 %v2413, 4294901760
    %4061 = vmatmul.f32.gmra.mxu0 %v4060
    %v4062 = vpop.f32.mrf.mxu0
    %v4063 = vadd.f32 %v3962, %v4062
    %4064 = vdwg.mxu0
    %v4065 = vand.u32 %v2509, 4294901760
    %v4066 = vsub.f32 %v2509, %v4065
    %4067 = vmatpush.msra.mxu0 %v4066
    %v4068 = vand.u32 %v2506, 4294901760
    %v4069 = vsub.f32 %v2506, %v4068
    %4070 = vmatpush.msra.mxu0 %v4069
    %v4071 = vand.u32 %v2503, 4294901760
    %v4072 = vsub.f32 %v2503, %v4071
    %4073 = vmatpush.msra.mxu0 %v4072
    %v4074 = vand.u32 %v2500, 4294901760
    %v4075 = vsub.f32 %v2500, %v4074
    %4076 = vmatpush.msra.mxu0 %v4075
    %v4077 = vand.u32 %v2497, 4294901760
    %v4078 = vsub.f32 %v2497, %v4077
    %4079 = vmatpush.msra.mxu0 %v4078
    %v4080 = vand.u32 %v2494, 4294901760
    %v4081 = vsub.f32 %v2494, %v4080
    %4082 = vmatpush.msra.mxu0 %v4081
    %v4083 = vand.u32 %v2491, 4294901760
    %v4084 = vsub.f32 %v2491, %v4083
    %4085 = vmatpush.msra.mxu0 %v4084
    %v4086 = vand.u32 %v2488, 4294901760
    %v4087 = vsub.f32 %v2488, %v4086
    %4088 = vmatpush.msra.mxu0 %v4087
    %v4089 = vand.u32 %v2485, 4294901760
    %v4090 = vsub.f32 %v2485, %v4089
    %4091 = vmatpush.msra.mxu0 %v4090
    %v4092 = vand.u32 %v2482, 4294901760
    %v4093 = vsub.f32 %v2482, %v4092
    %4094 = vmatpush.msra.mxu0 %v4093
    %v4095 = vand.u32 %v2479, 4294901760
    %v4096 = vsub.f32 %v2479, %v4095
    %4097 = vmatpush.msra.mxu0 %v4096
    %v4098 = vand.u32 %v2476, 4294901760
    %v4099 = vsub.f32 %v2476, %v4098
    %4100 = vmatpush.msra.mxu0 %v4099
    %v4101 = vand.u32 %v2473, 4294901760
    %v4102 = vsub.f32 %v2473, %v4101
    %4103 = vmatpush.msra.mxu0 %v4102
    %v4104 = vand.u32 %v2470, 4294901760
    %v4105 = vsub.f32 %v2470, %v4104
    %4106 = vmatpush.msra.mxu0 %v4105
    %v4107 = vand.u32 %v2467, 4294901760
    %v4108 = vsub.f32 %v2467, %v4107
    %4109 = vmatpush.msra.mxu0 %v4108
    %v4110 = vand.u32 %v2464, 4294901760
    %v4111 = vsub.f32 %v2464, %v4110
    %4112 = vmatpush.msra.mxu0 %v4111
    %v4113 = vand.u32 %v2413, 4294901760
    %v4114 = vsub.f32 %v2413, %v4113
    %4115 = vmatmul.f32.gmra.mxu0 %v4114
    %v4116 = vpop.f32.mrf.mxu0
    %v4117 = vadd.f32 %v4063, %v4116
    %4118 = vdwg.mxu0
    %v4119 = vand.u32 %v2509, 4294901760
    %4120 = vmatpush.msra.mxu0 %v4119
    %v4121 = vand.u32 %v2506, 4294901760
    %4122 = vmatpush.msra.mxu0 %v4121
    %v4123 = vand.u32 %v2503, 4294901760
    %4124 = vmatpush.msra.mxu0 %v4123
    %v4125 = vand.u32 %v2500, 4294901760
    %4126 = vmatpush.msra.mxu0 %v4125
    %v4127 = vand.u32 %v2497, 4294901760
    %4128 = vmatpush.msra.mxu0 %v4127
    %v4129 = vand.u32 %v2494, 4294901760
    %4130 = vmatpush.msra.mxu0 %v4129
    %v4131 = vand.u32 %v2491, 4294901760
    %4132 = vmatpush.msra.mxu0 %v4131
    %v4133 = vand.u32 %v2488, 4294901760
    %4134 = vmatpush.msra.mxu0 %v4133
    %v4135 = vand.u32 %v2485, 4294901760
    %4136 = vmatpush.msra.mxu0 %v4135
    %v4137 = vand.u32 %v2482, 4294901760
    %4138 = vmatpush.msra.mxu0 %v4137
    %v4139 = vand.u32 %v2479, 4294901760
    %4140 = vmatpush.msra.mxu0 %v4139
    %v4141 = vand.u32 %v2476, 4294901760
    %4142 = vmatpush.msra.mxu0 %v4141
    %v4143 = vand.u32 %v2473, 4294901760
    %4144 = vmatpush.msra.mxu0 %v4143
    %v4145 = vand.u32 %v2470, 4294901760
    %4146 = vmatpush.msra.mxu0 %v4145
    %v4147 = vand.u32 %v2467, 4294901760
    %4148 = vmatpush.msra.mxu0 %v4147
    %v4149 = vand.u32 %v2464, 4294901760
    %4150 = vmatpush.msra.mxu0 %v4149
    %v4151 = vand.u32 %v2413, 4294901760
    %v4152 = vsub.f32 %v2413, %v4151
    %v4153 = vand.u32 %v4152, 4294901760
    %4154 = vmatmul.f32.gmra.mxu0 %v4153
    %v4155 = vpop.f32.mrf.mxu0
    %v4156 = vadd.f32 %v4117, %v4155
    %4157 = vdwg.mxu0
    %v4158 = vand.u32 %v2509, 4294901760
    %v4159 = vsub.f32 %v2509, %v4158
    %v4160 = vand.u32 %v4159, 4294901760
    %4161 = vmatpush.msra.mxu0 %v4160
    %v4162 = vand.u32 %v2506, 4294901760
    %v4163 = vsub.f32 %v2506, %v4162
    %v4164 = vand.u32 %v4163, 4294901760
    %4165 = vmatpush.msra.mxu0 %v4164
    %v4166 = vand.u32 %v2503, 4294901760
    %v4167 = vsub.f32 %v2503, %v4166
    %v4168 = vand.u32 %v4167, 4294901760
    %4169 = vmatpush.msra.mxu0 %v4168
    %v4170 = vand.u32 %v2500, 4294901760
    %v4171 = vsub.f32 %v2500, %v4170
    %v4172 = vand.u32 %v4171, 4294901760
    %4173 = vmatpush.msra.mxu0 %v4172
    %v4174 = vand.u32 %v2497, 4294901760
    %v4175 = vsub.f32 %v2497, %v4174
    %v4176 = vand.u32 %v4175, 4294901760
    %4177 = vmatpush.msra.mxu0 %v4176
    %v4178 = vand.u32 %v2494, 4294901760
    %v4179 = vsub.f32 %v2494, %v4178
    %v4180 = vand.u32 %v4179, 4294901760
    %4181 = vmatpush.msra.mxu0 %v4180
    %v4182 = vand.u32 %v2491, 4294901760
    %v4183 = vsub.f32 %v2491, %v4182
    %v4184 = vand.u32 %v4183, 4294901760
    %4185 = vmatpush.msra.mxu0 %v4184
    %v4186 = vand.u32 %v2488, 4294901760
    %v4187 = vsub.f32 %v2488, %v4186
    %v4188 = vand.u32 %v4187, 4294901760
    %4189 = vmatpush.msra.mxu0 %v4188
    %v4190 = vand.u32 %v2485, 4294901760
    %v4191 = vsub.f32 %v2485, %v4190
    %v4192 = vand.u32 %v4191, 4294901760
    %4193 = vmatpush.msra.mxu0 %v4192
    %v4194 = vand.u32 %v2482, 4294901760
    %v4195 = vsub.f32 %v2482, %v4194
    %v4196 = vand.u32 %v4195, 4294901760
    %4197 = vmatpush.msra.mxu0 %v4196
    %v4198 = vand.u32 %v2479, 4294901760
    %v4199 = vsub.f32 %v2479, %v4198
    %v4200 = vand.u32 %v4199, 4294901760
    %4201 = vmatpush.msra.mxu0 %v4200
    %v4202 = vand.u32 %v2476, 4294901760
    %v4203 = vsub.f32 %v2476, %v4202
    %v4204 = vand.u32 %v4203, 4294901760
    %4205 = vmatpush.msra.mxu0 %v4204
    %v4206 = vand.u32 %v2473, 4294901760
    %v4207 = vsub.f32 %v2473, %v4206
    %v4208 = vand.u32 %v4207, 4294901760
    %4209 = vmatpush.msra.mxu0 %v4208
    %v4210 = vand.u32 %v2470, 4294901760
    %v4211 = vsub.f32 %v2470, %v4210
    %v4212 = vand.u32 %v4211, 4294901760
    %4213 = vmatpush.msra.mxu0 %v4212
    %v4214 = vand.u32 %v2467, 4294901760
    %v4215 = vsub.f32 %v2467, %v4214
    %v4216 = vand.u32 %v4215, 4294901760
    %4217 = vmatpush.msra.mxu0 %v4216
    %v4218 = vand.u32 %v2464, 4294901760
    %v4219 = vsub.f32 %v2464, %v4218
    %v4220 = vand.u32 %v4219, 4294901760
    %4221 = vmatpush.msra.mxu0 %v4220
    %v4222 = vand.u32 %v2413, 4294901760
    %4223 = vmatmul.f32.gmra.mxu0 %v4222
    %v4224 = vpop.f32.mrf.mxu0
    %v4225 = vadd.f32 %v4156, %v4224
    %4226 = vdwg.mxu0
    %v4227 = vand.u32 %v2509, 4294901760
    %4228 = vmatpush.msra.mxu0 %v4227
    %v4229 = vand.u32 %v2506, 4294901760
    %4230 = vmatpush.msra.mxu0 %v4229
    %v4231 = vand.u32 %v2503, 4294901760
    %4232 = vmatpush.msra.mxu0 %v4231
    %v4233 = vand.u32 %v2500, 4294901760
    %4234 = vmatpush.msra.mxu0 %v4233
    %v4235 = vand.u32 %v2497, 4294901760
    %4236 = vmatpush.msra.mxu0 %v4235
    %v4237 = vand.u32 %v2494, 4294901760
    %4238 = vmatpush.msra.mxu0 %v4237
    %v4239 = vand.u32 %v2491, 4294901760
    %4240 = vmatpush.msra.mxu0 %v4239
    %v4241 = vand.u32 %v2488, 4294901760
    %4242 = vmatpush.msra.mxu0 %v4241
    %v4243 = vand.u32 %v2485, 4294901760
    %4244 = vmatpush.msra.mxu0 %v4243
    %v4245 = vand.u32 %v2482, 4294901760
    %4246 = vmatpush.msra.mxu0 %v4245
    %v4247 = vand.u32 %v2479, 4294901760
    %4248 = vmatpush.msra.mxu0 %v4247
    %v4249 = vand.u32 %v2476, 4294901760
    %4250 = vmatpush.msra.mxu0 %v4249
    %v4251 = vand.u32 %v2473, 4294901760
    %4252 = vmatpush.msra.mxu0 %v4251
    %v4253 = vand.u32 %v2470, 4294901760
    %4254 = vmatpush.msra.mxu0 %v4253
    %v4255 = vand.u32 %v2467, 4294901760
    %4256 = vmatpush.msra.mxu0 %v4255
    %v4257 = vand.u32 %v2464, 4294901760
    %4258 = vmatpush.msra.mxu0 %v4257
    %v4259 = vand.u32 %v2413, 4294901760
    %4260 = vmatmul.f32.gmra.mxu0 %v4259
    %v4261 = vpop.f32.mrf.mxu0
    %v4262 = vadd.f32 %v4225, %v4261
    %4263 = vdwg.mxu0
    %v4264 = vand.u32 %v2557, 4294901760
    %4265 = vmatpush.msra.mxu0 %v4264
    %v4266 = vand.u32 %v2554, 4294901760
    %4267 = vmatpush.msra.mxu0 %v4266
    %v4268 = vand.u32 %v2551, 4294901760
    %4269 = vmatpush.msra.mxu0 %v4268
    %v4270 = vand.u32 %v2548, 4294901760
    %4271 = vmatpush.msra.mxu0 %v4270
    %v4272 = vand.u32 %v2545, 4294901760
    %4273 = vmatpush.msra.mxu0 %v4272
    %v4274 = vand.u32 %v2542, 4294901760
    %4275 = vmatpush.msra.mxu0 %v4274
    %v4276 = vand.u32 %v2539, 4294901760
    %4277 = vmatpush.msra.mxu0 %v4276
    %v4278 = vand.u32 %v2536, 4294901760
    %4279 = vmatpush.msra.mxu0 %v4278
    %v4280 = vand.u32 %v2533, 4294901760
    %4281 = vmatpush.msra.mxu0 %v4280
    %v4282 = vand.u32 %v2530, 4294901760
    %4283 = vmatpush.msra.mxu0 %v4282
    %v4284 = vand.u32 %v2527, 4294901760
    %4285 = vmatpush.msra.mxu0 %v4284
    %v4286 = vand.u32 %v2524, 4294901760
    %4287 = vmatpush.msra.mxu0 %v4286
    %v4288 = vand.u32 %v2521, 4294901760
    %4289 = vmatpush.msra.mxu0 %v4288
    %v4290 = vand.u32 %v2518, 4294901760
    %4291 = vmatpush.msra.mxu0 %v4290
    %v4292 = vand.u32 %v2515, 4294901760
    %4293 = vmatpush.msra.mxu0 %v4292
    %v4294 = vand.u32 %v2512, 4294901760
    %4295 = vmatpush.msra.mxu0 %v4294
    %v4296 = vand.u32 %v2414, 4294901760
    %v4297 = vsub.f32 %v2414, %v4296
    %v4298 = vand.u32 %v4297, 4294901760
    %v4299 = vsub.f32 %v4297, %v4298
    %v4300 = vand.u32 %v4299, 4294901760
    %4301 = vmatmul.f32.gmra.mxu0 %v4300
    %v4302 = vpop.f32.mrf.mxu0
    %v4303 = vadd.f32 %v4262, %v4302
    %4304 = vdwg.mxu0
    %v4305 = vand.u32 %v2557, 4294901760
    %v4306 = vsub.f32 %v2557, %v4305
    %v4307 = vand.u32 %v4306, 4294901760
    %v4308 = vsub.f32 %v4306, %v4307
    %v4309 = vand.u32 %v4308, 4294901760
    %4310 = vmatpush.msra.mxu0 %v4309
    %v4311 = vand.u32 %v2554, 4294901760
    %v4312 = vsub.f32 %v2554, %v4311
    %v4313 = vand.u32 %v4312, 4294901760
    %v4314 = vsub.f32 %v4312, %v4313
    %v4315 = vand.u32 %v4314, 4294901760
    %4316 = vmatpush.msra.mxu0 %v4315
    %v4317 = vand.u32 %v2551, 4294901760
    %v4318 = vsub.f32 %v2551, %v4317
    %v4319 = vand.u32 %v4318, 4294901760
    %v4320 = vsub.f32 %v4318, %v4319
    %v4321 = vand.u32 %v4320, 4294901760
    %4322 = vmatpush.msra.mxu0 %v4321
    %v4323 = vand.u32 %v2548, 4294901760
    %v4324 = vsub.f32 %v2548, %v4323
    %v4325 = vand.u32 %v4324, 4294901760
    %v4326 = vsub.f32 %v4324, %v4325
    %v4327 = vand.u32 %v4326, 4294901760
    %4328 = vmatpush.msra.mxu0 %v4327
    %v4329 = vand.u32 %v2545, 4294901760
    %v4330 = vsub.f32 %v2545, %v4329
    %v4331 = vand.u32 %v4330, 4294901760
    %v4332 = vsub.f32 %v4330, %v4331
    %v4333 = vand.u32 %v4332, 4294901760
    %4334 = vmatpush.msra.mxu0 %v4333
    %v4335 = vand.u32 %v2542, 4294901760
    %v4336 = vsub.f32 %v2542, %v4335
    %v4337 = vand.u32 %v4336, 4294901760
    %v4338 = vsub.f32 %v4336, %v4337
    %v4339 = vand.u32 %v4338, 4294901760
    %4340 = vmatpush.msra.mxu0 %v4339
    %v4341 = vand.u32 %v2539, 4294901760
    %v4342 = vsub.f32 %v2539, %v4341
    %v4343 = vand.u32 %v4342, 4294901760
    %v4344 = vsub.f32 %v4342, %v4343
    %v4345 = vand.u32 %v4344, 4294901760
    %4346 = vmatpush.msra.mxu0 %v4345
    %v4347 = vand.u32 %v2536, 4294901760
    %v4348 = vsub.f32 %v2536, %v4347
    %v4349 = vand.u32 %v4348, 4294901760
    %v4350 = vsub.f32 %v4348, %v4349
    %v4351 = vand.u32 %v4350, 4294901760
    %4352 = vmatpush.msra.mxu0 %v4351
    %v4353 = vand.u32 %v2533, 4294901760
    %v4354 = vsub.f32 %v2533, %v4353
    %v4355 = vand.u32 %v4354, 4294901760
    %v4356 = vsub.f32 %v4354, %v4355
    %v4357 = vand.u32 %v4356, 4294901760
    %4358 = vmatpush.msra.mxu0 %v4357
    %v4359 = vand.u32 %v2530, 4294901760
    %v4360 = vsub.f32 %v2530, %v4359
    %v4361 = vand.u32 %v4360, 4294901760
    %v4362 = vsub.f32 %v4360, %v4361
    %v4363 = vand.u32 %v4362, 4294901760
    %4364 = vmatpush.msra.mxu0 %v4363
    %v4365 = vand.u32 %v2527, 4294901760
    %v4366 = vsub.f32 %v2527, %v4365
    %v4367 = vand.u32 %v4366, 4294901760
    %v4368 = vsub.f32 %v4366, %v4367
    %v4369 = vand.u32 %v4368, 4294901760
    %4370 = vmatpush.msra.mxu0 %v4369
    %v4371 = vand.u32 %v2524, 4294901760
    %v4372 = vsub.f32 %v2524, %v4371
    %v4373 = vand.u32 %v4372, 4294901760
    %v4374 = vsub.f32 %v4372, %v4373
    %v4375 = vand.u32 %v4374, 4294901760
    %4376 = vmatpush.msra.mxu0 %v4375
    %v4377 = vand.u32 %v2521, 4294901760
    %v4378 = vsub.f32 %v2521, %v4377
    %v4379 = vand.u32 %v4378, 4294901760
    %v4380 = vsub.f32 %v4378, %v4379
    %v4381 = vand.u32 %v4380, 4294901760
    %4382 = vmatpush.msra.mxu0 %v4381
    %v4383 = vand.u32 %v2518, 4294901760
    %v4384 = vsub.f32 %v2518, %v4383
    %v4385 = vand.u32 %v4384, 4294901760
    %v4386 = vsub.f32 %v4384, %v4385
    %v4387 = vand.u32 %v4386, 4294901760
    %4388 = vmatpush.msra.mxu0 %v4387
    %v4389 = vand.u32 %v2515, 4294901760
    %v4390 = vsub.f32 %v2515, %v4389
    %v4391 = vand.u32 %v4390, 4294901760
    %v4392 = vsub.f32 %v4390, %v4391
    %v4393 = vand.u32 %v4392, 4294901760
    %4394 = vmatpush.msra.mxu0 %v4393
    %v4395 = vand.u32 %v2512, 4294901760
    %v4396 = vsub.f32 %v2512, %v4395
    %v4397 = vand.u32 %v4396, 4294901760
    %v4398 = vsub.f32 %v4396, %v4397
    %v4399 = vand.u32 %v4398, 4294901760
    %4400 = vmatpush.msra.mxu0 %v4399
    %v4401 = vand.u32 %v2414, 4294901760
    %4402 = vmatmul.f32.gmra.mxu0 %v4401
    %v4403 = vpop.f32.mrf.mxu0
    %v4404 = vadd.f32 %v4303, %v4403
    %4405 = vdwg.mxu0
    %v4406 = vand.u32 %v2557, 4294901760
    %v4407 = vsub.f32 %v2557, %v4406
    %4408 = vmatpush.msra.mxu0 %v4407
    %v4409 = vand.u32 %v2554, 4294901760
    %v4410 = vsub.f32 %v2554, %v4409
    %4411 = vmatpush.msra.mxu0 %v4410
    %v4412 = vand.u32 %v2551, 4294901760
    %v4413 = vsub.f32 %v2551, %v4412
    %4414 = vmatpush.msra.mxu0 %v4413
    %v4415 = vand.u32 %v2548, 4294901760
    %v4416 = vsub.f32 %v2548, %v4415
    %4417 = vmatpush.msra.mxu0 %v4416
    %v4418 = vand.u32 %v2545, 4294901760
    %v4419 = vsub.f32 %v2545, %v4418
    %4420 = vmatpush.msra.mxu0 %v4419
    %v4421 = vand.u32 %v2542, 4294901760
    %v4422 = vsub.f32 %v2542, %v4421
    %4423 = vmatpush.msra.mxu0 %v4422
    %v4424 = vand.u32 %v2539, 4294901760
    %v4425 = vsub.f32 %v2539, %v4424
    %4426 = vmatpush.msra.mxu0 %v4425
    %v4427 = vand.u32 %v2536, 4294901760
    %v4428 = vsub.f32 %v2536, %v4427
    %4429 = vmatpush.msra.mxu0 %v4428
    %v4430 = vand.u32 %v2533, 4294901760
    %v4431 = vsub.f32 %v2533, %v4430
    %4432 = vmatpush.msra.mxu0 %v4431
    %v4433 = vand.u32 %v2530, 4294901760
    %v4434 = vsub.f32 %v2530, %v4433
    %4435 = vmatpush.msra.mxu0 %v4434
    %v4436 = vand.u32 %v2527, 4294901760
    %v4437 = vsub.f32 %v2527, %v4436
    %4438 = vmatpush.msra.mxu0 %v4437
    %v4439 = vand.u32 %v2524, 4294901760
    %v4440 = vsub.f32 %v2524, %v4439
    %4441 = vmatpush.msra.mxu0 %v4440
    %v4442 = vand.u32 %v2521, 4294901760
    %v4443 = vsub.f32 %v2521, %v4442
    %4444 = vmatpush.msra.mxu0 %v4443
    %v4445 = vand.u32 %v2518, 4294901760
    %v4446 = vsub.f32 %v2518, %v4445
    %4447 = vmatpush.msra.mxu0 %v4446
    %v4448 = vand.u32 %v2515, 4294901760
    %v4449 = vsub.f32 %v2515, %v4448
    %4450 = vmatpush.msra.mxu0 %v4449
    %v4451 = vand.u32 %v2512, 4294901760
    %v4452 = vsub.f32 %v2512, %v4451
    %4453 = vmatpush.msra.mxu0 %v4452
    %v4454 = vand.u32 %v2414, 4294901760
    %v4455 = vsub.f32 %v2414, %v4454
    %4456 = vmatmul.f32.gmra.mxu0 %v4455
    %v4457 = vpop.f32.mrf.mxu0
    %v4458 = vadd.f32 %v4404, %v4457
    %4459 = vdwg.mxu0
    %v4460 = vand.u32 %v2557, 4294901760
    %4461 = vmatpush.msra.mxu0 %v4460
    %v4462 = vand.u32 %v2554, 4294901760
    %4463 = vmatpush.msra.mxu0 %v4462
    %v4464 = vand.u32 %v2551, 4294901760
    %4465 = vmatpush.msra.mxu0 %v4464
    %v4466 = vand.u32 %v2548, 4294901760
    %4467 = vmatpush.msra.mxu0 %v4466
    %v4468 = vand.u32 %v2545, 4294901760
    %4469 = vmatpush.msra.mxu0 %v4468
    %v4470 = vand.u32 %v2542, 4294901760
    %4471 = vmatpush.msra.mxu0 %v4470
    %v4472 = vand.u32 %v2539, 4294901760
    %4473 = vmatpush.msra.mxu0 %v4472
    %v4474 = vand.u32 %v2536, 4294901760
    %4475 = vmatpush.msra.mxu0 %v4474
    %v4476 = vand.u32 %v2533, 4294901760
    %4477 = vmatpush.msra.mxu0 %v4476
    %v4478 = vand.u32 %v2530, 4294901760
    %4479 = vmatpush.msra.mxu0 %v4478
    %v4480 = vand.u32 %v2527, 4294901760
    %4481 = vmatpush.msra.mxu0 %v4480
    %v4482 = vand.u32 %v2524, 4294901760
    %4483 = vmatpush.msra.mxu0 %v4482
    %v4484 = vand.u32 %v2521, 4294901760
    %4485 = vmatpush.msra.mxu0 %v4484
    %v4486 = vand.u32 %v2518, 4294901760
    %4487 = vmatpush.msra.mxu0 %v4486
    %v4488 = vand.u32 %v2515, 4294901760
    %4489 = vmatpush.msra.mxu0 %v4488
    %v4490 = vand.u32 %v2512, 4294901760
    %4491 = vmatpush.msra.mxu0 %v4490
    %v4492 = vand.u32 %v2414, 4294901760
    %v4493 = vsub.f32 %v2414, %v4492
    %v4494 = vand.u32 %v4493, 4294901760
    %4495 = vmatmul.f32.gmra.mxu0 %v4494
    %v4496 = vpop.f32.mrf.mxu0
    %v4497 = vadd.f32 %v4458, %v4496
    %4498 = vdwg.mxu0
    %v4499 = vand.u32 %v2557, 4294901760
    %v4500 = vsub.f32 %v2557, %v4499
    %v4501 = vand.u32 %v4500, 4294901760
    %4502 = vmatpush.msra.mxu0 %v4501
    %v4503 = vand.u32 %v2554, 4294901760
    %v4504 = vsub.f32 %v2554, %v4503
    %v4505 = vand.u32 %v4504, 4294901760
    %4506 = vmatpush.msra.mxu0 %v4505
    %v4507 = vand.u32 %v2551, 4294901760
    %v4508 = vsub.f32 %v2551, %v4507
    %v4509 = vand.u32 %v4508, 4294901760
    %4510 = vmatpush.msra.mxu0 %v4509
    %v4511 = vand.u32 %v2548, 4294901760
    %v4512 = vsub.f32 %v2548, %v4511
    %v4513 = vand.u32 %v4512, 4294901760
    %4514 = vmatpush.msra.mxu0 %v4513
    %v4515 = vand.u32 %v2545, 4294901760
    %v4516 = vsub.f32 %v2545, %v4515
    %v4517 = vand.u32 %v4516, 4294901760
    %4518 = vmatpush.msra.mxu0 %v4517
    %v4519 = vand.u32 %v2542, 4294901760
    %v4520 = vsub.f32 %v2542, %v4519
    %v4521 = vand.u32 %v4520, 4294901760
    %4522 = vmatpush.msra.mxu0 %v4521
    %v4523 = vand.u32 %v2539, 4294901760
    %v4524 = vsub.f32 %v2539, %v4523
    %v4525 = vand.u32 %v4524, 4294901760
    %4526 = vmatpush.msra.mxu0 %v4525
    %v4527 = vand.u32 %v2536, 4294901760
    %v4528 = vsub.f32 %v2536, %v4527
    %v4529 = vand.u32 %v4528, 4294901760
    %4530 = vmatpush.msra.mxu0 %v4529
    %v4531 = vand.u32 %v2533, 4294901760
    %v4532 = vsub.f32 %v2533, %v4531
    %v4533 = vand.u32 %v4532, 4294901760
    %4534 = vmatpush.msra.mxu0 %v4533
    %v4535 = vand.u32 %v2530, 4294901760
    %v4536 = vsub.f32 %v2530, %v4535
    %v4537 = vand.u32 %v4536, 4294901760
    %4538 = vmatpush.msra.mxu0 %v4537
    %v4539 = vand.u32 %v2527, 4294901760
    %v4540 = vsub.f32 %v2527, %v4539
    %v4541 = vand.u32 %v4540, 4294901760
    %4542 = vmatpush.msra.mxu0 %v4541
    %v4543 = vand.u32 %v2524, 4294901760
    %v4544 = vsub.f32 %v2524, %v4543
    %v4545 = vand.u32 %v4544, 4294901760
    %4546 = vmatpush.msra.mxu0 %v4545
    %v4547 = vand.u32 %v2521, 4294901760
    %v4548 = vsub.f32 %v2521, %v4547
    %v4549 = vand.u32 %v4548, 4294901760
    %4550 = vmatpush.msra.mxu0 %v4549
    %v4551 = vand.u32 %v2518, 4294901760
    %v4552 = vsub.f32 %v2518, %v4551
    %v4553 = vand.u32 %v4552, 4294901760
    %4554 = vmatpush.msra.mxu0 %v4553
    %v4555 = vand.u32 %v2515, 4294901760
    %v4556 = vsub.f32 %v2515, %v4555
    %v4557 = vand.u32 %v4556, 4294901760
    %4558 = vmatpush.msra.mxu0 %v4557
    %v4559 = vand.u32 %v2512, 4294901760
    %v4560 = vsub.f32 %v2512, %v4559
    %v4561 = vand.u32 %v4560, 4294901760
    %4562 = vmatpush.msra.mxu0 %v4561
    %v4563 = vand.u32 %v2414, 4294901760
    %4564 = vmatmul.f32.gmra.mxu0 %v4563
    %v4565 = vpop.f32.mrf.mxu0
    %v4566 = vadd.f32 %v4497, %v4565
    %4567 = vdwg.mxu0
    %v4568 = vand.u32 %v2557, 4294901760
    %4569 = vmatpush.msra.mxu0 %v4568
    %v4570 = vand.u32 %v2554, 4294901760
    %4571 = vmatpush.msra.mxu0 %v4570
    %v4572 = vand.u32 %v2551, 4294901760
    %4573 = vmatpush.msra.mxu0 %v4572
    %v4574 = vand.u32 %v2548, 4294901760
    %4575 = vmatpush.msra.mxu0 %v4574
    %v4576 = vand.u32 %v2545, 4294901760
    %4577 = vmatpush.msra.mxu0 %v4576
    %v4578 = vand.u32 %v2542, 4294901760
    %4579 = vmatpush.msra.mxu0 %v4578
    %v4580 = vand.u32 %v2539, 4294901760
    %4581 = vmatpush.msra.mxu0 %v4580
    %v4582 = vand.u32 %v2536, 4294901760
    %4583 = vmatpush.msra.mxu0 %v4582
    %v4584 = vand.u32 %v2533, 4294901760
    %4585 = vmatpush.msra.mxu0 %v4584
    %v4586 = vand.u32 %v2530, 4294901760
    %4587 = vmatpush.msra.mxu0 %v4586
    %v4588 = vand.u32 %v2527, 4294901760
    %4589 = vmatpush.msra.mxu0 %v4588
    %v4590 = vand.u32 %v2524, 4294901760
    %4591 = vmatpush.msra.mxu0 %v4590
    %v4592 = vand.u32 %v2521, 4294901760
    %4593 = vmatpush.msra.mxu0 %v4592
    %v4594 = vand.u32 %v2518, 4294901760
    %4595 = vmatpush.msra.mxu0 %v4594
    %v4596 = vand.u32 %v2515, 4294901760
    %4597 = vmatpush.msra.mxu0 %v4596
    %v4598 = vand.u32 %v2512, 4294901760
    %4599 = vmatpush.msra.mxu0 %v4598
    %v4600 = vand.u32 %v2414, 4294901760
    %4601 = vmatmul.f32.gmra.mxu0 %v4600
    %v4602 = vpop.f32.mrf.mxu0
    %v4603 = vadd.f32 %v4566, %v4602
    %4604 = vdwg.mxu0
    %v4605 = vand.u32 %v2462, 4294901760
    %4606 = vmatpush.msra.mxu0 %v4605
    %v4607 = vand.u32 %v2459, 4294901760
    %4608 = vmatpush.msra.mxu0 %v4607
    %v4609 = vand.u32 %v2456, 4294901760
    %4610 = vmatpush.msra.mxu0 %v4609
    %v4611 = vand.u32 %v2453, 4294901760
    %4612 = vmatpush.msra.mxu0 %v4611
    %v4613 = vand.u32 %v2450, 4294901760
    %4614 = vmatpush.msra.mxu0 %v4613
    %v4615 = vand.u32 %v2447, 4294901760
    %4616 = vmatpush.msra.mxu0 %v4615
    %v4617 = vand.u32 %v2444, 4294901760
    %4618 = vmatpush.msra.mxu0 %v4617
    %v4619 = vand.u32 %v2441, 4294901760
    %4620 = vmatpush.msra.mxu0 %v4619
    %v4621 = vand.u32 %v2438, 4294901760
    %4622 = vmatpush.msra.mxu0 %v4621
    %v4623 = vand.u32 %v2435, 4294901760
    %4624 = vmatpush.msra.mxu0 %v4623
    %v4625 = vand.u32 %v2432, 4294901760
    %4626 = vmatpush.msra.mxu0 %v4625
    %v4627 = vand.u32 %v2429, 4294901760
    %4628 = vmatpush.msra.mxu0 %v4627
    %v4629 = vand.u32 %v2426, 4294901760
    %4630 = vmatpush.msra.mxu0 %v4629
    %v4631 = vand.u32 %v2423, 4294901760
    %4632 = vmatpush.msra.mxu0 %v4631
    %v4633 = vand.u32 %v2420, 4294901760
    %4634 = vmatpush.msra.mxu0 %v4633
    %v4635 = vand.u32 %v2417, 4294901760
    %4636 = vmatpush.msra.mxu0 %v4635
    %v4637 = vand.u32 %v2412, 4294901760
    %v4638 = vsub.f32 %v2412, %v4637
    %v4639 = vand.u32 %v4638, 4294901760
    %v4640 = vsub.f32 %v4638, %v4639
    %v4641 = vand.u32 %v4640, 4294901760
    %4642 = vmatmul.f32.gmra.mxu0 %v4641
    %v4643 = vpop.f32.mrf.mxu0
    %v4644 = vadd.f32 0.0, %v4643
    %4645 = vdwg.mxu0
    %v4646 = vand.u32 %v2462, 4294901760
    %v4647 = vsub.f32 %v2462, %v4646
    %v4648 = vand.u32 %v4647, 4294901760
    %v4649 = vsub.f32 %v4647, %v4648
    %v4650 = vand.u32 %v4649, 4294901760
    %4651 = vmatpush.msra.mxu0 %v4650
    %v4652 = vand.u32 %v2459, 4294901760
    %v4653 = vsub.f32 %v2459, %v4652
    %v4654 = vand.u32 %v4653, 4294901760
    %v4655 = vsub.f32 %v4653, %v4654
    %v4656 = vand.u32 %v4655, 4294901760
    %4657 = vmatpush.msra.mxu0 %v4656
    %v4658 = vand.u32 %v2456, 4294901760
    %v4659 = vsub.f32 %v2456, %v4658
    %v4660 = vand.u32 %v4659, 4294901760
    %v4661 = vsub.f32 %v4659, %v4660
    %v4662 = vand.u32 %v4661, 4294901760
    %4663 = vmatpush.msra.mxu0 %v4662
    %v4664 = vand.u32 %v2453, 4294901760
    %v4665 = vsub.f32 %v2453, %v4664
    %v4666 = vand.u32 %v4665, 4294901760
    %v4667 = vsub.f32 %v4665, %v4666
    %v4668 = vand.u32 %v4667, 4294901760
    %4669 = vmatpush.msra.mxu0 %v4668
    %v4670 = vand.u32 %v2450, 4294901760
    %v4671 = vsub.f32 %v2450, %v4670
    %v4672 = vand.u32 %v4671, 4294901760
    %v4673 = vsub.f32 %v4671, %v4672
    %v4674 = vand.u32 %v4673, 4294901760
    %4675 = vmatpush.msra.mxu0 %v4674
    %v4676 = vand.u32 %v2447, 4294901760
    %v4677 = vsub.f32 %v2447, %v4676
    %v4678 = vand.u32 %v4677, 4294901760
    %v4679 = vsub.f32 %v4677, %v4678
    %v4680 = vand.u32 %v4679, 4294901760
    %4681 = vmatpush.msra.mxu0 %v4680
    %v4682 = vand.u32 %v2444, 4294901760
    %v4683 = vsub.f32 %v2444, %v4682
    %v4684 = vand.u32 %v4683, 4294901760
    %v4685 = vsub.f32 %v4683, %v4684
    %v4686 = vand.u32 %v4685, 4294901760
    %4687 = vmatpush.msra.mxu0 %v4686
    %v4688 = vand.u32 %v2441, 4294901760
    %v4689 = vsub.f32 %v2441, %v4688
    %v4690 = vand.u32 %v4689, 4294901760
    %v4691 = vsub.f32 %v4689, %v4690
    %v4692 = vand.u32 %v4691, 4294901760
    %4693 = vmatpush.msra.mxu0 %v4692
    %v4694 = vand.u32 %v2438, 4294901760
    %v4695 = vsub.f32 %v2438, %v4694
    %v4696 = vand.u32 %v4695, 4294901760
    %v4697 = vsub.f32 %v4695, %v4696
    %v4698 = vand.u32 %v4697, 4294901760
    %4699 = vmatpush.msra.mxu0 %v4698
    %v4700 = vand.u32 %v2435, 4294901760
    %v4701 = vsub.f32 %v2435, %v4700
    %v4702 = vand.u32 %v4701, 4294901760
    %v4703 = vsub.f32 %v4701, %v4702
    %v4704 = vand.u32 %v4703, 4294901760
    %4705 = vmatpush.msra.mxu0 %v4704
    %v4706 = vand.u32 %v2432, 4294901760
    %v4707 = vsub.f32 %v2432, %v4706
    %v4708 = vand.u32 %v4707, 4294901760
    %v4709 = vsub.f32 %v4707, %v4708
    %v4710 = vand.u32 %v4709, 4294901760
    %4711 = vmatpush.msra.mxu0 %v4710
    %v4712 = vand.u32 %v2429, 4294901760
    %v4713 = vsub.f32 %v2429, %v4712
    %v4714 = vand.u32 %v4713, 4294901760
    %v4715 = vsub.f32 %v4713, %v4714
    %v4716 = vand.u32 %v4715, 4294901760
    %4717 = vmatpush.msra.mxu0 %v4716
    %v4718 = vand.u32 %v2426, 4294901760
    %v4719 = vsub.f32 %v2426, %v4718
    %v4720 = vand.u32 %v4719, 4294901760
    %v4721 = vsub.f32 %v4719, %v4720
    %v4722 = vand.u32 %v4721, 4294901760
    %4723 = vmatpush.msra.mxu0 %v4722
    %v4724 = vand.u32 %v2423, 4294901760
    %v4725 = vsub.f32 %v2423, %v4724
    %v4726 = vand.u32 %v4725, 4294901760
    %v4727 = vsub.f32 %v4725, %v4726
    %v4728 = vand.u32 %v4727, 4294901760
    %4729 = vmatpush.msra.mxu0 %v4728
    %v4730 = vand.u32 %v2420, 4294901760
    %v4731 = vsub.f32 %v2420, %v4730
    %v4732 = vand.u32 %v4731, 4294901760
    %v4733 = vsub.f32 %v4731, %v4732
    %v4734 = vand.u32 %v4733, 4294901760
    %4735 = vmatpush.msra.mxu0 %v4734
    %v4736 = vand.u32 %v2417, 4294901760
    %v4737 = vsub.f32 %v2417, %v4736
    %v4738 = vand.u32 %v4737, 4294901760
    %v4739 = vsub.f32 %v4737, %v4738
    %v4740 = vand.u32 %v4739, 4294901760
    %4741 = vmatpush.msra.mxu0 %v4740
    %v4742 = vand.u32 %v2412, 4294901760
    %4743 = vmatmul.f32.gmra.mxu0 %v4742
    %v4744 = vpop.f32.mrf.mxu0
    %v4745 = vadd.f32 %v4644, %v4744
    %4746 = vdwg.mxu0
    %v4747 = vand.u32 %v2462, 4294901760
    %v4748 = vsub.f32 %v2462, %v4747
    %4749 = vmatpush.msra.mxu0 %v4748
    %v4750 = vand.u32 %v2459, 4294901760
    %v4751 = vsub.f32 %v2459, %v4750
    %4752 = vmatpush.msra.mxu0 %v4751
    %v4753 = vand.u32 %v2456, 4294901760
    %v4754 = vsub.f32 %v2456, %v4753
    %4755 = vmatpush.msra.mxu0 %v4754
    %v4756 = vand.u32 %v2453, 4294901760
    %v4757 = vsub.f32 %v2453, %v4756
    %4758 = vmatpush.msra.mxu0 %v4757
    %v4759 = vand.u32 %v2450, 4294901760
    %v4760 = vsub.f32 %v2450, %v4759
    %4761 = vmatpush.msra.mxu0 %v4760
    %v4762 = vand.u32 %v2447, 4294901760
    %v4763 = vsub.f32 %v2447, %v4762
    %4764 = vmatpush.msra.mxu0 %v4763
    %v4765 = vand.u32 %v2444, 4294901760
    %v4766 = vsub.f32 %v2444, %v4765
    %4767 = vmatpush.msra.mxu0 %v4766
    %v4768 = vand.u32 %v2441, 4294901760
    %v4769 = vsub.f32 %v2441, %v4768
    %4770 = vmatpush.msra.mxu0 %v4769
    %v4771 = vand.u32 %v2438, 4294901760
    %v4772 = vsub.f32 %v2438, %v4771
    %4773 = vmatpush.msra.mxu0 %v4772
    %v4774 = vand.u32 %v2435, 4294901760
    %v4775 = vsub.f32 %v2435, %v4774
    %4776 = vmatpush.msra.mxu0 %v4775
    %v4777 = vand.u32 %v2432, 4294901760
    %v4778 = vsub.f32 %v2432, %v4777
    %4779 = vmatpush.msra.mxu0 %v4778
    %v4780 = vand.u32 %v2429, 4294901760
    %v4781 = vsub.f32 %v2429, %v4780
    %4782 = vmatpush.msra.mxu0 %v4781
    %v4783 = vand.u32 %v2426, 4294901760
    %v4784 = vsub.f32 %v2426, %v4783
    %4785 = vmatpush.msra.mxu0 %v4784
    %v4786 = vand.u32 %v2423, 4294901760
    %v4787 = vsub.f32 %v2423, %v4786
    %4788 = vmatpush.msra.mxu0 %v4787
    %v4789 = vand.u32 %v2420, 4294901760
    %v4790 = vsub.f32 %v2420, %v4789
    %4791 = vmatpush.msra.mxu0 %v4790
    %v4792 = vand.u32 %v2417, 4294901760
    %v4793 = vsub.f32 %v2417, %v4792
    %4794 = vmatpush.msra.mxu0 %v4793
    %v4795 = vand.u32 %v2412, 4294901760
    %v4796 = vsub.f32 %v2412, %v4795
    %4797 = vmatmul.f32.gmra.mxu0 %v4796
    %v4798 = vpop.f32.mrf.mxu0
    %v4799 = vadd.f32 %v4745, %v4798
    %4800 = vdwg.mxu0
    %v4801 = vand.u32 %v2462, 4294901760
    %4802 = vmatpush.msra.mxu0 %v4801
    %v4803 = vand.u32 %v2459, 4294901760
    %4804 = vmatpush.msra.mxu0 %v4803
    %v4805 = vand.u32 %v2456, 4294901760
    %4806 = vmatpush.msra.mxu0 %v4805
    %v4807 = vand.u32 %v2453, 4294901760
    %4808 = vmatpush.msra.mxu0 %v4807
    %v4809 = vand.u32 %v2450, 4294901760
    %4810 = vmatpush.msra.mxu0 %v4809
    %v4811 = vand.u32 %v2447, 4294901760
    %4812 = vmatpush.msra.mxu0 %v4811
    %v4813 = vand.u32 %v2444, 4294901760
    %4814 = vmatpush.msra.mxu0 %v4813
    %v4815 = vand.u32 %v2441, 4294901760
    %4816 = vmatpush.msra.mxu0 %v4815
    %v4817 = vand.u32 %v2438, 4294901760
    %4818 = vmatpush.msra.mxu0 %v4817
    %v4819 = vand.u32 %v2435, 4294901760
    %4820 = vmatpush.msra.mxu0 %v4819
    %v4821 = vand.u32 %v2432, 4294901760
    %4822 = vmatpush.msra.mxu0 %v4821
    %v4823 = vand.u32 %v2429, 4294901760
    %4824 = vmatpush.msra.mxu0 %v4823
    %v4825 = vand.u32 %v2426, 4294901760
    %4826 = vmatpush.msra.mxu0 %v4825
    %v4827 = vand.u32 %v2423, 4294901760
    %4828 = vmatpush.msra.mxu0 %v4827
    %v4829 = vand.u32 %v2420, 4294901760
    %4830 = vmatpush.msra.mxu0 %v4829
    %v4831 = vand.u32 %v2417, 4294901760
    %4832 = vmatpush.msra.mxu0 %v4831
    %v4833 = vand.u32 %v2412, 4294901760
    %v4834 = vsub.f32 %v2412, %v4833
    %v4835 = vand.u32 %v4834, 4294901760
    %4836 = vmatmul.f32.gmra.mxu0 %v4835
    %v4837 = vpop.f32.mrf.mxu0
    %v4838 = vadd.f32 %v4799, %v4837
    %4839 = vdwg.mxu0
    %v4840 = vand.u32 %v2462, 4294901760
    %v4841 = vsub.f32 %v2462, %v4840
    %v4842 = vand.u32 %v4841, 4294901760
    %4843 = vmatpush.msra.mxu0 %v4842
    %v4844 = vand.u32 %v2459, 4294901760
    %v4845 = vsub.f32 %v2459, %v4844
    %v4846 = vand.u32 %v4845, 4294901760
    %4847 = vmatpush.msra.mxu0 %v4846
    %v4848 = vand.u32 %v2456, 4294901760
    %v4849 = vsub.f32 %v2456, %v4848
    %v4850 = vand.u32 %v4849, 4294901760
    %4851 = vmatpush.msra.mxu0 %v4850
    %v4852 = vand.u32 %v2453, 4294901760
    %v4853 = vsub.f32 %v2453, %v4852
    %v4854 = vand.u32 %v4853, 4294901760
    %4855 = vmatpush.msra.mxu0 %v4854
    %v4856 = vand.u32 %v2450, 4294901760
    %v4857 = vsub.f32 %v2450, %v4856
    %v4858 = vand.u32 %v4857, 4294901760
    %4859 = vmatpush.msra.mxu0 %v4858
    %v4860 = vand.u32 %v2447, 4294901760
    %v4861 = vsub.f32 %v2447, %v4860
    %v4862 = vand.u32 %v4861, 4294901760
    %4863 = vmatpush.msra.mxu0 %v4862
    %v4864 = vand.u32 %v2444, 4294901760
    %v4865 = vsub.f32 %v2444, %v4864
    %v4866 = vand.u32 %v4865, 4294901760
    %4867 = vmatpush.msra.mxu0 %v4866
    %v4868 = vand.u32 %v2441, 4294901760
    %v4869 = vsub.f32 %v2441, %v4868
    %v4870 = vand.u32 %v4869, 4294901760
    %4871 = vmatpush.msra.mxu0 %v4870
    %v4872 = vand.u32 %v2438, 4294901760
    %v4873 = vsub.f32 %v2438, %v4872
    %v4874 = vand.u32 %v4873, 4294901760
    %4875 = vmatpush.msra.mxu0 %v4874
    %v4876 = vand.u32 %v2435, 4294901760
    %v4877 = vsub.f32 %v2435, %v4876
    %v4878 = vand.u32 %v4877, 4294901760
    %4879 = vmatpush.msra.mxu0 %v4878
    %v4880 = vand.u32 %v2432, 4294901760
    %v4881 = vsub.f32 %v2432, %v4880
    %v4882 = vand.u32 %v4881, 4294901760
    %4883 = vmatpush.msra.mxu0 %v4882
    %v4884 = vand.u32 %v2429, 4294901760
    %v4885 = vsub.f32 %v2429, %v4884
    %v4886 = vand.u32 %v4885, 4294901760
    %4887 = vmatpush.msra.mxu0 %v4886
    %v4888 = vand.u32 %v2426, 4294901760
    %v4889 = vsub.f32 %v2426, %v4888
    %v4890 = vand.u32 %v4889, 4294901760
    %4891 = vmatpush.msra.mxu0 %v4890
    %v4892 = vand.u32 %v2423, 4294901760
    %v4893 = vsub.f32 %v2423, %v4892
    %v4894 = vand.u32 %v4893, 4294901760
    %4895 = vmatpush.msra.mxu0 %v4894
    %v4896 = vand.u32 %v2420, 4294901760
    %v4897 = vsub.f32 %v2420, %v4896
    %v4898 = vand.u32 %v4897, 4294901760
    %4899 = vmatpush.msra.mxu0 %v4898
    %v4900 = vand.u32 %v2417, 4294901760
    %v4901 = vsub.f32 %v2417, %v4900
    %v4902 = vand.u32 %v4901, 4294901760
    %4903 = vmatpush.msra.mxu0 %v4902
    %v4904 = vand.u32 %v2412, 4294901760
    %4905 = vmatmul.f32.gmra.mxu0 %v4904
    %v4906 = vpop.f32.mrf.mxu0
    %v4907 = vadd.f32 %v4838, %v4906
    %4908 = vdwg.mxu0
    %v4909 = vand.u32 %v2462, 4294901760
    %4910 = vmatpush.msra.mxu0 %v4909
    %v4911 = vand.u32 %v2459, 4294901760
    %4912 = vmatpush.msra.mxu0 %v4911
    %v4913 = vand.u32 %v2456, 4294901760
    %4914 = vmatpush.msra.mxu0 %v4913
    %v4915 = vand.u32 %v2453, 4294901760
    %4916 = vmatpush.msra.mxu0 %v4915
    %v4917 = vand.u32 %v2450, 4294901760
    %4918 = vmatpush.msra.mxu0 %v4917
    %v4919 = vand.u32 %v2447, 4294901760
    %4920 = vmatpush.msra.mxu0 %v4919
    %v4921 = vand.u32 %v2444, 4294901760
    %4922 = vmatpush.msra.mxu0 %v4921
    %v4923 = vand.u32 %v2441, 4294901760
    %4924 = vmatpush.msra.mxu0 %v4923
    %v4925 = vand.u32 %v2438, 4294901760
    %4926 = vmatpush.msra.mxu0 %v4925
    %v4927 = vand.u32 %v2435, 4294901760
    %4928 = vmatpush.msra.mxu0 %v4927
    %v4929 = vand.u32 %v2432, 4294901760
    %4930 = vmatpush.msra.mxu0 %v4929
    %v4931 = vand.u32 %v2429, 4294901760
    %4932 = vmatpush.msra.mxu0 %v4931
    %v4933 = vand.u32 %v2426, 4294901760
    %4934 = vmatpush.msra.mxu0 %v4933
    %v4935 = vand.u32 %v2423, 4294901760
    %4936 = vmatpush.msra.mxu0 %v4935
    %v4937 = vand.u32 %v2420, 4294901760
    %4938 = vmatpush.msra.mxu0 %v4937
    %v4939 = vand.u32 %v2417, 4294901760
    %4940 = vmatpush.msra.mxu0 %v4939
    %v4941 = vand.u32 %v2412, 4294901760
    %4942 = vmatmul.f32.gmra.mxu0 %v4941
    %v4943 = vpop.f32.mrf.mxu0
    %v4944 = vadd.f32 %v4907, %v4943
    %4945 = vdwg.mxu0
    %v4946 = vand.u32 %v2510, 4294901760
    %4947 = vmatpush.msra.mxu0 %v4946
    %v4948 = vand.u32 %v2507, 4294901760
    %4949 = vmatpush.msra.mxu0 %v4948
    %v4950 = vand.u32 %v2504, 4294901760
    %4951 = vmatpush.msra.mxu0 %v4950
    %v4952 = vand.u32 %v2501, 4294901760
    %4953 = vmatpush.msra.mxu0 %v4952
    %v4954 = vand.u32 %v2498, 4294901760
    %4955 = vmatpush.msra.mxu0 %v4954
    %v4956 = vand.u32 %v2495, 4294901760
    %4957 = vmatpush.msra.mxu0 %v4956
    %v4958 = vand.u32 %v2492, 4294901760
    %4959 = vmatpush.msra.mxu0 %v4958
    %v4960 = vand.u32 %v2489, 4294901760
    %4961 = vmatpush.msra.mxu0 %v4960
    %v4962 = vand.u32 %v2486, 4294901760
    %4963 = vmatpush.msra.mxu0 %v4962
    %v4964 = vand.u32 %v2483, 4294901760
    %4965 = vmatpush.msra.mxu0 %v4964
    %v4966 = vand.u32 %v2480, 4294901760
    %4967 = vmatpush.msra.mxu0 %v4966
    %v4968 = vand.u32 %v2477, 4294901760
    %4969 = vmatpush.msra.mxu0 %v4968
    %v4970 = vand.u32 %v2474, 4294901760
    %4971 = vmatpush.msra.mxu0 %v4970
    %v4972 = vand.u32 %v2471, 4294901760
    %4973 = vmatpush.msra.mxu0 %v4972
    %v4974 = vand.u32 %v2468, 4294901760
    %4975 = vmatpush.msra.mxu0 %v4974
    %v4976 = vand.u32 %v2465, 4294901760
    %4977 = vmatpush.msra.mxu0 %v4976
    %v4978 = vand.u32 %v2413, 4294901760
    %v4979 = vsub.f32 %v2413, %v4978
    %v4980 = vand.u32 %v4979, 4294901760
    %v4981 = vsub.f32 %v4979, %v4980
    %v4982 = vand.u32 %v4981, 4294901760
    %4983 = vmatmul.f32.gmra.mxu0 %v4982
    %v4984 = vpop.f32.mrf.mxu0
    %v4985 = vadd.f32 %v4944, %v4984
    %4986 = vdwg.mxu0
    %v4987 = vand.u32 %v2510, 4294901760
    %v4988 = vsub.f32 %v2510, %v4987
    %v4989 = vand.u32 %v4988, 4294901760
    %v4990 = vsub.f32 %v4988, %v4989
    %v4991 = vand.u32 %v4990, 4294901760
    %4992 = vmatpush.msra.mxu0 %v4991
    %v4993 = vand.u32 %v2507, 4294901760
    %v4994 = vsub.f32 %v2507, %v4993
    %v4995 = vand.u32 %v4994, 4294901760
    %v4996 = vsub.f32 %v4994, %v4995
    %v4997 = vand.u32 %v4996, 4294901760
    %4998 = vmatpush.msra.mxu0 %v4997
    %v4999 = vand.u32 %v2504, 4294901760
    %v5000 = vsub.f32 %v2504, %v4999
    %v5001 = vand.u32 %v5000, 4294901760
    %v5002 = vsub.f32 %v5000, %v5001
    %v5003 = vand.u32 %v5002, 4294901760
    %5004 = vmatpush.msra.mxu0 %v5003
    %v5005 = vand.u32 %v2501, 4294901760
    %v5006 = vsub.f32 %v2501, %v5005
    %v5007 = vand.u32 %v5006, 4294901760
    %v5008 = vsub.f32 %v5006, %v5007
    %v5009 = vand.u32 %v5008, 4294901760
    %5010 = vmatpush.msra.mxu0 %v5009
    %v5011 = vand.u32 %v2498, 4294901760
    %v5012 = vsub.f32 %v2498, %v5011
    %v5013 = vand.u32 %v5012, 4294901760
    %v5014 = vsub.f32 %v5012, %v5013
    %v5015 = vand.u32 %v5014, 4294901760
    %5016 = vmatpush.msra.mxu0 %v5015
    %v5017 = vand.u32 %v2495, 4294901760
    %v5018 = vsub.f32 %v2495, %v5017
    %v5019 = vand.u32 %v5018, 4294901760
    %v5020 = vsub.f32 %v5018, %v5019
    %v5021 = vand.u32 %v5020, 4294901760
    %5022 = vmatpush.msra.mxu0 %v5021
    %v5023 = vand.u32 %v2492, 4294901760
    %v5024 = vsub.f32 %v2492, %v5023
    %v5025 = vand.u32 %v5024, 4294901760
    %v5026 = vsub.f32 %v5024, %v5025
    %v5027 = vand.u32 %v5026, 4294901760
    %5028 = vmatpush.msra.mxu0 %v5027
    %v5029 = vand.u32 %v2489, 4294901760
    %v5030 = vsub.f32 %v2489, %v5029
    %v5031 = vand.u32 %v5030, 4294901760
    %v5032 = vsub.f32 %v5030, %v5031
    %v5033 = vand.u32 %v5032, 4294901760
    %5034 = vmatpush.msra.mxu0 %v5033
    %v5035 = vand.u32 %v2486, 4294901760
    %v5036 = vsub.f32 %v2486, %v5035
    %v5037 = vand.u32 %v5036, 4294901760
    %v5038 = vsub.f32 %v5036, %v5037
    %v5039 = vand.u32 %v5038, 4294901760
    %5040 = vmatpush.msra.mxu0 %v5039
    %v5041 = vand.u32 %v2483, 4294901760
    %v5042 = vsub.f32 %v2483, %v5041
    %v5043 = vand.u32 %v5042, 4294901760
    %v5044 = vsub.f32 %v5042, %v5043
    %v5045 = vand.u32 %v5044, 4294901760
    %5046 = vmatpush.msra.mxu0 %v5045
    %v5047 = vand.u32 %v2480, 4294901760
    %v5048 = vsub.f32 %v2480, %v5047
    %v5049 = vand.u32 %v5048, 4294901760
    %v5050 = vsub.f32 %v5048, %v5049
    %v5051 = vand.u32 %v5050, 4294901760
    %5052 = vmatpush.msra.mxu0 %v5051
    %v5053 = vand.u32 %v2477, 4294901760
    %v5054 = vsub.f32 %v2477, %v5053
    %v5055 = vand.u32 %v5054, 4294901760
    %v5056 = vsub.f32 %v5054, %v5055
    %v5057 = vand.u32 %v5056, 4294901760
    %5058 = vmatpush.msra.mxu0 %v5057
    %v5059 = vand.u32 %v2474, 4294901760
    %v5060 = vsub.f32 %v2474, %v5059
    %v5061 = vand.u32 %v5060, 4294901760
    %v5062 = vsub.f32 %v5060, %v5061
    %v5063 = vand.u32 %v5062, 4294901760
    %5064 = vmatpush.msra.mxu0 %v5063
    %v5065 = vand.u32 %v2471, 4294901760
    %v5066 = vsub.f32 %v2471, %v5065
    %v5067 = vand.u32 %v5066, 4294901760
    %v5068 = vsub.f32 %v5066, %v5067
    %v5069 = vand.u32 %v5068, 4294901760
    %5070 = vmatpush.msra.mxu0 %v5069
    %v5071 = vand.u32 %v2468, 4294901760
    %v5072 = vsub.f32 %v2468, %v5071
    %v5073 = vand.u32 %v5072, 4294901760
    %v5074 = vsub.f32 %v5072, %v5073
    %v5075 = vand.u32 %v5074, 4294901760
    %5076 = vmatpush.msra.mxu0 %v5075
    %v5077 = vand.u32 %v2465, 4294901760
    %v5078 = vsub.f32 %v2465, %v5077
    %v5079 = vand.u32 %v5078, 4294901760
    %v5080 = vsub.f32 %v5078, %v5079
    %v5081 = vand.u32 %v5080, 4294901760
    %5082 = vmatpush.msra.mxu0 %v5081
    %v5083 = vand.u32 %v2413, 4294901760
    %5084 = vmatmul.f32.gmra.mxu0 %v5083
    %v5085 = vpop.f32.mrf.mxu0
    %v5086 = vadd.f32 %v4985, %v5085
    %5087 = vdwg.mxu0
    %v5088 = vand.u32 %v2510, 4294901760
    %v5089 = vsub.f32 %v2510, %v5088
    %5090 = vmatpush.msra.mxu0 %v5089
    %v5091 = vand.u32 %v2507, 4294901760
    %v5092 = vsub.f32 %v2507, %v5091
    %5093 = vmatpush.msra.mxu0 %v5092
    %v5094 = vand.u32 %v2504, 4294901760
    %v5095 = vsub.f32 %v2504, %v5094
    %5096 = vmatpush.msra.mxu0 %v5095
    %v5097 = vand.u32 %v2501, 4294901760
    %v5098 = vsub.f32 %v2501, %v5097
    %5099 = vmatpush.msra.mxu0 %v5098
    %v5100 = vand.u32 %v2498, 4294901760
    %v5101 = vsub.f32 %v2498, %v5100
    %5102 = vmatpush.msra.mxu0 %v5101
    %v5103 = vand.u32 %v2495, 4294901760
    %v5104 = vsub.f32 %v2495, %v5103
    %5105 = vmatpush.msra.mxu0 %v5104
    %v5106 = vand.u32 %v2492, 4294901760
    %v5107 = vsub.f32 %v2492, %v5106
    %5108 = vmatpush.msra.mxu0 %v5107
    %v5109 = vand.u32 %v2489, 4294901760
    %v5110 = vsub.f32 %v2489, %v5109
    %5111 = vmatpush.msra.mxu0 %v5110
    %v5112 = vand.u32 %v2486, 4294901760
    %v5113 = vsub.f32 %v2486, %v5112
    %5114 = vmatpush.msra.mxu0 %v5113
    %v5115 = vand.u32 %v2483, 4294901760
    %v5116 = vsub.f32 %v2483, %v5115
    %5117 = vmatpush.msra.mxu0 %v5116
    %v5118 = vand.u32 %v2480, 4294901760
    %v5119 = vsub.f32 %v2480, %v5118
    %5120 = vmatpush.msra.mxu0 %v5119
    %v5121 = vand.u32 %v2477, 4294901760
    %v5122 = vsub.f32 %v2477, %v5121
    %5123 = vmatpush.msra.mxu0 %v5122
    %v5124 = vand.u32 %v2474, 4294901760
    %v5125 = vsub.f32 %v2474, %v5124
    %5126 = vmatpush.msra.mxu0 %v5125
    %v5127 = vand.u32 %v2471, 4294901760
    %v5128 = vsub.f32 %v2471, %v5127
    %5129 = vmatpush.msra.mxu0 %v5128
    %v5130 = vand.u32 %v2468, 4294901760
    %v5131 = vsub.f32 %v2468, %v5130
    %5132 = vmatpush.msra.mxu0 %v5131
    %v5133 = vand.u32 %v2465, 4294901760
    %v5134 = vsub.f32 %v2465, %v5133
    %5135 = vmatpush.msra.mxu0 %v5134
    %v5136 = vand.u32 %v2413, 4294901760
    %v5137 = vsub.f32 %v2413, %v5136
    %5138 = vmatmul.f32.gmra.mxu0 %v5137
    %v5139 = vpop.f32.mrf.mxu0
    %v5140 = vadd.f32 %v5086, %v5139
    %5141 = vdwg.mxu0
    %v5142 = vand.u32 %v2510, 4294901760
    %5143 = vmatpush.msra.mxu0 %v5142
    %v5144 = vand.u32 %v2507, 4294901760
    %5145 = vmatpush.msra.mxu0 %v5144
    %v5146 = vand.u32 %v2504, 4294901760
    %5147 = vmatpush.msra.mxu0 %v5146
    %v5148 = vand.u32 %v2501, 4294901760
    %5149 = vmatpush.msra.mxu0 %v5148
    %v5150 = vand.u32 %v2498, 4294901760
    %5151 = vmatpush.msra.mxu0 %v5150
    %v5152 = vand.u32 %v2495, 4294901760
    %5153 = vmatpush.msra.mxu0 %v5152
    %v5154 = vand.u32 %v2492, 4294901760
    %5155 = vmatpush.msra.mxu0 %v5154
    %v5156 = vand.u32 %v2489, 4294901760
    %5157 = vmatpush.msra.mxu0 %v5156
    %v5158 = vand.u32 %v2486, 4294901760
    %5159 = vmatpush.msra.mxu0 %v5158
    %v5160 = vand.u32 %v2483, 4294901760
    %5161 = vmatpush.msra.mxu0 %v5160
    %v5162 = vand.u32 %v2480, 4294901760
    %5163 = vmatpush.msra.mxu0 %v5162
    %v5164 = vand.u32 %v2477, 4294901760
    %5165 = vmatpush.msra.mxu0 %v5164
    %v5166 = vand.u32 %v2474, 4294901760
    %5167 = vmatpush.msra.mxu0 %v5166
    %v5168 = vand.u32 %v2471, 4294901760
    %5169 = vmatpush.msra.mxu0 %v5168
    %v5170 = vand.u32 %v2468, 4294901760
    %5171 = vmatpush.msra.mxu0 %v5170
    %v5172 = vand.u32 %v2465, 4294901760
    %5173 = vmatpush.msra.mxu0 %v5172
    %v5174 = vand.u32 %v2413, 4294901760
    %v5175 = vsub.f32 %v2413, %v5174
    %v5176 = vand.u32 %v5175, 4294901760
    %5177 = vmatmul.f32.gmra.mxu0 %v5176
    %v5178 = vpop.f32.mrf.mxu0
    %v5179 = vadd.f32 %v5140, %v5178
    %5180 = vdwg.mxu0
    %v5181 = vand.u32 %v2510, 4294901760
    %v5182 = vsub.f32 %v2510, %v5181
    %v5183 = vand.u32 %v5182, 4294901760
    %5184 = vmatpush.msra.mxu0 %v5183
    %v5185 = vand.u32 %v2507, 4294901760
    %v5186 = vsub.f32 %v2507, %v5185
    %v5187 = vand.u32 %v5186, 4294901760
    %5188 = vmatpush.msra.mxu0 %v5187
    %v5189 = vand.u32 %v2504, 4294901760
    %v5190 = vsub.f32 %v2504, %v5189
    %v5191 = vand.u32 %v5190, 4294901760
    %5192 = vmatpush.msra.mxu0 %v5191
    %v5193 = vand.u32 %v2501, 4294901760
    %v5194 = vsub.f32 %v2501, %v5193
    %v5195 = vand.u32 %v5194, 4294901760
    %5196 = vmatpush.msra.mxu0 %v5195
    %v5197 = vand.u32 %v2498, 4294901760
    %v5198 = vsub.f32 %v2498, %v5197
    %v5199 = vand.u32 %v5198, 4294901760
    %5200 = vmatpush.msra.mxu0 %v5199
    %v5201 = vand.u32 %v2495, 4294901760
    %v5202 = vsub.f32 %v2495, %v5201
    %v5203 = vand.u32 %v5202, 4294901760
    %5204 = vmatpush.msra.mxu0 %v5203
    %v5205 = vand.u32 %v2492, 4294901760
    %v5206 = vsub.f32 %v2492, %v5205
    %v5207 = vand.u32 %v5206, 4294901760
    %5208 = vmatpush.msra.mxu0 %v5207
    %v5209 = vand.u32 %v2489, 4294901760
    %v5210 = vsub.f32 %v2489, %v5209
    %v5211 = vand.u32 %v5210, 4294901760
    %5212 = vmatpush.msra.mxu0 %v5211
    %v5213 = vand.u32 %v2486, 4294901760
    %v5214 = vsub.f32 %v2486, %v5213
    %v5215 = vand.u32 %v5214, 4294901760
    %5216 = vmatpush.msra.mxu0 %v5215
    %v5217 = vand.u32 %v2483, 4294901760
    %v5218 = vsub.f32 %v2483, %v5217
    %v5219 = vand.u32 %v5218, 4294901760
    %5220 = vmatpush.msra.mxu0 %v5219
    %v5221 = vand.u32 %v2480, 4294901760
    %v5222 = vsub.f32 %v2480, %v5221
    %v5223 = vand.u32 %v5222, 4294901760
    %5224 = vmatpush.msra.mxu0 %v5223
    %v5225 = vand.u32 %v2477, 4294901760
    %v5226 = vsub.f32 %v2477, %v5225
    %v5227 = vand.u32 %v5226, 4294901760
    %5228 = vmatpush.msra.mxu0 %v5227
    %v5229 = vand.u32 %v2474, 4294901760
    %v5230 = vsub.f32 %v2474, %v5229
    %v5231 = vand.u32 %v5230, 4294901760
    %5232 = vmatpush.msra.mxu0 %v5231
    %v5233 = vand.u32 %v2471, 4294901760
    %v5234 = vsub.f32 %v2471, %v5233
    %v5235 = vand.u32 %v5234, 4294901760
    %5236 = vmatpush.msra.mxu0 %v5235
    %v5237 = vand.u32 %v2468, 4294901760
    %v5238 = vsub.f32 %v2468, %v5237
    %v5239 = vand.u32 %v5238, 4294901760
    %5240 = vmatpush.msra.mxu0 %v5239
    %v5241 = vand.u32 %v2465, 4294901760
    %v5242 = vsub.f32 %v2465, %v5241
    %v5243 = vand.u32 %v5242, 4294901760
    %5244 = vmatpush.msra.mxu0 %v5243
    %v5245 = vand.u32 %v2413, 4294901760
    %5246 = vmatmul.f32.gmra.mxu0 %v5245
    %v5247 = vpop.f32.mrf.mxu0
    %v5248 = vadd.f32 %v5179, %v5247
    %5249 = vdwg.mxu0
    %v5250 = vand.u32 %v2510, 4294901760
    %5251 = vmatpush.msra.mxu0 %v5250
    %v5252 = vand.u32 %v2507, 4294901760
    %5253 = vmatpush.msra.mxu0 %v5252
    %v5254 = vand.u32 %v2504, 4294901760
    %5255 = vmatpush.msra.mxu0 %v5254
    %v5256 = vand.u32 %v2501, 4294901760
    %5257 = vmatpush.msra.mxu0 %v5256
    %v5258 = vand.u32 %v2498, 4294901760
    %5259 = vmatpush.msra.mxu0 %v5258
    %v5260 = vand.u32 %v2495, 4294901760
    %5261 = vmatpush.msra.mxu0 %v5260
    %v5262 = vand.u32 %v2492, 4294901760
    %5263 = vmatpush.msra.mxu0 %v5262
    %v5264 = vand.u32 %v2489, 4294901760
    %5265 = vmatpush.msra.mxu0 %v5264
    %v5266 = vand.u32 %v2486, 4294901760
    %5267 = vmatpush.msra.mxu0 %v5266
    %v5268 = vand.u32 %v2483, 4294901760
    %5269 = vmatpush.msra.mxu0 %v5268
    %v5270 = vand.u32 %v2480, 4294901760
    %5271 = vmatpush.msra.mxu0 %v5270
    %v5272 = vand.u32 %v2477, 4294901760
    %5273 = vmatpush.msra.mxu0 %v5272
    %v5274 = vand.u32 %v2474, 4294901760
    %5275 = vmatpush.msra.mxu0 %v5274
    %v5276 = vand.u32 %v2471, 4294901760
    %5277 = vmatpush.msra.mxu0 %v5276
    %v5278 = vand.u32 %v2468, 4294901760
    %5279 = vmatpush.msra.mxu0 %v5278
    %v5280 = vand.u32 %v2465, 4294901760
    %5281 = vmatpush.msra.mxu0 %v5280
    %v5282 = vand.u32 %v2413, 4294901760
    %5283 = vmatmul.f32.gmra.mxu0 %v5282
    %v5284 = vpop.f32.mrf.mxu0
    %v5285 = vadd.f32 %v5248, %v5284
    %5286 = vdwg.mxu0
    %v5287 = vand.u32 %v2558, 4294901760
    %5288 = vmatpush.msra.mxu0 %v5287
    %v5289 = vand.u32 %v2555, 4294901760
    %5290 = vmatpush.msra.mxu0 %v5289
    %v5291 = vand.u32 %v2552, 4294901760
    %5292 = vmatpush.msra.mxu0 %v5291
    %v5293 = vand.u32 %v2549, 4294901760
    %5294 = vmatpush.msra.mxu0 %v5293
    %v5295 = vand.u32 %v2546, 4294901760
    %5296 = vmatpush.msra.mxu0 %v5295
    %v5297 = vand.u32 %v2543, 4294901760
    %5298 = vmatpush.msra.mxu0 %v5297
    %v5299 = vand.u32 %v2540, 4294901760
    %5300 = vmatpush.msra.mxu0 %v5299
    %v5301 = vand.u32 %v2537, 4294901760
    %5302 = vmatpush.msra.mxu0 %v5301
    %v5303 = vand.u32 %v2534, 4294901760
    %5304 = vmatpush.msra.mxu0 %v5303
    %v5305 = vand.u32 %v2531, 4294901760
    %5306 = vmatpush.msra.mxu0 %v5305
    %v5307 = vand.u32 %v2528, 4294901760
    %5308 = vmatpush.msra.mxu0 %v5307
    %v5309 = vand.u32 %v2525, 4294901760
    %5310 = vmatpush.msra.mxu0 %v5309
    %v5311 = vand.u32 %v2522, 4294901760
    %5312 = vmatpush.msra.mxu0 %v5311
    %v5313 = vand.u32 %v2519, 4294901760
    %5314 = vmatpush.msra.mxu0 %v5313
    %v5315 = vand.u32 %v2516, 4294901760
    %5316 = vmatpush.msra.mxu0 %v5315
    %v5317 = vand.u32 %v2513, 4294901760
    %5318 = vmatpush.msra.mxu0 %v5317
    %v5319 = vand.u32 %v2414, 4294901760
    %v5320 = vsub.f32 %v2414, %v5319
    %v5321 = vand.u32 %v5320, 4294901760
    %v5322 = vsub.f32 %v5320, %v5321
    %v5323 = vand.u32 %v5322, 4294901760
    %5324 = vmatmul.f32.gmra.mxu0 %v5323
    %v5325 = vpop.f32.mrf.mxu0
    %v5326 = vadd.f32 %v5285, %v5325
    %5327 = vdwg.mxu0
    %v5328 = vand.u32 %v2558, 4294901760
    %v5329 = vsub.f32 %v2558, %v5328
    %v5330 = vand.u32 %v5329, 4294901760
    %v5331 = vsub.f32 %v5329, %v5330
    %v5332 = vand.u32 %v5331, 4294901760
    %5333 = vmatpush.msra.mxu0 %v5332
    %v5334 = vand.u32 %v2555, 4294901760
    %v5335 = vsub.f32 %v2555, %v5334
    %v5336 = vand.u32 %v5335, 4294901760
    %v5337 = vsub.f32 %v5335, %v5336
    %v5338 = vand.u32 %v5337, 4294901760
    %5339 = vmatpush.msra.mxu0 %v5338
    %v5340 = vand.u32 %v2552, 4294901760
    %v5341 = vsub.f32 %v2552, %v5340
    %v5342 = vand.u32 %v5341, 4294901760
    %v5343 = vsub.f32 %v5341, %v5342
    %v5344 = vand.u32 %v5343, 4294901760
    %5345 = vmatpush.msra.mxu0 %v5344
    %v5346 = vand.u32 %v2549, 4294901760
    %v5347 = vsub.f32 %v2549, %v5346
    %v5348 = vand.u32 %v5347, 4294901760
    %v5349 = vsub.f32 %v5347, %v5348
    %v5350 = vand.u32 %v5349, 4294901760
    %5351 = vmatpush.msra.mxu0 %v5350
    %v5352 = vand.u32 %v2546, 4294901760
    %v5353 = vsub.f32 %v2546, %v5352
    %v5354 = vand.u32 %v5353, 4294901760
    %v5355 = vsub.f32 %v5353, %v5354
    %v5356 = vand.u32 %v5355, 4294901760
    %5357 = vmatpush.msra.mxu0 %v5356
    %v5358 = vand.u32 %v2543, 4294901760
    %v5359 = vsub.f32 %v2543, %v5358
    %v5360 = vand.u32 %v5359, 4294901760
    %v5361 = vsub.f32 %v5359, %v5360
    %v5362 = vand.u32 %v5361, 4294901760
    %5363 = vmatpush.msra.mxu0 %v5362
    %v5364 = vand.u32 %v2540, 4294901760
    %v5365 = vsub.f32 %v2540, %v5364
    %v5366 = vand.u32 %v5365, 4294901760
    %v5367 = vsub.f32 %v5365, %v5366
    %v5368 = vand.u32 %v5367, 4294901760
    %5369 = vmatpush.msra.mxu0 %v5368
    %v5370 = vand.u32 %v2537, 4294901760
    %v5371 = vsub.f32 %v2537, %v5370
    %v5372 = vand.u32 %v5371, 4294901760
    %v5373 = vsub.f32 %v5371, %v5372
    %v5374 = vand.u32 %v5373, 4294901760
    %5375 = vmatpush.msra.mxu0 %v5374
    %v5376 = vand.u32 %v2534, 4294901760
    %v5377 = vsub.f32 %v2534, %v5376
    %v5378 = vand.u32 %v5377, 4294901760
    %v5379 = vsub.f32 %v5377, %v5378
    %v5380 = vand.u32 %v5379, 4294901760
    %5381 = vmatpush.msra.mxu0 %v5380
    %v5382 = vand.u32 %v2531, 4294901760
    %v5383 = vsub.f32 %v2531, %v5382
    %v5384 = vand.u32 %v5383, 4294901760
    %v5385 = vsub.f32 %v5383, %v5384
    %v5386 = vand.u32 %v5385, 4294901760
    %5387 = vmatpush.msra.mxu0 %v5386
    %v5388 = vand.u32 %v2528, 4294901760
    %v5389 = vsub.f32 %v2528, %v5388
    %v5390 = vand.u32 %v5389, 4294901760
    %v5391 = vsub.f32 %v5389, %v5390
    %v5392 = vand.u32 %v5391, 4294901760
    %5393 = vmatpush.msra.mxu0 %v5392
    %v5394 = vand.u32 %v2525, 4294901760
    %v5395 = vsub.f32 %v2525, %v5394
    %v5396 = vand.u32 %v5395, 4294901760
    %v5397 = vsub.f32 %v5395, %v5396
    %v5398 = vand.u32 %v5397, 4294901760
    %5399 = vmatpush.msra.mxu0 %v5398
    %v5400 = vand.u32 %v2522, 4294901760
    %v5401 = vsub.f32 %v2522, %v5400
    %v5402 = vand.u32 %v5401, 4294901760
    %v5403 = vsub.f32 %v5401, %v5402
    %v5404 = vand.u32 %v5403, 4294901760
    %5405 = vmatpush.msra.mxu0 %v5404
    %v5406 = vand.u32 %v2519, 4294901760
    %v5407 = vsub.f32 %v2519, %v5406
    %v5408 = vand.u32 %v5407, 4294901760
    %v5409 = vsub.f32 %v5407, %v5408
    %v5410 = vand.u32 %v5409, 4294901760
    %5411 = vmatpush.msra.mxu0 %v5410
    %v5412 = vand.u32 %v2516, 4294901760
    %v5413 = vsub.f32 %v2516, %v5412
    %v5414 = vand.u32 %v5413, 4294901760
    %v5415 = vsub.f32 %v5413, %v5414
    %v5416 = vand.u32 %v5415, 4294901760
    %5417 = vmatpush.msra.mxu0 %v5416
    %v5418 = vand.u32 %v2513, 4294901760
    %v5419 = vsub.f32 %v2513, %v5418
    %v5420 = vand.u32 %v5419, 4294901760
    %v5421 = vsub.f32 %v5419, %v5420
    %v5422 = vand.u32 %v5421, 4294901760
    %5423 = vmatpush.msra.mxu0 %v5422
    %v5424 = vand.u32 %v2414, 4294901760
    %5425 = vmatmul.f32.gmra.mxu0 %v5424
    %v5426 = vpop.f32.mrf.mxu0
    %v5427 = vadd.f32 %v5326, %v5426
    %5428 = vdwg.mxu0
    %v5429 = vand.u32 %v2558, 4294901760
    %v5430 = vsub.f32 %v2558, %v5429
    %5431 = vmatpush.msra.mxu0 %v5430
    %v5432 = vand.u32 %v2555, 4294901760
    %v5433 = vsub.f32 %v2555, %v5432
    %5434 = vmatpush.msra.mxu0 %v5433
    %v5435 = vand.u32 %v2552, 4294901760
    %v5436 = vsub.f32 %v2552, %v5435
    %5437 = vmatpush.msra.mxu0 %v5436
    %v5438 = vand.u32 %v2549, 4294901760
    %v5439 = vsub.f32 %v2549, %v5438
    %5440 = vmatpush.msra.mxu0 %v5439
    %v5441 = vand.u32 %v2546, 4294901760
    %v5442 = vsub.f32 %v2546, %v5441
    %5443 = vmatpush.msra.mxu0 %v5442
    %v5444 = vand.u32 %v2543, 4294901760
    %v5445 = vsub.f32 %v2543, %v5444
    %5446 = vmatpush.msra.mxu0 %v5445
    %v5447 = vand.u32 %v2540, 4294901760
    %v5448 = vsub.f32 %v2540, %v5447
    %5449 = vmatpush.msra.mxu0 %v5448
    %v5450 = vand.u32 %v2537, 4294901760
    %v5451 = vsub.f32 %v2537, %v5450
    %5452 = vmatpush.msra.mxu0 %v5451
    %v5453 = vand.u32 %v2534, 4294901760
    %v5454 = vsub.f32 %v2534, %v5453
    %5455 = vmatpush.msra.mxu0 %v5454
    %v5456 = vand.u32 %v2531, 4294901760
    %v5457 = vsub.f32 %v2531, %v5456
    %5458 = vmatpush.msra.mxu0 %v5457
    %v5459 = vand.u32 %v2528, 4294901760
    %v5460 = vsub.f32 %v2528, %v5459
    %5461 = vmatpush.msra.mxu0 %v5460
    %v5462 = vand.u32 %v2525, 4294901760
    %v5463 = vsub.f32 %v2525, %v5462
    %5464 = vmatpush.msra.mxu0 %v5463
    %v5465 = vand.u32 %v2522, 4294901760
    %v5466 = vsub.f32 %v2522, %v5465
    %5467 = vmatpush.msra.mxu0 %v5466
    %v5468 = vand.u32 %v2519, 4294901760
    %v5469 = vsub.f32 %v2519, %v5468
    %5470 = vmatpush.msra.mxu0 %v5469
    %v5471 = vand.u32 %v2516, 4294901760
    %v5472 = vsub.f32 %v2516, %v5471
    %5473 = vmatpush.msra.mxu0 %v5472
    %v5474 = vand.u32 %v2513, 4294901760
    %v5475 = vsub.f32 %v2513, %v5474
    %5476 = vmatpush.msra.mxu0 %v5475
    %v5477 = vand.u32 %v2414, 4294901760
    %v5478 = vsub.f32 %v2414, %v5477
    %5479 = vmatmul.f32.gmra.mxu0 %v5478
    %v5480 = vpop.f32.mrf.mxu0
    %v5481 = vadd.f32 %v5427, %v5480
    %5482 = vdwg.mxu0
    %v5483 = vand.u32 %v2558, 4294901760
    %5484 = vmatpush.msra.mxu0 %v5483
    %v5485 = vand.u32 %v2555, 4294901760
    %5486 = vmatpush.msra.mxu0 %v5485
    %v5487 = vand.u32 %v2552, 4294901760
    %5488 = vmatpush.msra.mxu0 %v5487
    %v5489 = vand.u32 %v2549, 4294901760
    %5490 = vmatpush.msra.mxu0 %v5489
    %v5491 = vand.u32 %v2546, 4294901760
    %5492 = vmatpush.msra.mxu0 %v5491
    %v5493 = vand.u32 %v2543, 4294901760
    %5494 = vmatpush.msra.mxu0 %v5493
    %v5495 = vand.u32 %v2540, 4294901760
    %5496 = vmatpush.msra.mxu0 %v5495
    %v5497 = vand.u32 %v2537, 4294901760
    %5498 = vmatpush.msra.mxu0 %v5497
    %v5499 = vand.u32 %v2534, 4294901760
    %5500 = vmatpush.msra.mxu0 %v5499
    %v5501 = vand.u32 %v2531, 4294901760
    %5502 = vmatpush.msra.mxu0 %v5501
    %v5503 = vand.u32 %v2528, 4294901760
    %5504 = vmatpush.msra.mxu0 %v5503
    %v5505 = vand.u32 %v2525, 4294901760
    %5506 = vmatpush.msra.mxu0 %v5505
    %v5507 = vand.u32 %v2522, 4294901760
    %5508 = vmatpush.msra.mxu0 %v5507
    %v5509 = vand.u32 %v2519, 4294901760
    %5510 = vmatpush.msra.mxu0 %v5509
    %v5511 = vand.u32 %v2516, 4294901760
    %5512 = vmatpush.msra.mxu0 %v5511
    %v5513 = vand.u32 %v2513, 4294901760
    %5514 = vmatpush.msra.mxu0 %v5513
    %v5515 = vand.u32 %v2414, 4294901760
    %v5516 = vsub.f32 %v2414, %v5515
    %v5517 = vand.u32 %v5516, 4294901760
    %5518 = vmatmul.f32.gmra.mxu0 %v5517
    %v5519 = vpop.f32.mrf.mxu0
    %v5520 = vadd.f32 %v5481, %v5519
    %5521 = vdwg.mxu0
    %v5522 = vand.u32 %v2558, 4294901760
    %v5523 = vsub.f32 %v2558, %v5522
    %v5524 = vand.u32 %v5523, 4294901760
    %5525 = vmatpush.msra.mxu0 %v5524
    %v5526 = vand.u32 %v2555, 4294901760
    %v5527 = vsub.f32 %v2555, %v5526
    %v5528 = vand.u32 %v5527, 4294901760
    %5529 = vmatpush.msra.mxu0 %v5528
    %v5530 = vand.u32 %v2552, 4294901760
    %v5531 = vsub.f32 %v2552, %v5530
    %v5532 = vand.u32 %v5531, 4294901760
    %5533 = vmatpush.msra.mxu0 %v5532
    %v5534 = vand.u32 %v2549, 4294901760
    %v5535 = vsub.f32 %v2549, %v5534
    %v5536 = vand.u32 %v5535, 4294901760
    %5537 = vmatpush.msra.mxu0 %v5536
    %v5538 = vand.u32 %v2546, 4294901760
    %v5539 = vsub.f32 %v2546, %v5538
    %v5540 = vand.u32 %v5539, 4294901760
    %5541 = vmatpush.msra.mxu0 %v5540
    %v5542 = vand.u32 %v2543, 4294901760
    %v5543 = vsub.f32 %v2543, %v5542
    %v5544 = vand.u32 %v5543, 4294901760
    %5545 = vmatpush.msra.mxu0 %v5544
    %v5546 = vand.u32 %v2540, 4294901760
    %v5547 = vsub.f32 %v2540, %v5546
    %v5548 = vand.u32 %v5547, 4294901760
    %5549 = vmatpush.msra.mxu0 %v5548
    %v5550 = vand.u32 %v2537, 4294901760
    %v5551 = vsub.f32 %v2537, %v5550
    %v5552 = vand.u32 %v5551, 4294901760
    %5553 = vmatpush.msra.mxu0 %v5552
    %v5554 = vand.u32 %v2534, 4294901760
    %v5555 = vsub.f32 %v2534, %v5554
    %v5556 = vand.u32 %v5555, 4294901760
    %5557 = vmatpush.msra.mxu0 %v5556
    %v5558 = vand.u32 %v2531, 4294901760
    %v5559 = vsub.f32 %v2531, %v5558
    %v5560 = vand.u32 %v5559, 4294901760
    %5561 = vmatpush.msra.mxu0 %v5560
    %v5562 = vand.u32 %v2528, 4294901760
    %v5563 = vsub.f32 %v2528, %v5562
    %v5564 = vand.u32 %v5563, 4294901760
    %5565 = vmatpush.msra.mxu0 %v5564
    %v5566 = vand.u32 %v2525, 4294901760
    %v5567 = vsub.f32 %v2525, %v5566
    %v5568 = vand.u32 %v5567, 4294901760
    %5569 = vmatpush.msra.mxu0 %v5568
    %v5570 = vand.u32 %v2522, 4294901760
    %v5571 = vsub.f32 %v2522, %v5570
    %v5572 = vand.u32 %v5571, 4294901760
    %5573 = vmatpush.msra.mxu0 %v5572
    %v5574 = vand.u32 %v2519, 4294901760
    %v5575 = vsub.f32 %v2519, %v5574
    %v5576 = vand.u32 %v5575, 4294901760
    %5577 = vmatpush.msra.mxu0 %v5576
    %v5578 = vand.u32 %v2516, 4294901760
    %v5579 = vsub.f32 %v2516, %v5578
    %v5580 = vand.u32 %v5579, 4294901760
    %5581 = vmatpush.msra.mxu0 %v5580
    %v5582 = vand.u32 %v2513, 4294901760
    %v5583 = vsub.f32 %v2513, %v5582
    %v5584 = vand.u32 %v5583, 4294901760
    %5585 = vmatpush.msra.mxu0 %v5584
    %v5586 = vand.u32 %v2414, 4294901760
    %5587 = vmatmul.f32.gmra.mxu0 %v5586
    %v5588 = vpop.f32.mrf.mxu0
    %v5589 = vadd.f32 %v5520, %v5588
    %5590 = vdwg.mxu0
    %v5591 = vand.u32 %v2558, 4294901760
    %5592 = vmatpush.msra.mxu0 %v5591
    %v5593 = vand.u32 %v2555, 4294901760
    %5594 = vmatpush.msra.mxu0 %v5593
    %v5595 = vand.u32 %v2552, 4294901760
    %5596 = vmatpush.msra.mxu0 %v5595
    %v5597 = vand.u32 %v2549, 4294901760
    %5598 = vmatpush.msra.mxu0 %v5597
    %v5599 = vand.u32 %v2546, 4294901760
    %5600 = vmatpush.msra.mxu0 %v5599
    %v5601 = vand.u32 %v2543, 4294901760
    %5602 = vmatpush.msra.mxu0 %v5601
    %v5603 = vand.u32 %v2540, 4294901760
    %5604 = vmatpush.msra.mxu0 %v5603
    %v5605 = vand.u32 %v2537, 4294901760
    %5606 = vmatpush.msra.mxu0 %v5605
    %v5607 = vand.u32 %v2534, 4294901760
    %5608 = vmatpush.msra.mxu0 %v5607
    %v5609 = vand.u32 %v2531, 4294901760
    %5610 = vmatpush.msra.mxu0 %v5609
    %v5611 = vand.u32 %v2528, 4294901760
    %5612 = vmatpush.msra.mxu0 %v5611
    %v5613 = vand.u32 %v2525, 4294901760
    %5614 = vmatpush.msra.mxu0 %v5613
    %v5615 = vand.u32 %v2522, 4294901760
    %5616 = vmatpush.msra.mxu0 %v5615
    %v5617 = vand.u32 %v2519, 4294901760
    %5618 = vmatpush.msra.mxu0 %v5617
    %v5619 = vand.u32 %v2516, 4294901760
    %5620 = vmatpush.msra.mxu0 %v5619
    %v5621 = vand.u32 %v2513, 4294901760
    %5622 = vmatpush.msra.mxu0 %v5621
    %v5623 = vand.u32 %v2414, 4294901760
    %5624 = vmatmul.f32.gmra.mxu0 %v5623
    %v5625 = vpop.f32.mrf.mxu0
    %v5626 = vadd.f32 %v5589, %v5625
    %5627 = vdwg.mxu0
    %v5628 = vld [vmem:[#allocation10] sm:$0x7]
    %v5630 = vperm.slane %v5628, 0
    %v5631 = vperm.slane %v5628, 1
    %v5632 = vperm.slane %v5628, 2
    %v5636 = vmax.f32 %v3580, %v5630
    %v5637 = vmax.f32 %v4603, %v5631
    %v5638 = vmax.f32 %v5626, %v5632
    %v5639 = vrsqrt.pop %v5636
    %v5640 = vmul.f32 %v5639, %v5636
    %v5641 = vmul.f32 %v5640, %v5639
    %v5642 = vmul.f32 0.5, %v5641
    %v5643 = vsub.f32 1.5, %v5642
    %v5644 = vmul.f32 %v5639, %v5643
    %vm5645 = vweird.f32 %v5636
    %vm5646 = vweird.f32 %v5639
    %vm5647 = vmor %vm5645, %vm5646
    %v5648 = vsel %vm5647, %v5639, %v5644
    %v5649 = vrsqrt.pop %v5637
    %v5650 = vmul.f32 %v5649, %v5637
    %v5651 = vmul.f32 %v5650, %v5649
    %v5652 = vmul.f32 0.5, %v5651
    %v5653 = vsub.f32 1.5, %v5652
    %v5654 = vmul.f32 %v5649, %v5653
    %vm5655 = vweird.f32 %v5637
    %vm5656 = vweird.f32 %v5649
    %vm5657 = vmor %vm5655, %vm5656
    %v5658 = vsel %vm5657, %v5649, %v5654
    %v5659 = vrsqrt.pop %v5638
    %v5660 = vmul.f32 %v5659, %v5638
    %v5661 = vmul.f32 %v5660, %v5659
    %v5662 = vmul.f32 0.5, %v5661
    %v5663 = vsub.f32 1.5, %v5662
    %v5664 = vmul.f32 %v5659, %v5663
    %vm5665 = vweird.f32 %v5638
    %vm5666 = vweird.f32 %v5659
    %vm5667 = vmor %vm5665, %vm5666
    %v5668 = vsel %vm5667, %v5659, %v5664
    %v5669 = vmul.f32 %v2409, %v5648
    %v5670 = vmul.f32 %v2410, %v5658
    %v5671 = vmul.f32 %v2411, %v5668
    %5672 = vst [vmem:[%s7] sm:$0xff] %v5669
    %5673 = vst [vmem:[%s7 + $0x8] sm:$0xff] %v5670
    %5674 = vst [vmem:[%s7 + $0x10] sm:$0xff] %v5671
    // Predicated region
    $region54: #{siamese_forward.1} parent=1 // pred_check
      _
    $region55: #{siamese_forward.1} parent=1 // pred_check_branch
      %5676 = sbr.rel (0) target = $region57
    $region56: #{siamese_forward.1} parent=1 // pred_region
      _
    $region57: #{siamese_forward.1} parent=1 // pred_fallthru
      _
    // Predicated region
    $region58: #{siamese_forward.1} parent=1 // pred_check
      _
    $region59: #{siamese_forward.1} parent=1 // pred_check_branch
      %5678 = sbr.rel (0) target = $region61
    $region60: #{siamese_forward.1} parent=1 // pred_region
      _
    $region61: #{siamese_forward.1} parent=1 // pred_fallthru
      _
    %5679 = vsyncpa [#allocation3], 1
    %5680 = vsyncpa [#allocation5], 1
    %5681 = vsyncpa [#allocation8], 1
    %5682 = vsyncpa [#allocation11], 1

</llo_original>
